<compile_context>
chip_gen: v5e
topology: v5e:2x2
jax: 0.10.0
libtpu: 0.0.40
codegen_flags: <defaults>
</compile_context>

<pallas_src>
import functools

import numpy as np

import jax
import jax.numpy as jnp
from jax import lax
from jax.experimental import pallas as pl
from jax.experimental.pallas import tpu as pltpu


# --------------------------------------------------------------------------- #
# Host-side constant-operator builders (numpy, run ONCE per parameter set)
# --------------------------------------------------------------------------- #
def _round_up(n, m):
    return ((n + m - 1) // m) * m


def _conv_bn_pool_operator(conv_w, bn_scale, h, w):
    """Conv3x3('same') with BN scale folded in, as a dense linear operator.

    Output columns are "2x2-window-major":
        col = k * (Cout*Hp*Wp) + co * (Hp*Wp) + r * Wp + c
    holds conv-output channel `co` at pixel (2r+dy_k, 2c+dx_k), with
    (dy_k, dx_k) in ((0,0),(0,1),(1,0),(1,1)).  The 2x2 max-pool then becomes
    a max over four lane-aligned slices of the matmul result."""
    cout, cin, kh, kw = conv_w.shape
    hp, wp = h // 2, w // 2
    ws = conv_w * bn_scale[:, None, None, None]
    n_pool = cout * hp * wp
    op = np.zeros((cin * h * w, 4 * n_pool), np.float32)
    offsets = ((0, 0), (0, 1), (1, 0), (1, 1))
    for k, (dy, dx) in enumerate(offsets):
        for co in range(cout):
            for r in range(hp):
                for c in range(wp):
                    oy, ox = 2 * r + dy, 2 * c + dx
                    col = k * n_pool + co * (hp * wp) + r * wp + c
                    for ci in range(cin):
                        for ki in range(kh):
                            for kj in range(kw):
                                iy, ix = oy + ki - 1, ox + kj - 1
                                if 0 <= iy < h and 0 <= ix < w:
                                    op[ci * h * w + iy * w + ix, col] += ws[co, ci, ki, kj]
    return op


def _deconv_operator(wd, in_h, in_w, stride, out_h, out_w):
    """ConvTranspose2d(cin->1, k=3, stride, pad=0) as (cin, in_h*in_w, out_h*out_w)."""
    cin, _, kh, kw = wd.shape
    m = np.zeros((cin, in_h * in_w, out_h * out_w), np.float32)
    for c in range(cin):
        for r in range(in_h):
            for s in range(in_w):
                for ki in range(kh):
                    for kj in range(kw):
                        i, j = stride * r + ki, stride * s + kj
                        if i < out_h and j < out_w:
                            m[c, r * in_w + s, i * out_w + j] += wd[c, 0, ki, kj]
    return m


def _gumbel_map(grid_size):
    """Base integer goal map, channel0 = col - grid, channel1 = row - grid."""
    n = 2 * grid_size + 1
    gx = np.zeros((1, n * n), np.float32)
    gy = np.zeros((1, n * n), np.float32)
    for i in range(n):
        for j in range(n):
            gx[0, i * n + j] = j - grid_size
            gy[0, i * n + j] = i - grid_size
    return gx, gy


def _sample_noise(key, batch, npos):
    k1, k2, k3 = jax.random.split(key, 3)
    u_gum = jax.random.uniform(k1, (batch, npos), jnp.float32)
    n_x = jax.random.uniform(k2, (batch, npos), jnp.float32)
    n_y = jax.random.uniform(k3, (batch, npos), jnp.float32)
    return u_gum, n_x, n_y


def build_operators(params, *, in_channels, height, width):
    """Fold conv/BN/pool/deconv into constant matrices; returns device arrays
    (built once, reused across calls) plus static shape metadata."""
    cout = params["conv_w"].shape[0]
    hp, wp = height // 2, width // 2
    oh, ow = 2 * hp + 1, 2 * wp + 1
    npos = oh * ow
    npos_pad = _round_up(npos, 128)
    n_pool = cout * hp * wp

    conv_w = np.asarray(params["conv_w"], np.float32)
    conv_b = np.asarray(params["conv_b"], np.float32)
    gamma = np.asarray(params["bn_gamma"], np.float32)
    beta = np.asarray(params["bn_beta"], np.float32)
    mean = np.asarray(params["bn_mean"], np.float32)
    var = np.asarray(params["bn_var"], np.float32)
    bn_scale = gamma / np.sqrt(var + 1e-5)
    cshift = beta - mean * bn_scale + conv_b * bn_scale

    wop = _conv_bn_pool_operator(conv_w, bn_scale, height, width)
    shift_row = np.tile(np.repeat(cshift, hp * wp), 4).reshape(1, 4 * n_pool)

    mdec = _deconv_operator(np.asarray(params["deconv_w"], np.float32),
                            hp, wp, 2, oh, ow)             # (cout+1, hp*wp, npos)
    m_traj = np.zeros((hp * wp, npos_pad), np.float32)
    m_traj[:, :npos] = mdec[0]
    m_enc = np.zeros((n_pool, npos_pad), np.float32)
    for co in range(cout):
        m_enc[co * hp * wp:(co + 1) * hp * wp, :npos] = mdec[co + 1]

    gx, gy = _gumbel_map(hp)
    gmap_x = np.zeros((1, npos_pad), np.float32)
    gmap_y = np.zeros((1, npos_pad), np.float32)
    gmap_x[:, :npos] = gx
    gmap_y[:, :npos] = gy

    ops = dict(
        wop=wop, shift_row=shift_row,
        w1=np.asarray(params["lin1_w"], np.float32).T,
        b1=np.asarray(params["lin1_b"], np.float32).reshape(1, -1),
        w2=np.asarray(params["lin2_w"], np.float32).T,
        b2=np.asarray(params["lin2_b"], np.float32).reshape(1, -1),
        m_traj=m_traj, m_enc=m_enc,
        bdec=np.asarray(params["deconv_b"], np.float32).reshape(1, 1),
        gmap_x=gmap_x, gmap_y=gmap_y,
    )
    ops = {k: jnp.asarray(v) for k, v in ops.items()}
    meta = dict(npos=npos, npos_pad=npos_pad, oh=oh, ow=ow,
                height=height, width=width, in_channels=in_channels)
    return ops, meta


# --------------------------------------------------------------------------- #
# The fused kernel
# --------------------------------------------------------------------------- #
def _goal_global_kernel(x_ref, traj_ref, wop_ref, shift_ref,
                        w1_ref, b1_ref, w2_ref, b2_ref,
                        mtraj_ref, menc_ref, bdec_ref,
                        ugum_ref, nmapx_ref, nmapy_ref,
                        gmapx_ref, gmapy_ref,
                        pos_ref, hard_ref, sgum_ref, soft_ref, scores_ref,
                        *, npos, scaling, temperature):
    f32 = jnp.float32
    batch = x_ref.shape[0]
    npos_pad = scores_ref.shape[-1]
    n_pool = menc_ref.shape[0]

    # ---- trajectory MLP (tanh - tanh), whole batch at once -----------------
    t = jnp.tanh(jnp.dot(traj_ref[...], w1_ref[...],
                         preferred_element_type=f32) + b1_ref[...])
    t = jnp.tanh(jnp.dot(t, w2_ref[...],
                         preferred_element_type=f32) + b2_ref[...])       # (B, Hp*Wp)

    # ---- encoder: conv3x3 + BatchNorm(eval) + ReLU as ONE dense matmul -----
    act = jnp.dot(x_ref[...], wop_ref[...],
                  preferred_element_type=f32) + shift_ref[...]            # (B, 4*n_pool)
    act = jnp.maximum(act, 0.0)
    # 2x2 max-pool = max over the four window-major, lane-aligned slices.
    pooled = jnp.maximum(
        jnp.maximum(act[:, 0 * n_pool:1 * n_pool], act[:, 1 * n_pool:2 * n_pool]),
        jnp.maximum(act[:, 2 * n_pool:3 * n_pool], act[:, 3 * n_pool:4 * n_pool]))

    # ---- decoder (stride-2 ConvTranspose -> 1 channel) fused in 2 matmuls --
    scores = (jnp.dot(t, mtraj_ref[...], preferred_element_type=f32)
              + jnp.dot(pooled, menc_ref[...], preferred_element_type=f32)
              + bdec_ref[...])                                            # (B, npos_pad)
    scores_ref[...] = scores

    lane = lax.broadcasted_iota(jnp.int32, (batch, npos_pad), 1)
    valid = lane < npos
    scores_m = jnp.where(valid, scores, -1e30)   # kill pad lanes for reductions

    # ---- hard Gumbel-Softmax sampling (GumbelSoftmax, force_hard=True) -----
    eps = 1e-10
    gnoise = -jnp.log(eps - jnp.log(ugum_ref[...] + eps))
    glt = (scores_m + gnoise) / temperature
    glt = glt - jnp.max(glt, axis=1, keepdims=True)
    eg = jnp.exp(glt)
    sgum = eg / jnp.sum(eg, axis=1, keepdims=True)
    sgum = jnp.maximum(sgum, eps)
    sgum_ref[...] = sgum

    zs = scores_m - jnp.max(scores_m, axis=1, keepdims=True)
    es = jnp.exp(zs)
    soft_ref[...] = es / jnp.sum(es, axis=1, keepdims=True)

    # argmax -> one-hot (first max wins), straight-through forward value.
    lane_f = lane.astype(f32)
    is_max = sgum >= jnp.max(sgum, axis=1, keepdims=True)
    first = jnp.min(jnp.where(is_max, lane_f, float(npos_pad)),
                    axis=1, keepdims=True)
    one_hot = (lane_f == first).astype(f32)
    hard = one_hot - sgum + sgum
    hard_ref[...] = hard

    # expected goal position under the (noisy) gumbel map, scaled.
    gx = gmapx_ref[...] + nmapx_ref[...]
    gy = gmapy_ref[...] + nmapy_ref[...]
    fx = jnp.sum(gx * hard, axis=1, keepdims=True)
    fy = jnp.sum(gy * hard, axis=1, keepdims=True)
    pos_ref[...] = jnp.concatenate([fx, fy], axis=1) * scaling


# --------------------------------------------------------------------------- #
# Wrapper (jitted; constants are device-resident via build_operators)
# --------------------------------------------------------------------------- #
@functools.partial(jax.jit,
                   static_argnames=("npos", "npos_pad", "oh", "ow",
                                    "scaling", "temperature"))
def _forward_impl(image, traj_h, ops, key, *, npos, npos_pad, oh, ow,
                  scaling, temperature):
    image = image.astype(jnp.float32)
    traj_h = traj_h.astype(jnp.float32)
    B = image.shape[0]
    x_flat = image.reshape(B, -1)                         # (B, Cin*H*W)

    u_gum, n_x, n_y = _sample_noise(key, B, npos)
    pad = npos_pad - npos
    u_gum_p = jnp.pad(u_gum, ((0, 0), (0, pad)), constant_values=0.5)
    n_x_p = jnp.pad(n_x, ((0, 0), (0, pad)))
    n_y_p = jnp.pad(n_y, ((0, 0), (0, pad)))

    inputs = (x_flat, traj_h, ops["wop"], ops["shift_row"],
              ops["w1"], ops["b1"], ops["w2"], ops["b2"],
              ops["m_traj"], ops["m_enc"], ops["bdec"],
              u_gum_p, n_x_p, n_y_p, ops["gmap_x"], ops["gmap_y"])

    kernel = functools.partial(_goal_global_kernel, npos=npos,
                               scaling=scaling, temperature=temperature)
    vmem = lambda: pl.BlockSpec(memory_space=pltpu.MemorySpace.VMEM)

    pos, hard, sgum, soft, scores = pl.pallas_call(
        kernel,
        out_shape=(
            jax.ShapeDtypeStruct((B, 2), jnp.float32),
            jax.ShapeDtypeStruct((B, npos_pad), jnp.float32),
            jax.ShapeDtypeStruct((B, npos_pad), jnp.float32),
            jax.ShapeDtypeStruct((B, npos_pad), jnp.float32),
            jax.ShapeDtypeStruct((B, npos_pad), jnp.float32),
        ),
        in_specs=[vmem() for _ in inputs],
        out_specs=tuple(vmem() for _ in range(5)),
    )(*inputs)

    final_pos = pos[None, :, :]                            # (1, B, 2), scaled
    final_pos_map_decoder = hard[:, :npos].reshape(B, 1, oh, ow)
    final_pos_map = sgum[:, :npos].reshape(B, 1, oh, ow)
    y_softmax = soft[:, :npos].reshape(B, 1, oh, ow)
    y_scores = scores[:, :npos]
    return final_pos, final_pos_map_decoder, final_pos_map, y_softmax, y_scores


def goal_global_forward(image, traj_h, ops, meta, key, *, scaling=0.25,
                        temperature=1.0):
    """GoalGlobal.forward: returns
    (final_pos, final_pos_map_decoder, final_pos_map, y_softmax, y_scores)."""
    return _forward_impl(image, traj_h, ops, key,
                         npos=meta["npos"], npos_pad=meta["npos_pad"],
                         oh=meta["oh"], ow=meta["ow"],
                         scaling=float(scaling), temperature=float(temperature))


# --------------------------------------------------------------------------- #
# Parameters + pure-JAX reference for self-checking
# --------------------------------------------------------------------------- #
def init_params(key, *, in_channels=4, channels_cnn=4, decoder_h_dim=32,
                mlp_dim=32, bottleneck_hw=8):
    ks = jax.random.split(key, 12)
    s = 0.1
    p = {
        "conv_w": s * jax.random.normal(ks[0], (channels_cnn, in_channels, 3, 3)),
        "conv_b": s * jax.random.normal(ks[1], (channels_cnn,)),
        "bn_gamma": 1.0 + s * jax.random.normal(ks[2], (channels_cnn,)),
        "bn_beta": s * jax.random.normal(ks[3], (channels_cnn,)),
        "bn_mean": s * jax.random.normal(ks[4], (channels_cnn,)),
        "bn_var": 1.0 + 0.5 * jax.random.uniform(ks[5], (channels_cnn,)),
        "lin1_w": s * jax.random.normal(ks[6], (mlp_dim, decoder_h_dim)),
        "lin1_b": s * jax.random.normal(ks[7], (mlp_dim,)),
        "lin2_w": s * jax.random.normal(ks[8], (bottleneck_hw * bottleneck_hw, mlp_dim)),
        "lin2_b": s * jax.random.normal(ks[9], (bottleneck_hw * bottleneck_hw,)),
        "deconv_w": s * jax.random.normal(ks[10], (channels_cnn + 1, 1, 3, 3)),
        "deconv_b": s * jax.random.normal(ks[11], (1,)),
    }
    return {k: v.astype(jnp.float32) for k, v in p.items()}


def reference_forward(image, traj_h, params, key, *, scaling=0.25,
                      temperature=1.0):
    B, _, H, W = image.shape
    hp, wp = H // 2, W // 2
    oh, ow = 2 * hp + 1, 2 * wp + 1
    npos = oh * ow

    conv = lax.conv_general_dilated(image, params["conv_w"], (1, 1),
                                    ((1, 1), (1, 1)),
                                    dimension_numbers=("NCHW", "OIHW", "NCHW"))
    conv = conv + params["conv_b"][None, :, None, None]
    bn = (params["bn_gamma"][None, :, None, None]
          * (conv - params["bn_mean"][None, :, None, None])
          / jnp.sqrt(params["bn_var"][None, :, None, None] + 1e-5)
          + params["bn_beta"][None, :, None, None])
    h = jnp.maximum(bn, 0.0)
    pooled = lax.reduce_window(h, -jnp.inf, lax.max, (1, 1, 2, 2), (1, 1, 2, 2),
                               "VALID")
    t = jnp.tanh(traj_h @ params["lin1_w"].T + params["lin1_b"])
    t = jnp.tanh(t @ params["lin2_w"].T + params["lin2_b"])
    din = jnp.concatenate([t.reshape(B, 1, hp, wp), pooled], axis=1)
    wt = jnp.flip(params["deconv_w"], (2, 3)).transpose(1, 0, 2, 3)
    dec = lax.conv_general_dilated(din, wt, (1, 1), ((2, 2), (2, 2)),
                                   lhs_dilation=(2, 2),
                                   dimension_numbers=("NCHW", "OIHW", "NCHW"))
    dec = dec + params["deconv_b"][None, :, None, None]
    scores = dec.reshape(B, npos)

    u_gum, n_x, n_y = _sample_noise(key, B, npos)
    eps = 1e-10
    g = -jnp.log(eps - jnp.log(u_gum + eps))
    glt = (scores + g) / temperature
    sg = jax.nn.softmax(glt - jnp.max(glt, axis=1, keepdims=True), axis=1)
    sg = jnp.maximum(sg, eps)
    soft = jax.nn.softmax(scores, axis=1)
    one_hot = jax.nn.one_hot(jnp.argmax(sg, axis=1), npos, dtype=scores.dtype)
    y = one_hot - sg + sg
    gmx_np, gmy_np = _gumbel_map(hp)
    gx = jnp.asarray(gmx_np) + n_x
    gy = jnp.asarray(gmy_np) + n_y
    fx = jnp.sum(gx * y, axis=1)
    fy = jnp.sum(gy * y, axis=1)
    final_pos = (jnp.stack([fx, fy], axis=1) * scaling)[None]
    return (final_pos, y.reshape(B, 1, oh, ow), sg.reshape(B, 1, oh, ow),
            soft.reshape(B, 1, oh, ow), scores)


# --------------------------------------------------------------------------- #
if __name__ == "__main__":
    B, C_IN, GRID, DEC_H, MLP = 2, 4, 16, 32, 32

    key = jax.random.PRNGKey(0)
    k_img, k_traj, k_par, k_noise = jax.random.split(key, 4)
    image = jax.random.normal(k_img, (B, C_IN, GRID, GRID), jnp.float32)
    traj_h = jax.random.normal(k_traj, (B, DEC_H), jnp.float32)
    params = init_params(k_par, in_channels=C_IN, channels_cnn=4,
                         decoder_h_dim=DEC_H, mlp_dim=MLP,
                         bottleneck_hw=GRID // 2)

    # Build the constant operators once; they stay device-resident.
    ops, meta = build_operators(params, in_channels=C_IN,
                                height=GRID, width=GRID)

    out_k = goal_global_forward(image, traj_h, ops, meta, k_noise)
    out_k = [jax.block_until_ready(o) for o in out_k]

    out_r = reference_forward(image, traj_h, params, k_noise)
    names = ("final_pos", "final_pos_map_decoder", "final_pos_map",
             "y_softmax", "y_scores")
    for name, a, b in zip(names, out_k, out_r):
        assert a.shape == b.shape, (name, a.shape, b.shape)
        assert jnp.allclose(a, b, atol=1e-4, rtol=1e-4), name

    print("KERNEL_OK")
</pallas_src>

<mosaic_0001>
module attributes {stable_mosaic.version = 11 : i64} {
  func.func @_goal_global_kernel(%arg0: memref<2x1024xf32, #tpu.memory_space<vmem>>, %arg1: memref<2x32xf32, #tpu.memory_space<vmem>>, %arg2: memref<1024x1024xf32, #tpu.memory_space<vmem>>, %arg3: memref<1x1024xf32, #tpu.memory_space<vmem>>, %arg4: memref<32x32xf32, #tpu.memory_space<vmem>>, %arg5: memref<1x32xf32, #tpu.memory_space<vmem>>, %arg6: memref<32x64xf32, #tpu.memory_space<vmem>>, %arg7: memref<1x64xf32, #tpu.memory_space<vmem>>, %arg8: memref<64x384xf32, #tpu.memory_space<vmem>>, %arg9: memref<256x384xf32, #tpu.memory_space<vmem>>, %arg10: memref<1x1xf32, #tpu.memory_space<vmem>>, %arg11: memref<2x384xf32, #tpu.memory_space<vmem>>, %arg12: memref<2x384xf32, #tpu.memory_space<vmem>>, %arg13: memref<2x384xf32, #tpu.memory_space<vmem>>, %arg14: memref<1x384xf32, #tpu.memory_space<vmem>>, %arg15: memref<1x384xf32, #tpu.memory_space<vmem>>, %arg16: memref<2x2xf32, #tpu.memory_space<vmem>>, %arg17: memref<2x384xf32, #tpu.memory_space<vmem>>, %arg18: memref<2x384xf32, #tpu.memory_space<vmem>>, %arg19: memref<2x384xf32, #tpu.memory_space<vmem>>, %arg20: memref<2x384xf32, #tpu.memory_space<vmem>>) attributes {dimension_semantics = [], scalar_prefetch = 0 : i64, scratch_operands = 0 : i64, tpu.core_type = #tpu.core_type<tc>} {
    %c0 = arith.constant 0 : index
    %c0_0 = arith.constant 0 : index
    %0 = vector.load %arg1[%c0, %c0_0] : memref<2x32xf32, #tpu.memory_space<vmem>>, vector<2x32xf32>
    %c0_1 = arith.constant 0 : index
    %c0_2 = arith.constant 0 : index
    %1 = vector.load %arg4[%c0_1, %c0_2] : memref<32x32xf32, #tpu.memory_space<vmem>>, vector<32x32xf32>
    %cst = arith.constant dense<0.000000e+00> : vector<2x32xf32>
    %2 = tpu.matmul %0, %1, %cst {dimension_numbers = #tpu.dot_dimension_numbers<[1], [0], [0], [1], [0, 0, 1, 1], [], []>} : vector<2x32xf32>, vector<32x32xf32>, vector<2x32xf32> -> vector<2x32xf32>
    %c0_3 = arith.constant 0 : index
    %c0_4 = arith.constant 0 : index
    %3 = vector.load %arg5[%c0_3, %c0_4] : memref<1x32xf32, #tpu.memory_space<vmem>>, vector<1x32xf32>
    %4 = vector.broadcast %3 : vector<1x32xf32> to vector<2x32xf32>
    %5 = arith.addf %2, %4 : vector<2x32xf32>
    %6 = math.tanh %5 : vector<2x32xf32>
    %c0_5 = arith.constant 0 : index
    %c0_6 = arith.constant 0 : index
    %7 = vector.load %arg6[%c0_5, %c0_6] : memref<32x64xf32, #tpu.memory_space<vmem>>, vector<32x64xf32>
    %cst_7 = arith.constant dense<0.000000e+00> : vector<2x64xf32>
    %8 = tpu.matmul %6, %7, %cst_7 {dimension_numbers = #tpu.dot_dimension_numbers<[1], [0], [0], [1], [0, 0, 1, 1], [], []>} : vector<2x32xf32>, vector<32x64xf32>, vector<2x64xf32> -> vector<2x64xf32>
    %c0_8 = arith.constant 0 : index
    %c0_9 = arith.constant 0 : index
    %9 = vector.load %arg7[%c0_8, %c0_9] : memref<1x64xf32, #tpu.memory_space<vmem>>, vector<1x64xf32>
    %10 = vector.broadcast %9 : vector<1x64xf32> to vector<2x64xf32>
    %11 = arith.addf %8, %10 : vector<2x64xf32>
    %12 = math.tanh %11 : vector<2x64xf32>
    %c0_10 = arith.constant 0 : index
    %c0_11 = arith.constant 0 : index
    %13 = vector.load %arg0[%c0_10, %c0_11] : memref<2x1024xf32, #tpu.memory_space<vmem>>, vector<2x1024xf32>
    %c0_12 = arith.constant 0 : index
    %c0_13 = arith.constant 0 : index
    %14 = vector.load %arg2[%c0_12, %c0_13] : memref<1024x1024xf32, #tpu.memory_space<vmem>>, vector<1024x1024xf32>
    %cst_14 = arith.constant dense<0.000000e+00> : vector<2x1024xf32>
    %15 = tpu.matmul %13, %14, %cst_14 {dimension_numbers = #tpu.dot_dimension_numbers<[1], [0], [0], [1], [0, 0, 1, 1], [], []>} : vector<2x1024xf32>, vector<1024x1024xf32>, vector<2x1024xf32> -> vector<2x1024xf32>
    %c0_15 = arith.constant 0 : index
    %c0_16 = arith.constant 0 : index
    %16 = vector.load %arg3[%c0_15, %c0_16] : memref<1x1024xf32, #tpu.memory_space<vmem>>, vector<1x1024xf32>
    %17 = vector.broadcast %16 : vector<1x1024xf32> to vector<2x1024xf32>
    %18 = arith.addf %15, %17 : vector<2x1024xf32>
    %cst_17 = arith.constant 0.000000e+00 : f32
    %19 = vector.broadcast %cst_17 : f32 to vector<2x1024xf32>
    %20 = arith.maximumf %18, %19 : vector<2x1024xf32>
    %21 = vector.extract_strided_slice %20 {offsets = [0, 0], sizes = [2, 256], strides = [1, 1]} : vector<2x1024xf32> to vector<2x256xf32>
    %22 = vector.extract_strided_slice %20 {offsets = [0, 256], sizes = [2, 256], strides = [1, 1]} : vector<2x1024xf32> to vector<2x256xf32>
    %23 = arith.maximumf %21, %22 : vector<2x256xf32>
    %24 = vector.extract_strided_slice %20 {offsets = [0, 512], sizes = [2, 256], strides = [1, 1]} : vector<2x1024xf32> to vector<2x256xf32>
    %25 = vector.extract_strided_slice %20 {offsets = [0, 768], sizes = [2, 256], strides = [1, 1]} : vector<2x1024xf32> to vector<2x256xf32>
    %26 = arith.maximumf %24, %25 : vector<2x256xf32>
    %27 = arith.maximumf %23, %26 : vector<2x256xf32>
    %c0_18 = arith.constant 0 : index
    %c0_19 = arith.constant 0 : index
    %28 = vector.load %arg8[%c0_18, %c0_19] : memref<64x384xf32, #tpu.memory_space<vmem>>, vector<64x384xf32>
    %cst_20 = arith.constant dense<0.000000e+00> : vector<2x384xf32>
    %29 = tpu.matmul %12, %28, %cst_20 {dimension_numbers = #tpu.dot_dimension_numbers<[1], [0], [0], [1], [0, 0, 1, 1], [], []>} : vector<2x64xf32>, vector<64x384xf32>, vector<2x384xf32> -> vector<2x384xf32>
    %c0_21 = arith.constant 0 : index
    %c0_22 = arith.constant 0 : index
    %30 = vector.load %arg9[%c0_21, %c0_22] : memref<256x384xf32, #tpu.memory_space<vmem>>, vector<256x384xf32>
    %cst_23 = arith.constant dense<0.000000e+00> : vector<2x384xf32>
    %31 = tpu.matmul %27, %30, %cst_23 {dimension_numbers = #tpu.dot_dimension_numbers<[1], [0], [0], [1], [0, 0, 1, 1], [], []>} : vector<2x256xf32>, vector<256x384xf32>, vector<2x384xf32> -> vector<2x384xf32>
    %32 = arith.addf %29, %31 : vector<2x384xf32>
    %c0_24 = arith.constant 0 : index
    %c0_25 = arith.constant 0 : index
    %33 = vector.load %arg10[%c0_24, %c0_25] : memref<1x1xf32, #tpu.memory_space<vmem>>, vector<1x1xf32>
    %34 = vector.broadcast %33 : vector<1x1xf32> to vector<2x384xf32>
    %35 = arith.addf %32, %34 : vector<2x384xf32>
    %c0_26 = arith.constant 0 : index
    %c0_27 = arith.constant 0 : index
    %36 = vector.load %arg20[%c0_26, %c0_27] : memref<2x384xf32, #tpu.memory_space<vmem>>, vector<2x384xf32>
    tpu.vector_store %arg20[%c0_26, %c0_27], %35 {strides = array<i32>} : memref<2x384xf32, #tpu.memory_space<vmem>>, vector<2x384xf32>,
    %37 = tpu.iota {dimensions = array<i32: 1>} : vector<2x384xi32>
    %c289_i32 = arith.constant 289 : i32
    %38 = vector.broadcast %c289_i32 : i32 to vector<2x384xi32>
    %39 = arith.cmpi slt, %37, %38 : vector<2x384xi32>
    %cst_28 = arith.constant -1.000000e+30 : f32
    %40 = vector.broadcast %cst_28 : f32 to vector<2x384xf32>
    %41 = arith.select %39, %35, %40 : vector<2x384xi1>, vector<2x384xf32>
    %c0_29 = arith.constant 0 : index
    %c0_30 = arith.constant 0 : index
    %42 = vector.load %arg11[%c0_29, %c0_30] : memref<2x384xf32, #tpu.memory_space<vmem>>, vector<2x384xf32>
    %cst_31 = arith.constant 1.000000e-10 : f32
    %43 = vector.broadcast %cst_31 : f32 to vector<2x384xf32>
    %44 = arith.addf %42, %43 : vector<2x384xf32>
    %45 = math.log %44 : vector<2x384xf32>
    %cst_32 = arith.constant 1.000000e-10 : f32
    %46 = vector.broadcast %cst_32 : f32 to vector<2x384xf32>
    %47 = arith.subf %46, %45 : vector<2x384xf32>
    %48 = math.log %47 : vector<2x384xf32>
    %cst_33 = arith.constant 0.000000e+00 : f32
    %49 = vector.broadcast %cst_33 : f32 to vector<2x384xf32>
    %50 = arith.subf %49, %48 : vector<2x384xf32>
    %51 = arith.addf %41, %50 : vector<2x384xf32>
    %cst_34 = arith.constant 1.000000e+00 : f32
    %52 = vector.broadcast %cst_34 : f32 to vector<2x384xf32>
    %53 = arith.divf %51, %52 : vector<2x384xf32>
    %cst_35 = arith.constant dense<0xFF800000> : vector<2xf32>
    %54 = vector.multi_reduction <maximumf>, %53, %cst_35 [1] : vector<2x384xf32> to vector<2xf32>
    %55 = vector.shape_cast %54 : vector<2xf32> to vector<2x1xf32>
    %56 = vector.broadcast %55 : vector<2x1xf32> to vector<2x384xf32>
    %57 = arith.subf %53, %56 : vector<2x384xf32>
    %58 = math.exp %57 : vector<2x384xf32>
    %cst_36 = arith.constant dense<0.000000e+00> : vector<2xf32>
    %59 = vector.multi_reduction <add>, %58, %cst_36 [1] : vector<2x384xf32> to vector<2xf32>
    %60 = vector.shape_cast %59 : vector<2xf32> to vector<2x1xf32>
    %61 = vector.broadcast %60 : vector<2x1xf32> to vector<2x384xf32>
    %62 = arith.divf %58, %61 : vector<2x384xf32>
    %cst_37 = arith.constant 1.000000e-10 : f32
    %63 = vector.broadcast %cst_37 : f32 to vector<2x384xf32>
    %64 = arith.maximumf %62, %63 : vector<2x384xf32>
    %c0_38 = arith.constant 0 : index
    %c0_39 = arith.constant 0 : index
    %65 = vector.load %arg18[%c0_38, %c0_39] : memref<2x384xf32, #tpu.memory_space<vmem>>, vector<2x384xf32>
    tpu.vector_store %arg18[%c0_38, %c0_39], %64 {strides = array<i32>} : memref<2x384xf32, #tpu.memory_space<vmem>>, vector<2x384xf32>,
    %cst_40 = arith.constant dense<0xFF800000> : vector<2xf32>
    %66 = vector.multi_reduction <maximumf>, %41, %cst_40 [1] : vector<2x384xf32> to vector<2xf32>
    %67 = vector.shape_cast %66 : vector<2xf32> to vector<2x1xf32>
    %68 = vector.broadcast %67 : vector<2x1xf32> to vector<2x384xf32>
    %69 = arith.subf %41, %68 : vector<2x384xf32>
    %70 = math.exp %69 : vector<2x384xf32>
    %cst_41 = arith.constant dense<0.000000e+00> : vector<2xf32>
    %71 = vector.multi_reduction <add>, %70, %cst_41 [1] : vector<2x384xf32> to vector<2xf32>
    %72 = vector.shape_cast %71 : vector<2xf32> to vector<2x1xf32>
    %73 = vector.broadcast %72 : vector<2x1xf32> to vector<2x384xf32>
    %74 = arith.divf %70, %73 : vector<2x384xf32>
    %c0_42 = arith.constant 0 : index
    %c0_43 = arith.constant 0 : index
    %75 = vector.load %arg19[%c0_42, %c0_43] : memref<2x384xf32, #tpu.memory_space<vmem>>, vector<2x384xf32>
    tpu.vector_store %arg19[%c0_42, %c0_43], %74 {strides = array<i32>} : memref<2x384xf32, #tpu.memory_space<vmem>>, vector<2x384xf32>,
    %76 = arith.sitofp %37 : vector<2x384xi32> to vector<2x384xf32>
    %cst_44 = arith.constant dense<0xFF800000> : vector<2xf32>
    %77 = vector.multi_reduction <maximumf>, %64, %cst_44 [1] : vector<2x384xf32> to vector<2xf32>
    %78 = vector.shape_cast %77 : vector<2xf32> to vector<2x1xf32>
    %79 = vector.broadcast %78 : vector<2x1xf32> to vector<2x384xf32>
    %80 = arith.cmpf oge, %64, %79 : vector<2x384xf32>
    %cst_45 = arith.constant 3.840000e+02 : f32
    %81 = vector.broadcast %cst_45 : f32 to vector<2x384xf32>
    %82 = arith.select %80, %76, %81 : vector<2x384xi1>, vector<2x384xf32>
    %cst_46 = arith.constant dense<0x7F800000> : vector<2xf32>
    %83 = vector.multi_reduction <minimumf>, %82, %cst_46 [1] : vector<2x384xf32> to vector<2xf32>
    %84 = vector.shape_cast %83 : vector<2xf32> to vector<2x1xf32>
    %85 = vector.broadcast %84 : vector<2x1xf32> to vector<2x384xf32>
    %86 = arith.cmpf oeq, %76, %85 : vector<2x384xf32>
    %87 = arith.extui %86 : vector<2x384xi1> to vector<2x384xi32>
    %88 = arith.sitofp %87 : vector<2x384xi32> to vector<2x384xf32>
    %89 = arith.subf %88, %64 : vector<2x384xf32>
    %90 = arith.addf %89, %64 : vector<2x384xf32>
    %c0_47 = arith.constant 0 : index
    %c0_48 = arith.constant 0 : index
    %91 = vector.load %arg17[%c0_47, %c0_48] : memref<2x384xf32, #tpu.memory_space<vmem>>, vector<2x384xf32>
    tpu.vector_store %arg17[%c0_47, %c0_48], %90 {strides = array<i32>} : memref<2x384xf32, #tpu.memory_space<vmem>>, vector<2x384xf32>,
    %c0_49 = arith.constant 0 : index
    %c0_50 = arith.constant 0 : index
    %92 = vector.load %arg14[%c0_49, %c0_50] : memref<1x384xf32, #tpu.memory_space<vmem>>, vector<1x384xf32>
    %c0_51 = arith.constant 0 : index
    %c0_52 = arith.constant 0 : index
    %93 = vector.load %arg12[%c0_51, %c0_52] : memref<2x384xf32, #tpu.memory_space<vmem>>, vector<2x384xf32>
    %94 = vector.broadcast %92 : vector<1x384xf32> to vector<2x384xf32>
    %95 = arith.addf %94, %93 : vector<2x384xf32>
    %c0_53 = arith.constant 0 : index
    %c0_54 = arith.constant 0 : index
    %96 = vector.load %arg15[%c0_53, %c0_54] : memref<1x384xf32, #tpu.memory_space<vmem>>, vector<1x384xf32>
    %c0_55 = arith.constant 0 : index
    %c0_56 = arith.constant 0 : index
    %97 = vector.load %arg13[%c0_55, %c0_56] : memref<2x384xf32, #tpu.memory_space<vmem>>, vector<2x384xf32>
    %98 = vector.broadcast %96 : vector<1x384xf32> to vector<2x384xf32>
    %99 = arith.addf %98, %97 : vector<2x384xf32>
    %100 = arith.mulf %95, %90 : vector<2x384xf32>
    %cst_57 = arith.constant dense<0.000000e+00> : vector<2xf32>
    %101 = vector.multi_reduction <add>, %100, %cst_57 [1] : vector<2x384xf32> to vector<2xf32>
    %102 = vector.shape_cast %101 : vector<2xf32> to vector<2x1xf32>
    %103 = arith.mulf %99, %90 : vector<2x384xf32>
    %cst_58 = arith.constant dense<0.000000e+00> : vector<2xf32>
    %104 = vector.multi_reduction <add>, %103, %cst_58 [1] : vector<2x384xf32> to vector<2xf32>
    %105 = vector.shape_cast %104 : vector<2xf32> to vector<2x1xf32>
    %106 = tpu.concatenate %102, %105 in 1 : vector<2x1xf32>, vector<2x1xf32> -> vector<2x2xf32>
    %cst_59 = arith.constant 2.500000e-01 : f32
    %107 = vector.broadcast %cst_59 : f32 to vector<2x2xf32>
    %108 = arith.mulf %106, %107 : vector<2x2xf32>
    %c0_60 = arith.constant 0 : index
    %c0_61 = arith.constant 0 : index
    %109 = vector.load %arg16[%c0_60, %c0_61] : memref<2x2xf32, #tpu.memory_space<vmem>>, vector<2x2xf32>
    tpu.vector_store %arg16[%c0_60, %c0_61], %108 {strides = array<i32>} : memref<2x2xf32, #tpu.memory_space<vmem>>, vector<2x2xf32>,
    return
  }
}

</mosaic_0001>

<llo_original>
// kernel: _forward_impl.1
$region0: #{_forward_impl.1}
  #allocation0 [shape = 'u32[]', space=smem, size = 0x4, offset = 0x4, fixed_abs, tag = 'smem constant byte address 0x4 - core index']
  #allocation1 [shape = 'u32[72,128]{1,0:T(1,128)}', space=vmem, size = 0x9000, scoped, tag = 'internal scratch']
  #allocation2 [shape = 'f32[1,1]{1,0:T(1,128)S(1)}', space=vmem, size = 0x200, scoped, tag = 'scoped memory for _forward_impl.1']
  %s0 = inlined_call_operand.vmem [shape: f32[2,1024], index: 0, kind: input, shape index: {}]
  %s1 = inlined_call_operand.hbm [shape: f32[2,32], index: 1, kind: input, shape index: {}]
  %s2 = inlined_call_operand.hbm [shape: f32[1024,1024], index: 2, kind: input, shape index: {}]
  %s3 = inlined_call_operand.hbm [shape: f32[1,1024], index: 3, kind: input, shape index: {}]
  %s4 = inlined_call_operand.hbm [shape: f32[32,32], index: 4, kind: input, shape index: {}]
  %s5 = inlined_call_operand.hbm [shape: f32[1,32], index: 5, kind: input, shape index: {}]
  %s6 = inlined_call_operand.hbm [shape: f32[32,64], index: 6, kind: input, shape index: {}]
  %s7 = inlined_call_operand.hbm [shape: f32[1,64], index: 7, kind: input, shape index: {}]
  %s8 = inlined_call_operand.hbm [shape: f32[64,384], index: 8, kind: input, shape index: {}]
  %s9 = inlined_call_operand.hbm [shape: f32[256,384], index: 9, kind: input, shape index: {}]
  %s10 = inlined_call_operand.<no memory space> [shape: f32[1,1], index: 10, kind: input, shape index: {}]
  %s11 = inlined_call_operand.vmem [shape: f32[2,384], index: 11, kind: input, shape index: {}]
  %s12 = inlined_call_operand.vmem [shape: f32[2,384], index: 12, kind: input, shape index: {}]
  %s13 = inlined_call_operand.vmem [shape: f32[2,384], index: 13, kind: input, shape index: {}]
  %s14 = inlined_call_operand.hbm [shape: f32[1,384], index: 14, kind: input, shape index: {}]
  %s15 = inlined_call_operand.hbm [shape: f32[1,384], index: 15, kind: input, shape index: {}]
  %s16 = inlined_call_operand.hbm [shape: f32[2,2], index: 16, kind: output, shape index: {0}]
  %s17 = inlined_call_operand.vmem [shape: f32[2,384], index: 17, kind: output, shape index: {1}]
  %s18 = inlined_call_operand.vmem [shape: f32[2,384], index: 18, kind: output, shape index: {2}]
  %s19 = inlined_call_operand.vmem [shape: f32[2,384], index: 19, kind: output, shape index: {3}]
  %s20 = inlined_call_operand.hbm [shape: f32[2,384], index: 20, kind: output, shape index: {4}]
  %21 = xla_tuple %s16, %s17, %s18, %s19, %s20
  %s22 = sld [smem:[#allocation0]]
  $region150: #{_forward_impl.1} parent=0
    _
  %s24 = ssub.s32 1, %s22
  %s25 = scalar_select 0, %s24, %s22
  %v26 = vstv %s10
  %27 = vst [vmem:[#allocation2] sm:$0x1] %v26
  $region1: #{_forward_impl.1} parent=0
    #allocation3 [shape = 'u8[1024]{0}', space=vmem, size = 0x400, scoped, tag = 'input window, operand 1, single buffered']
    #allocation4 [shape = 's32[1]{0}', space=sflag, size = 0x4, scoped, tag = 'scoped memory for _forward_impl.1']
    #allocation5 [shape = 's32[1]{0}', space=sflag, size = 0x4, scoped, tag = 'scoped memory for _forward_impl.1']
    #allocation6 [shape = 'u8[4194304]{0}', space=vmem, size = 0x400000, scoped, tag = 'input window, operand 2, single buffered']
    #allocation7 [shape = 's32[1]{0}', space=sflag, size = 0x4, scoped, tag = 'scoped memory for _forward_impl.1']
    #allocation8 [shape = 'u8[4096]{0}', space=vmem, size = 0x1000, scoped, tag = 'input window, operand 3, single buffered']
    #allocation9 [shape = 'u8[16384]{0}', space=vmem, size = 0x4000, scoped, tag = 'input window, operand 4, single buffered']
    #allocation10 [shape = 's32[1]{0}', space=sflag, size = 0x4, scoped, tag = 'scoped memory for _forward_impl.1']
    #allocation11 [shape = 'u8[512]{0}', space=vmem, size = 0x400, scoped, tag = 'input window, operand 5, single buffered']
    #allocation12 [shape = 'u8[16384]{0}', space=vmem, size = 0x4000, scoped, tag = 'input window, operand 6, single buffered']
    #allocation13 [shape = 's32[1]{0}', space=sflag, size = 0x4, scoped, tag = 'scoped memory for _forward_impl.1']
    #allocation14 [shape = 'u8[512]{0}', space=vmem, size = 0x400, scoped, tag = 'input window, operand 7, single buffered']
    #allocation15 [shape = 'u8[98304]{0}', space=vmem, size = 0x18000, scoped, tag = 'input window, operand 8, single buffered']
    #allocation16 [shape = 's32[1]{0}', space=sflag, size = 0x4, scoped, tag = 'scoped memory for _forward_impl.1']
    #allocation17 [shape = 'u8[393216]{0}', space=vmem, size = 0x60000, scoped, tag = 'input window, operand 9, single buffered']
    #allocation18 [shape = 'u8[1536]{0}', space=vmem, size = 0x800, scoped, tag = 'input window, operand 14, single buffered']
    #allocation19 [shape = 's32[1]{0}', space=sflag, size = 0x4, scoped, tag = 'scoped memory for _forward_impl.1']
    #allocation20 [shape = 'u8[1536]{0}', space=vmem, size = 0x800, scoped, tag = 'input window, operand 15, single buffered']
    #allocation21 [shape = 'u8[1024]{0}', space=vmem, size = 0x400, scoped, tag = 'output window, operand 0, single buffered']
    #allocation22 [shape = 'u8[3072]{0}', space=vmem, size = 0xc00, scoped, tag = 'output window, operand 4, single buffered']
    #allocation23 [shape = 's32[1]{0}', space=sflag, size = 0x4, scoped, tag = 'scoped memory for _forward_impl.1']
    %28 = vsyncpa [#allocation4], 0
    %29 = vsyncpa [#allocation7], 0
    %30 = vsyncpa [#allocation10], 0
    %31 = vsyncpa [#allocation13], 0
    %32 = vsyncpa [#allocation16], 0
    %33 = vsyncpa [#allocation19], 0
    %34 = vsyncpa [#allocation5], 0
    %35 = vsyncpa [#allocation23], 0
    // Predicated region
    $region2: #{_forward_impl.1} parent=1 // pred_check
      _
    $region3: #{_forward_impl.1} parent=1 // pred_check_branch
      %37 = sbr.rel (0) target = $region5
    $region4: #{_forward_impl.1} parent=1 // pred_region
      _
    $region5: #{_forward_impl.1} parent=1 // pred_fallthru
      _
    // Predicated region
    $region6: #{_forward_impl.1} parent=1 // pred_check
      _
    $region7: #{_forward_impl.1} parent=1 // pred_check_branch
      %39 = sbr.rel (0) target = $region9
    $region8: #{_forward_impl.1} parent=1 // pred_region
      %41 = vsyncadd [#allocation4], 0
      %s43 = sshll.u32 %s1, 4
      %s44 = int_to_ptr.hbm [resolvable:$true] %s43
      %s45 = sshll.u32 [#allocation3], 4
      %s46 = int_to_ptr.vmem [resolvable:$true] %s45
      %48 = dma.hbm_to_vmem [thread:$0]  %s44, 32, %s46, [#allocation4]
    $region9: #{_forward_impl.1} parent=1 // pred_fallthru
      _
    // Predicated region
    $region10: #{_forward_impl.1} parent=1 // pred_check
      _
    $region11: #{_forward_impl.1} parent=1 // pred_check_branch
      %50 = sbr.rel (0) target = $region13
    $region12: #{_forward_impl.1} parent=1 // pred_region
      %52 = vsyncadd [#allocation7], 0
      %s53 = sshll.u32 %s2, 4
      %s54 = int_to_ptr.hbm [resolvable:$true] %s53
      %s55 = sshll.u32 [#allocation6], 4
      %s56 = int_to_ptr.vmem [resolvable:$true] %s55
      %61 = dma.hbm_to_vmem [thread:$0]  %s54, 131072, %s56, [#allocation7], 1024, 1024, 64
    $region13: #{_forward_impl.1} parent=1 // pred_fallthru
      _
    // Predicated region
    $region14: #{_forward_impl.1} parent=1 // pred_check
      _
    $region15: #{_forward_impl.1} parent=1 // pred_check_branch
      %63 = sbr.rel (0) target = $region17
    $region16: #{_forward_impl.1} parent=1 // pred_region
      %65 = vsyncadd [#allocation7], 0
      %s67 = sshll.u32 %s3, 4
      %s68 = int_to_ptr.hbm [resolvable:$true] %s67
      %s69 = sshll.u32 [#allocation8], 4
      %s70 = int_to_ptr.vmem [resolvable:$true] %s69
      %72 = dma.hbm_to_vmem [thread:$0]  %s68, 128, %s70, [#allocation7]
    $region17: #{_forward_impl.1} parent=1 // pred_fallthru
      _
    // Predicated region
    $region18: #{_forward_impl.1} parent=1 // pred_check
      _
    $region19: #{_forward_impl.1} parent=1 // pred_check_branch
      %74 = sbr.rel (0) target = $region21
    $region20: #{_forward_impl.1} parent=1 // pred_region
      %76 = vsyncadd [#allocation10], 0
      %s77 = sshll.u32 %s4, 4
      %s78 = int_to_ptr.hbm [resolvable:$true] %s77
      %s79 = sshll.u32 [#allocation9], 4
      %s80 = int_to_ptr.vmem [resolvable:$true] %s79
      %85 = dma.hbm_to_vmem [thread:$0]  %s78, 512, %s80, [#allocation10], 128, 128, 8
    $region21: #{_forward_impl.1} parent=1 // pred_fallthru
      _
    // Predicated region
    $region22: #{_forward_impl.1} parent=1 // pred_check
      _
    $region23: #{_forward_impl.1} parent=1 // pred_check_branch
      %87 = sbr.rel (0) target = $region25
    $region24: #{_forward_impl.1} parent=1 // pred_region
      %89 = vsyncadd [#allocation10], 0
      %s91 = sshll.u32 %s5, 4
      %s92 = int_to_ptr.hbm [resolvable:$true] %s91
      %s93 = sshll.u32 [#allocation11], 4
      %s94 = int_to_ptr.vmem [resolvable:$true] %s93
      %96 = dma.hbm_to_vmem [thread:$0]  %s92, 16, %s94, [#allocation10]
    $region25: #{_forward_impl.1} parent=1 // pred_fallthru
      _
    // Predicated region
    $region26: #{_forward_impl.1} parent=1 // pred_check
      _
    $region27: #{_forward_impl.1} parent=1 // pred_check_branch
      %98 = sbr.rel (0) target = $region29
    $region28: #{_forward_impl.1} parent=1 // pred_region
      %100 = vsyncadd [#allocation13], 0
      %s101 = sshll.u32 %s6, 4
      %s102 = int_to_ptr.hbm [resolvable:$true] %s101
      %s103 = sshll.u32 [#allocation12], 4
      %s104 = int_to_ptr.vmem [resolvable:$true] %s103
      %109 = dma.hbm_to_vmem [thread:$0]  %s102, 512, %s104, [#allocation13], 128, 128, 8
    $region29: #{_forward_impl.1} parent=1 // pred_fallthru
      _
    // Predicated region
    $region30: #{_forward_impl.1} parent=1 // pred_check
      _
    $region31: #{_forward_impl.1} parent=1 // pred_check_branch
      %111 = sbr.rel (0) target = $region33
    $region32: #{_forward_impl.1} parent=1 // pred_region
      %113 = vsyncadd [#allocation13], 0
      %s115 = sshll.u32 %s7, 4
      %s116 = int_to_ptr.hbm [resolvable:$true] %s115
      %s117 = sshll.u32 [#allocation14], 4
      %s118 = int_to_ptr.vmem [resolvable:$true] %s117
      %120 = dma.hbm_to_vmem [thread:$0]  %s116, 16, %s118, [#allocation13]
    $region33: #{_forward_impl.1} parent=1 // pred_fallthru
      _
    // Predicated region
    $region34: #{_forward_impl.1} parent=1 // pred_check
      _
    $region35: #{_forward_impl.1} parent=1 // pred_check_branch
      %122 = sbr.rel (0) target = $region37
    $region36: #{_forward_impl.1} parent=1 // pred_region
      %124 = vsyncadd [#allocation16], 0
      %s125 = sshll.u32 %s8, 4
      %s126 = int_to_ptr.hbm [resolvable:$true] %s125
      %s127 = sshll.u32 [#allocation15], 4
      %s128 = int_to_ptr.vmem [resolvable:$true] %s127
      %133 = dma.hbm_to_vmem [thread:$0]  %s126, 3072, %s128, [#allocation16], 384, 384, 24
    $region37: #{_forward_impl.1} parent=1 // pred_fallthru
      _
    // Predicated region
    $region38: #{_forward_impl.1} parent=1 // pred_check
      _
    $region39: #{_forward_impl.1} parent=1 // pred_check_branch
      %135 = sbr.rel (0) target = $region41
    $region40: #{_forward_impl.1} parent=1 // pred_region
      %137 = vsyncadd [#allocation16], 0
      %s138 = sshll.u32 %s9, 4
      %s139 = int_to_ptr.hbm [resolvable:$true] %s138
      %s140 = sshll.u32 [#allocation17], 4
      %s141 = int_to_ptr.vmem [resolvable:$true] %s140
      %146 = dma.hbm_to_vmem [thread:$0]  %s139, 12288, %s141, [#allocation16], 384, 384, 24
    $region41: #{_forward_impl.1} parent=1 // pred_fallthru
      _
    // Predicated region
    $region42: #{_forward_impl.1} parent=1 // pred_check
      _
    $region43: #{_forward_impl.1} parent=1 // pred_check_branch
      %148 = sbr.rel (0) target = $region45
    $region44: #{_forward_impl.1} parent=1 // pred_region
      _
    $region45: #{_forward_impl.1} parent=1 // pred_fallthru
      _
    // Predicated region
    $region46: #{_forward_impl.1} parent=1 // pred_check
      _
    $region47: #{_forward_impl.1} parent=1 // pred_check_branch
      %150 = sbr.rel (0) target = $region49
    $region48: #{_forward_impl.1} parent=1 // pred_region
      _
    $region49: #{_forward_impl.1} parent=1 // pred_fallthru
      _
    // Predicated region
    $region50: #{_forward_impl.1} parent=1 // pred_check
      _
    $region51: #{_forward_impl.1} parent=1 // pred_check_branch
      %152 = sbr.rel (0) target = $region53
    $region52: #{_forward_impl.1} parent=1 // pred_region
      _
    $region53: #{_forward_impl.1} parent=1 // pred_fallthru
      _
    // Predicated region
    $region54: #{_forward_impl.1} parent=1 // pred_check
      _
    $region55: #{_forward_impl.1} parent=1 // pred_check_branch
      %154 = sbr.rel (0) target = $region57
    $region56: #{_forward_impl.1} parent=1 // pred_region
      _
    $region57: #{_forward_impl.1} parent=1 // pred_fallthru
      _
    // Predicated region
    $region58: #{_forward_impl.1} parent=1 // pred_check
      _
    $region59: #{_forward_impl.1} parent=1 // pred_check_branch
      %156 = sbr.rel (0) target = $region61
    $region60: #{_forward_impl.1} parent=1 // pred_region
      %158 = vsyncadd [#allocation19], 0
      %s160 = sshll.u32 %s14, 4
      %s161 = int_to_ptr.hbm [resolvable:$true] %s160
      %s162 = sshll.u32 [#allocation18], 4
      %s163 = int_to_ptr.vmem [resolvable:$true] %s162
      %165 = dma.hbm_to_vmem [thread:$0]  %s161, 48, %s163, [#allocation19]
    $region61: #{_forward_impl.1} parent=1 // pred_fallthru
      _
    // Predicated region
    $region62: #{_forward_impl.1} parent=1 // pred_check
      _
    $region63: #{_forward_impl.1} parent=1 // pred_check_branch
      %167 = sbr.rel (0) target = $region65
    $region64: #{_forward_impl.1} parent=1 // pred_region
      %169 = vsyncadd [#allocation19], 0
      %s171 = sshll.u32 %s15, 4
      %s172 = int_to_ptr.hbm [resolvable:$true] %s171
      %s173 = sshll.u32 [#allocation20], 4
      %s174 = int_to_ptr.vmem [resolvable:$true] %s173
      %176 = dma.hbm_to_vmem [thread:$0]  %s172, 48, %s174, [#allocation19]
    $region65: #{_forward_impl.1} parent=1 // pred_fallthru
      _
    // Predicated region
    $region66: #{_forward_impl.1} parent=1 // pred_check
      _
    $region67: #{_forward_impl.1} parent=1 // pred_check_branch
      %178 = sbr.rel (0) target = $region69
    $region68: #{_forward_impl.1} parent=1 // pred_region
      %180 = dma.done [#allocation4], 32
    $region69: #{_forward_impl.1} parent=1 // pred_fallthru
      _
    // Predicated region
    $region70: #{_forward_impl.1} parent=1 // pred_check
      _
    $region71: #{_forward_impl.1} parent=1 // pred_check_branch
      %182 = sbr.rel (0) target = $region73
    $region72: #{_forward_impl.1} parent=1 // pred_region
      %184 = dma.done [#allocation7], 131072
    $region73: #{_forward_impl.1} parent=1 // pred_fallthru
      _
    // Predicated region
    $region74: #{_forward_impl.1} parent=1 // pred_check
      _
    $region75: #{_forward_impl.1} parent=1 // pred_check_branch
      %186 = sbr.rel (0) target = $region77
    $region76: #{_forward_impl.1} parent=1 // pred_region
      %188 = dma.done [#allocation7], 128
    $region77: #{_forward_impl.1} parent=1 // pred_fallthru
      _
    // Predicated region
    $region78: #{_forward_impl.1} parent=1 // pred_check
      _
    $region79: #{_forward_impl.1} parent=1 // pred_check_branch
      %190 = sbr.rel (0) target = $region81
    $region80: #{_forward_impl.1} parent=1 // pred_region
      %192 = dma.done [#allocation10], 512
    $region81: #{_forward_impl.1} parent=1 // pred_fallthru
      _
    // Predicated region
    $region82: #{_forward_impl.1} parent=1 // pred_check
      _
    $region83: #{_forward_impl.1} parent=1 // pred_check_branch
      %194 = sbr.rel (0) target = $region85
    $region84: #{_forward_impl.1} parent=1 // pred_region
      %196 = dma.done [#allocation10], 16
    $region85: #{_forward_impl.1} parent=1 // pred_fallthru
      _
    // Predicated region
    $region86: #{_forward_impl.1} parent=1 // pred_check
      _
    $region87: #{_forward_impl.1} parent=1 // pred_check_branch
      %198 = sbr.rel (0) target = $region89
    $region88: #{_forward_impl.1} parent=1 // pred_region
      %200 = dma.done [#allocation13], 512
    $region89: #{_forward_impl.1} parent=1 // pred_fallthru
      _
    // Predicated region
    $region90: #{_forward_impl.1} parent=1 // pred_check
      _
    $region91: #{_forward_impl.1} parent=1 // pred_check_branch
      %202 = sbr.rel (0) target = $region93
    $region92: #{_forward_impl.1} parent=1 // pred_region
      %204 = dma.done [#allocation13], 16
    $region93: #{_forward_impl.1} parent=1 // pred_fallthru
      _
    // Predicated region
    $region94: #{_forward_impl.1} parent=1 // pred_check
      _
    $region95: #{_forward_impl.1} parent=1 // pred_check_branch
      %206 = sbr.rel (0) target = $region97
    $region96: #{_forward_impl.1} parent=1 // pred_region
      %208 = dma.done [#allocation16], 3072
    $region97: #{_forward_impl.1} parent=1 // pred_fallthru
      _
    // Predicated region
    $region98: #{_forward_impl.1} parent=1 // pred_check
      _
    $region99: #{_forward_impl.1} parent=1 // pred_check_branch
      %210 = sbr.rel (0) target = $region101
    $region100: #{_forward_impl.1} parent=1 // pred_region
      %212 = dma.done [#allocation16], 12288
    $region101: #{_forward_impl.1} parent=1 // pred_fallthru
      _
    // Predicated region
    $region102: #{_forward_impl.1} parent=1 // pred_check
      _
    $region103: #{_forward_impl.1} parent=1 // pred_check_branch
      %214 = sbr.rel (0) target = $region105
    $region104: #{_forward_impl.1} parent=1 // pred_region
      %216 = dma.done [#allocation19], 48
    $region105: #{_forward_impl.1} parent=1 // pred_fallthru
      _
    // Predicated region
    $region106: #{_forward_impl.1} parent=1 // pred_check
      _
    $region107: #{_forward_impl.1} parent=1 // pred_check_branch
      %218 = sbr.rel (0) target = $region109
    $region108: #{_forward_impl.1} parent=1 // pred_region
      %220 = dma.done [#allocation19], 48
    $region109: #{_forward_impl.1} parent=1 // pred_fallthru
      _
    %v221 = vld [vmem:[#allocation3] sm:$0x3]
    %v222 = vld [vmem:[#allocation9] sm:$0xff]
    %v223 = vld [vmem:[#allocation9 + $0x8] sm:$0xff]
    %v224 = vld [vmem:[#allocation9 + $0x10] sm:$0xff]
    %v225 = vld [vmem:[#allocation9 + $0x18] sm:$0xff]
    %v226 = vld [vmem:[#allocation11] sm:$0x1]
    %v228 = vperm.slane %v226, 0
    %vm230 = vcmask 261120
    %v232 = vsel %vm230, %v221, 0
    %234 = vmatpush.msra.mxu0 0.0
    %235 = vmatpush.msra.mxu0 0.0
    %236 = vmatpush.msra.mxu0 0.0
    %237 = vmatpush.msra.mxu0 0.0
    %238 = vmatpush.msra.mxu0 0.0
    %239 = vmatpush.msra.mxu0 0.0
    %240 = vmatpush.msra.mxu0 0.0
    %241 = vmatpush.msra.mxu0 0.0
    %242 = vmatpush.msra.mxu0 0.0
    %243 = vmatpush.msra.mxu0 0.0
    %244 = vmatpush.msra.mxu0 0.0
    %245 = vmatpush.msra.mxu0 0.0
    %246 = vmatpush.msra.mxu0 %v225
    %247 = vmatpush.msra.mxu0 %v224
    %248 = vmatpush.msra.mxu0 %v223
    %249 = vmatpush.msra.mxu0 %v222
    %250 = vmatmul.f32.gmra.mxu0 %v232
    %v251 = vpop.f32.mrf.mxu0
    %v252 = vadd.f32 %v228, %v251
    %253 = vdwg.mxu0
    %v254 = vtanh.pop %v252
    %v255 = vld [vmem:[#allocation12] sm:$0xff]
    %v256 = vld [vmem:[#allocation12 + $0x8] sm:$0xff]
    %v257 = vld [vmem:[#allocation12 + $0x10] sm:$0xff]
    %v258 = vld [vmem:[#allocation12 + $0x18] sm:$0xff]
    %v259 = vld [vmem:[#allocation14] sm:$0x1]
    %v261 = vperm.slane %v259, 0
    %v264 = vsel %vm230, %v254, 0
    %266 = vmatpush.msra.mxu0 0.0
    %267 = vmatpush.msra.mxu0 0.0
    %268 = vmatpush.msra.mxu0 0.0
    %269 = vmatpush.msra.mxu0 0.0
    %270 = vmatpush.msra.mxu0 0.0
    %271 = vmatpush.msra.mxu0 0.0
    %272 = vmatpush.msra.mxu0 0.0
    %273 = vmatpush.msra.mxu0 0.0
    %274 = vmatpush.msra.mxu0 0.0
    %275 = vmatpush.msra.mxu0 0.0
    %276 = vmatpush.msra.mxu0 0.0
    %277 = vmatpush.msra.mxu0 0.0
    %278 = vmatpush.msra.mxu0 %v258
    %279 = vmatpush.msra.mxu0 %v257
    %280 = vmatpush.msra.mxu0 %v256
    %281 = vmatpush.msra.mxu0 %v255
    %282 = vmatmul.f32.gmra.mxu0 %v264
    %v283 = vpop.f32.mrf.mxu0
    %v284 = vadd.f32 %v261, %v283
    %285 = vdwg.mxu0
    %v286 = vtanh.pop %v284
    %v287 = vld [vmem:[%s0] sm:$0xff]
    %v288 = vld [vmem:[%s0 + $0x8] sm:$0xff]
    %v289 = vld [vmem:[#allocation6] sm:$0xff]
    %v290 = vld [vmem:[#allocation6 + $0x8] sm:$0xff]
    %v291 = vld [vmem:[#allocation6 + $0x10] sm:$0xff]
    %v292 = vld [vmem:[#allocation6 + $0x18] sm:$0xff]
    %v293 = vld [vmem:[#allocation6 + $0x20] sm:$0xff]
    %v294 = vld [vmem:[#allocation6 + $0x28] sm:$0xff]
    %v295 = vld [vmem:[#allocation6 + $0x30] sm:$0xff]
    %v296 = vld [vmem:[#allocation6 + $0x38] sm:$0xff]
    %v297 = vld [vmem:[#allocation6 + $0x40] sm:$0xff]
    %v298 = vld [vmem:[#allocation6 + $0x48] sm:$0xff]
    %v299 = vld [vmem:[#allocation6 + $0x50] sm:$0xff]
    %v300 = vld [vmem:[#allocation6 + $0x58] sm:$0xff]
    %v301 = vld [vmem:[#allocation6 + $0x60] sm:$0xff]
    %v302 = vld [vmem:[#allocation6 + $0x68] sm:$0xff]
    %v303 = vld [vmem:[#allocation6 + $0x70] sm:$0xff]
    %v304 = vld [vmem:[#allocation6 + $0x78] sm:$0xff]
    %v305 = vld [vmem:[#allocation6 + $0x80] sm:$0xff]
    %v306 = vld [vmem:[#allocation6 + $0x88] sm:$0xff]
    %v307 = vld [vmem:[#allocation6 + $0x90] sm:$0xff]
    %v308 = vld [vmem:[#allocation6 + $0x98] sm:$0xff]
    %v309 = vld [vmem:[#allocation6 + $0xa0] sm:$0xff]
    %v310 = vld [vmem:[#allocation6 + $0xa8] sm:$0xff]
    %v311 = vld [vmem:[#allocation6 + $0xb0] sm:$0xff]
    %v312 = vld [vmem:[#allocation6 + $0xb8] sm:$0xff]
    %v313 = vld [vmem:[#allocation6 + $0xc0] sm:$0xff]
    %v314 = vld [vmem:[#allocation6 + $0xc8] sm:$0xff]
    %v315 = vld [vmem:[#allocation6 + $0xd0] sm:$0xff]
    %v316 = vld [vmem:[#allocation6 + $0xd8] sm:$0xff]
    %v317 = vld [vmem:[#allocation6 + $0xe0] sm:$0xff]
    %v318 = vld [vmem:[#allocation6 + $0xe8] sm:$0xff]
    %v319 = vld [vmem:[#allocation6 + $0xf0] sm:$0xff]
    %v320 = vld [vmem:[#allocation6 + $0xf8] sm:$0xff]
    %v321 = vld [vmem:[#allocation6 + $0x100] sm:$0xff]
    %v322 = vld [vmem:[#allocation6 + $0x108] sm:$0xff]
    %v323 = vld [vmem:[#allocation6 + $0x110] sm:$0xff]
    %v324 = vld [vmem:[#allocation6 + $0x118] sm:$0xff]
    %v325 = vld [vmem:[#allocation6 + $0x120] sm:$0xff]
    %v326 = vld [vmem:[#allocation6 + $0x128] sm:$0xff]
    %v327 = vld [vmem:[#allocation6 + $0x130] sm:$0xff]
    %v328 = vld [vmem:[#allocation6 + $0x138] sm:$0xff]
    %v329 = vld [vmem:[#allocation6 + $0x140] sm:$0xff]
    %v330 = vld [vmem:[#allocation6 + $0x148] sm:$0xff]
    %v331 = vld [vmem:[#allocation6 + $0x150] sm:$0xff]
    %v332 = vld [vmem:[#allocation6 + $0x158] sm:$0xff]
    %v333 = vld [vmem:[#allocation6 + $0x160] sm:$0xff]
    %v334 = vld [vmem:[#allocation6 + $0x168] sm:$0xff]
    %v335 = vld [vmem:[#allocation6 + $0x170] sm:$0xff]
    %v336 = vld [vmem:[#allocation6 + $0x178] sm:$0xff]
    %v337 = vld [vmem:[#allocation6 + $0x180] sm:$0xff]
    %v338 = vld [vmem:[#allocation6 + $0x188] sm:$0xff]
    %v339 = vld [vmem:[#allocation6 + $0x190] sm:$0xff]
    %v340 = vld [vmem:[#allocation6 + $0x198] sm:$0xff]
    %v341 = vld [vmem:[#allocation6 + $0x1a0] sm:$0xff]
    %v342 = vld [vmem:[#allocation6 + $0x1a8] sm:$0xff]
    %v343 = vld [vmem:[#allocation6 + $0x1b0] sm:$0xff]
    %v344 = vld [vmem:[#allocation6 + $0x1b8] sm:$0xff]
    %v345 = vld [vmem:[#allocation6 + $0x1c0] sm:$0xff]
    %v346 = vld [vmem:[#allocation6 + $0x1c8] sm:$0xff]
    %v347 = vld [vmem:[#allocation6 + $0x1d0] sm:$0xff]
    %v348 = vld [vmem:[#allocation6 + $0x1d8] sm:$0xff]
    %v349 = vld [vmem:[#allocation6 + $0x1e0] sm:$0xff]
    %v350 = vld [vmem:[#allocation6 + $0x1e8] sm:$0xff]
    %v351 = vld [vmem:[#allocation6 + $0x1f0] sm:$0xff]
    %v352 = vld [vmem:[#allocation6 + $0x1f8] sm:$0xff]
    %v353 = vld [vmem:[#allocation6 + $0x200] sm:$0xff]
    %v354 = vld [vmem:[#allocation6 + $0x208] sm:$0xff]
    %v355 = vld [vmem:[#allocation6 + $0x210] sm:$0xff]
    %v356 = vld [vmem:[#allocation6 + $0x218] sm:$0xff]
    %v357 = vld [vmem:[#allocation6 + $0x220] sm:$0xff]
    %v358 = vld [vmem:[#allocation6 + $0x228] sm:$0xff]
    %v359 = vld [vmem:[#allocation6 + $0x230] sm:$0xff]
    %v360 = vld [vmem:[#allocation6 + $0x238] sm:$0xff]
    %v361 = vld [vmem:[#allocation6 + $0x240] sm:$0xff]
    %v362 = vld [vmem:[#allocation6 + $0x248] sm:$0xff]
    %v363 = vld [vmem:[#allocation6 + $0x250] sm:$0xff]
    %v364 = vld [vmem:[#allocation6 + $0x258] sm:$0xff]
    %v365 = vld [vmem:[#allocation6 + $0x260] sm:$0xff]
    %v366 = vld [vmem:[#allocation6 + $0x268] sm:$0xff]
    %v367 = vld [vmem:[#allocation6 + $0x270] sm:$0xff]
    %v368 = vld [vmem:[#allocation6 + $0x278] sm:$0xff]
    %v369 = vld [vmem:[#allocation6 + $0x280] sm:$0xff]
    %v370 = vld [vmem:[#allocation6 + $0x288] sm:$0xff]
    %v371 = vld [vmem:[#allocation6 + $0x290] sm:$0xff]
    %v372 = vld [vmem:[#allocation6 + $0x298] sm:$0xff]
    %v373 = vld [vmem:[#allocation6 + $0x2a0] sm:$0xff]
    %v374 = vld [vmem:[#allocation6 + $0x2a8] sm:$0xff]
    %v375 = vld [vmem:[#allocation6 + $0x2b0] sm:$0xff]
    %v376 = vld [vmem:[#allocation6 + $0x2b8] sm:$0xff]
    %v377 = vld [vmem:[#allocation6 + $0x2c0] sm:$0xff]
    %v378 = vld [vmem:[#allocation6 + $0x2c8] sm:$0xff]
    %v379 = vld [vmem:[#allocation6 + $0x2d0] sm:$0xff]
    %v380 = vld [vmem:[#allocation6 + $0x2d8] sm:$0xff]
    %v381 = vld [vmem:[#allocation6 + $0x2e0] sm:$0xff]
    %v382 = vld [vmem:[#allocation6 + $0x2e8] sm:$0xff]
    %v383 = vld [vmem:[#allocation6 + $0x2f0] sm:$0xff]
    %v384 = vld [vmem:[#allocation6 + $0x2f8] sm:$0xff]
    %v385 = vld [vmem:[#allocation6 + $0x300] sm:$0xff]
    %v386 = vld [vmem:[#allocation6 + $0x308] sm:$0xff]
    %v387 = vld [vmem:[#allocation6 + $0x310] sm:$0xff]
    %v388 = vld [vmem:[#allocation6 + $0x318] sm:$0xff]
    %v389 = vld [vmem:[#allocation6 + $0x320] sm:$0xff]
    %v390 = vld [vmem:[#allocation6 + $0x328] sm:$0xff]
    %v391 = vld [vmem:[#allocation6 + $0x330] sm:$0xff]
    %v392 = vld [vmem:[#allocation6 + $0x338] sm:$0xff]
    %v393 = vld [vmem:[#allocation6 + $0x340] sm:$0xff]
    %v394 = vld [vmem:[#allocation6 + $0x348] sm:$0xff]
    %v395 = vld [vmem:[#allocation6 + $0x350] sm:$0xff]
    %v396 = vld [vmem:[#allocation6 + $0x358] sm:$0xff]
    %v397 = vld [vmem:[#allocation6 + $0x360] sm:$0xff]
    %v398 = vld [vmem:[#allocation6 + $0x368] sm:$0xff]
    %v399 = vld [vmem:[#allocation6 + $0x370] sm:$0xff]
    %v400 = vld [vmem:[#allocation6 + $0x378] sm:$0xff]
    %v401 = vld [vmem:[#allocation6 + $0x380] sm:$0xff]
    %v402 = vld [vmem:[#allocation6 + $0x388] sm:$0xff]
    %v403 = vld [vmem:[#allocation6 + $0x390] sm:$0xff]
    %v404 = vld [vmem:[#allocation6 + $0x398] sm:$0xff]
    %v405 = vld [vmem:[#allocation6 + $0x3a0] sm:$0xff]
    %v406 = vld [vmem:[#allocation6 + $0x3a8] sm:$0xff]
    %v407 = vld [vmem:[#allocation6 + $0x3b0] sm:$0xff]
    %v408 = vld [vmem:[#allocation6 + $0x3b8] sm:$0xff]
    %v409 = vld [vmem:[#allocation6 + $0x3c0] sm:$0xff]
    %v410 = vld [vmem:[#allocation6 + $0x3c8] sm:$0xff]
    %v411 = vld [vmem:[#allocation6 + $0x3d0] sm:$0xff]
    %v412 = vld [vmem:[#allocation6 + $0x3d8] sm:$0xff]
    %v413 = vld [vmem:[#allocation6 + $0x3e0] sm:$0xff]
    %v414 = vld [vmem:[#allocation6 + $0x3e8] sm:$0xff]
    %v415 = vld [vmem:[#allocation6 + $0x3f0] sm:$0xff]
    %v416 = vld [vmem:[#allocation6 + $0x3f8] sm:$0xff]
    %v417 = vld [vmem:[#allocation6 + $0x400] sm:$0xff]
    %v418 = vld [vmem:[#allocation6 + $0x408] sm:$0xff]
    %v419 = vld [vmem:[#allocation6 + $0x410] sm:$0xff]
    %v420 = vld [vmem:[#allocation6 + $0x418] sm:$0xff]
    %v421 = vld [vmem:[#allocation6 + $0x420] sm:$0xff]
    %v422 = vld [vmem:[#allocation6 + $0x428] sm:$0xff]
    %v423 = vld [vmem:[#allocation6 + $0x430] sm:$0xff]
    %v424 = vld [vmem:[#allocation6 + $0x438] sm:$0xff]
    %v425 = vld [vmem:[#allocation6 + $0x440] sm:$0xff]
    %v426 = vld [vmem:[#allocation6 + $0x448] sm:$0xff]
    %v427 = vld [vmem:[#allocation6 + $0x450] sm:$0xff]
    %v428 = vld [vmem:[#allocation6 + $0x458] sm:$0xff]
    %v429 = vld [vmem:[#allocation6 + $0x460] sm:$0xff]
    %v430 = vld [vmem:[#allocation6 + $0x468] sm:$0xff]
    %v431 = vld [vmem:[#allocation6 + $0x470] sm:$0xff]
    %v432 = vld [vmem:[#allocation6 + $0x478] sm:$0xff]
    %v433 = vld [vmem:[#allocation6 + $0x480] sm:$0xff]
    %v434 = vld [vmem:[#allocation6 + $0x488] sm:$0xff]
    %v435 = vld [vmem:[#allocation6 + $0x490] sm:$0xff]
    %v436 = vld [vmem:[#allocation6 + $0x498] sm:$0xff]
    %v437 = vld [vmem:[#allocation6 + $0x4a0] sm:$0xff]
    %v438 = vld [vmem:[#allocation6 + $0x4a8] sm:$0xff]
    %v439 = vld [vmem:[#allocation6 + $0x4b0] sm:$0xff]
    %v440 = vld [vmem:[#allocation6 + $0x4b8] sm:$0xff]
    %v441 = vld [vmem:[#allocation6 + $0x4c0] sm:$0xff]
    %v442 = vld [vmem:[#allocation6 + $0x4c8] sm:$0xff]
    %v443 = vld [vmem:[#allocation6 + $0x4d0] sm:$0xff]
    %v444 = vld [vmem:[#allocation6 + $0x4d8] sm:$0xff]
    %v445 = vld [vmem:[#allocation6 + $0x4e0] sm:$0xff]
    %v446 = vld [vmem:[#allocation6 + $0x4e8] sm:$0xff]
    %v447 = vld [vmem:[#allocation6 + $0x4f0] sm:$0xff]
    %v448 = vld [vmem:[#allocation6 + $0x4f8] sm:$0xff]
    %v449 = vld [vmem:[#allocation6 + $0x500] sm:$0xff]
    %v450 = vld [vmem:[#allocation6 + $0x508] sm:$0xff]
    %v451 = vld [vmem:[#allocation6 + $0x510] sm:$0xff]
    %v452 = vld [vmem:[#allocation6 + $0x518] sm:$0xff]
    %v453 = vld [vmem:[#allocation6 + $0x520] sm:$0xff]
    %v454 = vld [vmem:[#allocation6 + $0x528] sm:$0xff]
    %v455 = vld [vmem:[#allocation6 + $0x530] sm:$0xff]
    %v456 = vld [vmem:[#allocation6 + $0x538] sm:$0xff]
    %v457 = vld [vmem:[#allocation6 + $0x540] sm:$0xff]
    %v458 = vld [vmem:[#allocation6 + $0x548] sm:$0xff]
    %v459 = vld [vmem:[#allocation6 + $0x550] sm:$0xff]
    %v460 = vld [vmem:[#allocation6 + $0x558] sm:$0xff]
    %v461 = vld [vmem:[#allocation6 + $0x560] sm:$0xff]
    %v462 = vld [vmem:[#allocation6 + $0x568] sm:$0xff]
    %v463 = vld [vmem:[#allocation6 + $0x570] sm:$0xff]
    %v464 = vld [vmem:[#allocation6 + $0x578] sm:$0xff]
    %v465 = vld [vmem:[#allocation6 + $0x580] sm:$0xff]
    %v466 = vld [vmem:[#allocation6 + $0x588] sm:$0xff]
    %v467 = vld [vmem:[#allocation6 + $0x590] sm:$0xff]
    %v468 = vld [vmem:[#allocation6 + $0x598] sm:$0xff]
    %v469 = vld [vmem:[#allocation6 + $0x5a0] sm:$0xff]
    %v470 = vld [vmem:[#allocation6 + $0x5a8] sm:$0xff]
    %v471 = vld [vmem:[#allocation6 + $0x5b0] sm:$0xff]
    %v472 = vld [vmem:[#allocation6 + $0x5b8] sm:$0xff]
    %v473 = vld [vmem:[#allocation6 + $0x5c0] sm:$0xff]
    %v474 = vld [vmem:[#allocation6 + $0x5c8] sm:$0xff]
    %v475 = vld [vmem:[#allocation6 + $0x5d0] sm:$0xff]
    %v476 = vld [vmem:[#allocation6 + $0x5d8] sm:$0xff]
    %v477 = vld [vmem:[#allocation6 + $0x5e0] sm:$0xff]
    %v478 = vld [vmem:[#allocation6 + $0x5e8] sm:$0xff]
    %v479 = vld [vmem:[#allocation6 + $0x5f0] sm:$0xff]
    %v480 = vld [vmem:[#allocation6 + $0x5f8] sm:$0xff]
    %v481 = vld [vmem:[#allocation6 + $0x600] sm:$0xff]
    %v482 = vld [vmem:[#allocation6 + $0x608] sm:$0xff]
    %v483 = vld [vmem:[#allocation6 + $0x610] sm:$0xff]
    %v484 = vld [vmem:[#allocation6 + $0x618] sm:$0xff]
    %v485 = vld [vmem:[#allocation6 + $0x620] sm:$0xff]
    %v486 = vld [vmem:[#allocation6 + $0x628] sm:$0xff]
    %v487 = vld [vmem:[#allocation6 + $0x630] sm:$0xff]
    %v488 = vld [vmem:[#allocation6 + $0x638] sm:$0xff]
    %v489 = vld [vmem:[#allocation6 + $0x640] sm:$0xff]
    %v490 = vld [vmem:[#allocation6 + $0x648] sm:$0xff]
    %v491 = vld [vmem:[#allocation6 + $0x650] sm:$0xff]
    %v492 = vld [vmem:[#allocation6 + $0x658] sm:$0xff]
    %v493 = vld [vmem:[#allocation6 + $0x660] sm:$0xff]
    %v494 = vld [vmem:[#allocation6 + $0x668] sm:$0xff]
    %v495 = vld [vmem:[#allocation6 + $0x670] sm:$0xff]
    %v496 = vld [vmem:[#allocation6 + $0x678] sm:$0xff]
    %v497 = vld [vmem:[#allocation6 + $0x680] sm:$0xff]
    %v498 = vld [vmem:[#allocation6 + $0x688] sm:$0xff]
    %v499 = vld [vmem:[#allocation6 + $0x690] sm:$0xff]
    %v500 = vld [vmem:[#allocation6 + $0x698] sm:$0xff]
    %v501 = vld [vmem:[#allocation6 + $0x6a0] sm:$0xff]
    %v502 = vld [vmem:[#allocation6 + $0x6a8] sm:$0xff]
    %v503 = vld [vmem:[#allocation6 + $0x6b0] sm:$0xff]
    %v504 = vld [vmem:[#allocation6 + $0x6b8] sm:$0xff]
    %v505 = vld [vmem:[#allocation6 + $0x6c0] sm:$0xff]
    %v506 = vld [vmem:[#allocation6 + $0x6c8] sm:$0xff]
    %v507 = vld [vmem:[#allocation6 + $0x6d0] sm:$0xff]
    %v508 = vld [vmem:[#allocation6 + $0x6d8] sm:$0xff]
    %v509 = vld [vmem:[#allocation6 + $0x6e0] sm:$0xff]
    %v510 = vld [vmem:[#allocation6 + $0x6e8] sm:$0xff]
    %v511 = vld [vmem:[#allocation6 + $0x6f0] sm:$0xff]
    %v512 = vld [vmem:[#allocation6 + $0x6f8] sm:$0xff]
    %v513 = vld [vmem:[#allocation6 + $0x700] sm:$0xff]
    %v514 = vld [vmem:[#allocation6 + $0x708] sm:$0xff]
    %v515 = vld [vmem:[#allocation6 + $0x710] sm:$0xff]
    %v516 = vld [vmem:[#allocation6 + $0x718] sm:$0xff]
    %v517 = vld [vmem:[#allocation6 + $0x720] sm:$0xff]
    %v518 = vld [vmem:[#allocation6 + $0x728] sm:$0xff]
    %v519 = vld [vmem:[#allocation6 + $0x730] sm:$0xff]
    %v520 = vld [vmem:[#allocation6 + $0x738] sm:$0xff]
    %v521 = vld [vmem:[#allocation6 + $0x740] sm:$0xff]
    %v522 = vld [vmem:[#allocation6 + $0x748] sm:$0xff]
    %v523 = vld [vmem:[#allocation6 + $0x750] sm:$0xff]
    %v524 = vld [vmem:[#allocation6 + $0x758] sm:$0xff]
    %v525 = vld [vmem:[#allocation6 + $0x760] sm:$0xff]
    %v526 = vld [vmem:[#allocation6 + $0x768] sm:$0xff]
    %v527 = vld [vmem:[#allocation6 + $0x770] sm:$0xff]
    %v528 = vld [vmem:[#allocation6 + $0x778] sm:$0xff]
    %v529 = vld [vmem:[#allocation6 + $0x780] sm:$0xff]
    %v530 = vld [vmem:[#allocation6 + $0x788] sm:$0xff]
    %v531 = vld [vmem:[#allocation6 + $0x790] sm:$0xff]
    %v532 = vld [vmem:[#allocation6 + $0x798] sm:$0xff]
    %v533 = vld [vmem:[#allocation6 + $0x7a0] sm:$0xff]
    %v534 = vld [vmem:[#allocation6 + $0x7a8] sm:$0xff]
    %v535 = vld [vmem:[#allocation6 + $0x7b0] sm:$0xff]
    %v536 = vld [vmem:[#allocation6 + $0x7b8] sm:$0xff]
    %v537 = vld [vmem:[#allocation6 + $0x7c0] sm:$0xff]
    %v538 = vld [vmem:[#allocation6 + $0x7c8] sm:$0xff]
    %v539 = vld [vmem:[#allocation6 + $0x7d0] sm:$0xff]
    %v540 = vld [vmem:[#allocation6 + $0x7d8] sm:$0xff]
    %v541 = vld [vmem:[#allocation6 + $0x7e0] sm:$0xff]
    %v542 = vld [vmem:[#allocation6 + $0x7e8] sm:$0xff]
    %v543 = vld [vmem:[#allocation6 + $0x7f0] sm:$0xff]
    %v544 = vld [vmem:[#allocation6 + $0x7f8] sm:$0xff]
    %v545 = vld [vmem:[#allocation6 + $0x800] sm:$0xff]
    %v546 = vld [vmem:[#allocation6 + $0x808] sm:$0xff]
    %v547 = vld [vmem:[#allocation6 + $0x810] sm:$0xff]
    %v548 = vld [vmem:[#allocation6 + $0x818] sm:$0xff]
    %v549 = vld [vmem:[#allocation6 + $0x820] sm:$0xff]
    %v550 = vld [vmem:[#allocation6 + $0x828] sm:$0xff]
    %v551 = vld [vmem:[#allocation6 + $0x830] sm:$0xff]
    %v552 = vld [vmem:[#allocation6 + $0x838] sm:$0xff]
    %v553 = vld [vmem:[#allocation6 + $0x840] sm:$0xff]
    %v554 = vld [vmem:[#allocation6 + $0x848] sm:$0xff]
    %v555 = vld [vmem:[#allocation6 + $0x850] sm:$0xff]
    %v556 = vld [vmem:[#allocation6 + $0x858] sm:$0xff]
    %v557 = vld [vmem:[#allocation6 + $0x860] sm:$0xff]
    %v558 = vld [vmem:[#allocation6 + $0x868] sm:$0xff]
    %v559 = vld [vmem:[#allocation6 + $0x870] sm:$0xff]
    %v560 = vld [vmem:[#allocation6 + $0x878] sm:$0xff]
    %v561 = vld [vmem:[#allocation6 + $0x880] sm:$0xff]
    %v562 = vld [vmem:[#allocation6 + $0x888] sm:$0xff]
    %v563 = vld [vmem:[#allocation6 + $0x890] sm:$0xff]
    %v564 = vld [vmem:[#allocation6 + $0x898] sm:$0xff]
    %v565 = vld [vmem:[#allocation6 + $0x8a0] sm:$0xff]
    %v566 = vld [vmem:[#allocation6 + $0x8a8] sm:$0xff]
    %v567 = vld [vmem:[#allocation6 + $0x8b0] sm:$0xff]
    %v568 = vld [vmem:[#allocation6 + $0x8b8] sm:$0xff]
    %v569 = vld [vmem:[#allocation6 + $0x8c0] sm:$0xff]
    %v570 = vld [vmem:[#allocation6 + $0x8c8] sm:$0xff]
    %v571 = vld [vmem:[#allocation6 + $0x8d0] sm:$0xff]
    %v572 = vld [vmem:[#allocation6 + $0x8d8] sm:$0xff]
    %v573 = vld [vmem:[#allocation6 + $0x8e0] sm:$0xff]
    %v574 = vld [vmem:[#allocation6 + $0x8e8] sm:$0xff]
    %v575 = vld [vmem:[#allocation6 + $0x8f0] sm:$0xff]
    %v576 = vld [vmem:[#allocation6 + $0x8f8] sm:$0xff]
    %v577 = vld [vmem:[#allocation6 + $0x900] sm:$0xff]
    %v578 = vld [vmem:[#allocation6 + $0x908] sm:$0xff]
    %v579 = vld [vmem:[#allocation6 + $0x910] sm:$0xff]
    %v580 = vld [vmem:[#allocation6 + $0x918] sm:$0xff]
    %v581 = vld [vmem:[#allocation6 + $0x920] sm:$0xff]
    %v582 = vld [vmem:[#allocation6 + $0x928] sm:$0xff]
    %v583 = vld [vmem:[#allocation6 + $0x930] sm:$0xff]
    %v584 = vld [vmem:[#allocation6 + $0x938] sm:$0xff]
    %v585 = vld [vmem:[#allocation6 + $0x940] sm:$0xff]
    %v586 = vld [vmem:[#allocation6 + $0x948] sm:$0xff]
    %v587 = vld [vmem:[#allocation6 + $0x950] sm:$0xff]
    %v588 = vld [vmem:[#allocation6 + $0x958] sm:$0xff]
    %v589 = vld [vmem:[#allocation6 + $0x960] sm:$0xff]
    %v590 = vld [vmem:[#allocation6 + $0x968] sm:$0xff]
    %v591 = vld [vmem:[#allocation6 + $0x970] sm:$0xff]
    %v592 = vld [vmem:[#allocation6 + $0x978] sm:$0xff]
    %v593 = vld [vmem:[#allocation6 + $0x980] sm:$0xff]
    %v594 = vld [vmem:[#allocation6 + $0x988] sm:$0xff]
    %v595 = vld [vmem:[#allocation6 + $0x990] sm:$0xff]
    %v596 = vld [vmem:[#allocation6 + $0x998] sm:$0xff]
    %v597 = vld [vmem:[#allocation6 + $0x9a0] sm:$0xff]
    %v598 = vld [vmem:[#allocation6 + $0x9a8] sm:$0xff]
    %v599 = vld [vmem:[#allocation6 + $0x9b0] sm:$0xff]
    %v600 = vld [vmem:[#allocation6 + $0x9b8] sm:$0xff]
    %v601 = vld [vmem:[#allocation6 + $0x9c0] sm:$0xff]
    %v602 = vld [vmem:[#allocation6 + $0x9c8] sm:$0xff]
    %v603 = vld [vmem:[#allocation6 + $0x9d0] sm:$0xff]
    %v604 = vld [vmem:[#allocation6 + $0x9d8] sm:$0xff]
    %v605 = vld [vmem:[#allocation6 + $0x9e0] sm:$0xff]
    %v606 = vld [vmem:[#allocation6 + $0x9e8] sm:$0xff]
    %v607 = vld [vmem:[#allocation6 + $0x9f0] sm:$0xff]
    %v608 = vld [vmem:[#allocation6 + $0x9f8] sm:$0xff]
    %v609 = vld [vmem:[#allocation6 + $0xa00] sm:$0xff]
    %v610 = vld [vmem:[#allocation6 + $0xa08] sm:$0xff]
    %v611 = vld [vmem:[#allocation6 + $0xa10] sm:$0xff]
    %v612 = vld [vmem:[#allocation6 + $0xa18] sm:$0xff]
    %v613 = vld [vmem:[#allocation6 + $0xa20] sm:$0xff]
    %v614 = vld [vmem:[#allocation6 + $0xa28] sm:$0xff]
    %v615 = vld [vmem:[#allocation6 + $0xa30] sm:$0xff]
    %v616 = vld [vmem:[#allocation6 + $0xa38] sm:$0xff]
    %v617 = vld [vmem:[#allocation6 + $0xa40] sm:$0xff]
    %v618 = vld [vmem:[#allocation6 + $0xa48] sm:$0xff]
    %v619 = vld [vmem:[#allocation6 + $0xa50] sm:$0xff]
    %v620 = vld [vmem:[#allocation6 + $0xa58] sm:$0xff]
    %v621 = vld [vmem:[#allocation6 + $0xa60] sm:$0xff]
    %v622 = vld [vmem:[#allocation6 + $0xa68] sm:$0xff]
    %v623 = vld [vmem:[#allocation6 + $0xa70] sm:$0xff]
    %v624 = vld [vmem:[#allocation6 + $0xa78] sm:$0xff]
    %v625 = vld [vmem:[#allocation6 + $0xa80] sm:$0xff]
    %v626 = vld [vmem:[#allocation6 + $0xa88] sm:$0xff]
    %v627 = vld [vmem:[#allocation6 + $0xa90] sm:$0xff]
    %v628 = vld [vmem:[#allocation6 + $0xa98] sm:$0xff]
    %v629 = vld [vmem:[#allocation6 + $0xaa0] sm:$0xff]
    %v630 = vld [vmem:[#allocation6 + $0xaa8] sm:$0xff]
    %v631 = vld [vmem:[#allocation6 + $0xab0] sm:$0xff]
    %v632 = vld [vmem:[#allocation6 + $0xab8] sm:$0xff]
    %v633 = vld [vmem:[#allocation6 + $0xac0] sm:$0xff]
    %v634 = vld [vmem:[#allocation6 + $0xac8] sm:$0xff]
    %v635 = vld [vmem:[#allocation6 + $0xad0] sm:$0xff]
    %v636 = vld [vmem:[#allocation6 + $0xad8] sm:$0xff]
    %v637 = vld [vmem:[#allocation6 + $0xae0] sm:$0xff]
    %v638 = vld [vmem:[#allocation6 + $0xae8] sm:$0xff]
    %v639 = vld [vmem:[#allocation6 + $0xaf0] sm:$0xff]
    %v640 = vld [vmem:[#allocation6 + $0xaf8] sm:$0xff]
    %v641 = vld [vmem:[#allocation6 + $0xb00] sm:$0xff]
    %v642 = vld [vmem:[#allocation6 + $0xb08] sm:$0xff]
    %v643 = vld [vmem:[#allocation6 + $0xb10] sm:$0xff]
    %v644 = vld [vmem:[#allocation6 + $0xb18] sm:$0xff]
    %v645 = vld [vmem:[#allocation6 + $0xb20] sm:$0xff]
    %v646 = vld [vmem:[#allocation6 + $0xb28] sm:$0xff]
    %v647 = vld [vmem:[#allocation6 + $0xb30] sm:$0xff]
    %v648 = vld [vmem:[#allocation6 + $0xb38] sm:$0xff]
    %v649 = vld [vmem:[#allocation6 + $0xb40] sm:$0xff]
    %v650 = vld [vmem:[#allocation6 + $0xb48] sm:$0xff]
    %v651 = vld [vmem:[#allocation6 + $0xb50] sm:$0xff]
    %v652 = vld [vmem:[#allocation6 + $0xb58] sm:$0xff]
    %v653 = vld [vmem:[#allocation6 + $0xb60] sm:$0xff]
    %v654 = vld [vmem:[#allocation6 + $0xb68] sm:$0xff]
    %v655 = vld [vmem:[#allocation6 + $0xb70] sm:$0xff]
    %v656 = vld [vmem:[#allocation6 + $0xb78] sm:$0xff]
    %v657 = vld [vmem:[#allocation6 + $0xb80] sm:$0xff]
    %v658 = vld [vmem:[#allocation6 + $0xb88] sm:$0xff]
    %v659 = vld [vmem:[#allocation6 + $0xb90] sm:$0xff]
    %v660 = vld [vmem:[#allocation6 + $0xb98] sm:$0xff]
    %v661 = vld [vmem:[#allocation6 + $0xba0] sm:$0xff]
    %v662 = vld [vmem:[#allocation6 + $0xba8] sm:$0xff]
    %v663 = vld [vmem:[#allocation6 + $0xbb0] sm:$0xff]
    %v664 = vld [vmem:[#allocation6 + $0xbb8] sm:$0xff]
    %v665 = vld [vmem:[#allocation6 + $0xbc0] sm:$0xff]
    %v666 = vld [vmem:[#allocation6 + $0xbc8] sm:$0xff]
    %v667 = vld [vmem:[#allocation6 + $0xbd0] sm:$0xff]
    %v668 = vld [vmem:[#allocation6 + $0xbd8] sm:$0xff]
    %v669 = vld [vmem:[#allocation6 + $0xbe0] sm:$0xff]
    %v670 = vld [vmem:[#allocation6 + $0xbe8] sm:$0xff]
    %v671 = vld [vmem:[#allocation6 + $0xbf0] sm:$0xff]
    %v672 = vld [vmem:[#allocation6 + $0xbf8] sm:$0xff]
    %v673 = vld [vmem:[#allocation6 + $0xc00] sm:$0xff]
    %v674 = vld [vmem:[#allocation6 + $0xc08] sm:$0xff]
    %v675 = vld [vmem:[#allocation6 + $0xc10] sm:$0xff]
    %v676 = vld [vmem:[#allocation6 + $0xc18] sm:$0xff]
    %v677 = vld [vmem:[#allocation6 + $0xc20] sm:$0xff]
    %v678 = vld [vmem:[#allocation6 + $0xc28] sm:$0xff]
    %v679 = vld [vmem:[#allocation6 + $0xc30] sm:$0xff]
    %v680 = vld [vmem:[#allocation6 + $0xc38] sm:$0xff]
    %v681 = vld [vmem:[#allocation6 + $0xc40] sm:$0xff]
    %v682 = vld [vmem:[#allocation6 + $0xc48] sm:$0xff]
    %v683 = vld [vmem:[#allocation6 + $0xc50] sm:$0xff]
    %v684 = vld [vmem:[#allocation6 + $0xc58] sm:$0xff]
    %v685 = vld [vmem:[#allocation6 + $0xc60] sm:$0xff]
    %v686 = vld [vmem:[#allocation6 + $0xc68] sm:$0xff]
    %v687 = vld [vmem:[#allocation6 + $0xc70] sm:$0xff]
    %v688 = vld [vmem:[#allocation6 + $0xc78] sm:$0xff]
    %v689 = vld [vmem:[#allocation6 + $0xc80] sm:$0xff]
    %v690 = vld [vmem:[#allocation6 + $0xc88] sm:$0xff]
    %v691 = vld [vmem:[#allocation6 + $0xc90] sm:$0xff]
    %v692 = vld [vmem:[#allocation6 + $0xc98] sm:$0xff]
    %v693 = vld [vmem:[#allocation6 + $0xca0] sm:$0xff]
    %v694 = vld [vmem:[#allocation6 + $0xca8] sm:$0xff]
    %v695 = vld [vmem:[#allocation6 + $0xcb0] sm:$0xff]
    %v696 = vld [vmem:[#allocation6 + $0xcb8] sm:$0xff]
    %v697 = vld [vmem:[#allocation6 + $0xcc0] sm:$0xff]
    %v698 = vld [vmem:[#allocation6 + $0xcc8] sm:$0xff]
    %v699 = vld [vmem:[#allocation6 + $0xcd0] sm:$0xff]
    %v700 = vld [vmem:[#allocation6 + $0xcd8] sm:$0xff]
    %v701 = vld [vmem:[#allocation6 + $0xce0] sm:$0xff]
    %v702 = vld [vmem:[#allocation6 + $0xce8] sm:$0xff]
    %v703 = vld [vmem:[#allocation6 + $0xcf0] sm:$0xff]
    %v704 = vld [vmem:[#allocation6 + $0xcf8] sm:$0xff]
    %v705 = vld [vmem:[#allocation6 + $0xd00] sm:$0xff]
    %v706 = vld [vmem:[#allocation6 + $0xd08] sm:$0xff]
    %v707 = vld [vmem:[#allocation6 + $0xd10] sm:$0xff]
    %v708 = vld [vmem:[#allocation6 + $0xd18] sm:$0xff]
    %v709 = vld [vmem:[#allocation6 + $0xd20] sm:$0xff]
    %v710 = vld [vmem:[#allocation6 + $0xd28] sm:$0xff]
    %v711 = vld [vmem:[#allocation6 + $0xd30] sm:$0xff]
    %v712 = vld [vmem:[#allocation6 + $0xd38] sm:$0xff]
    %v713 = vld [vmem:[#allocation6 + $0xd40] sm:$0xff]
    %v714 = vld [vmem:[#allocation6 + $0xd48] sm:$0xff]
    %v715 = vld [vmem:[#allocation6 + $0xd50] sm:$0xff]
    %v716 = vld [vmem:[#allocation6 + $0xd58] sm:$0xff]
    %v717 = vld [vmem:[#allocation6 + $0xd60] sm:$0xff]
    %v718 = vld [vmem:[#allocation6 + $0xd68] sm:$0xff]
    %v719 = vld [vmem:[#allocation6 + $0xd70] sm:$0xff]
    %v720 = vld [vmem:[#allocation6 + $0xd78] sm:$0xff]
    %v721 = vld [vmem:[#allocation6 + $0xd80] sm:$0xff]
    %v722 = vld [vmem:[#allocation6 + $0xd88] sm:$0xff]
    %v723 = vld [vmem:[#allocation6 + $0xd90] sm:$0xff]
    %v724 = vld [vmem:[#allocation6 + $0xd98] sm:$0xff]
    %v725 = vld [vmem:[#allocation6 + $0xda0] sm:$0xff]
    %v726 = vld [vmem:[#allocation6 + $0xda8] sm:$0xff]
    %v727 = vld [vmem:[#allocation6 + $0xdb0] sm:$0xff]
    %v728 = vld [vmem:[#allocation6 + $0xdb8] sm:$0xff]
    %v729 = vld [vmem:[#allocation6 + $0xdc0] sm:$0xff]
    %v730 = vld [vmem:[#allocation6 + $0xdc8] sm:$0xff]
    %v731 = vld [vmem:[#allocation6 + $0xdd0] sm:$0xff]
    %v732 = vld [vmem:[#allocation6 + $0xdd8] sm:$0xff]
    %v733 = vld [vmem:[#allocation6 + $0xde0] sm:$0xff]
    %v734 = vld [vmem:[#allocation6 + $0xde8] sm:$0xff]
    %v735 = vld [vmem:[#allocation6 + $0xdf0] sm:$0xff]
    %v736 = vld [vmem:[#allocation6 + $0xdf8] sm:$0xff]
    %v737 = vld [vmem:[#allocation6 + $0xe00] sm:$0xff]
    %v738 = vld [vmem:[#allocation6 + $0xe08] sm:$0xff]
    %v739 = vld [vmem:[#allocation6 + $0xe10] sm:$0xff]
    %v740 = vld [vmem:[#allocation6 + $0xe18] sm:$0xff]
    %v741 = vld [vmem:[#allocation6 + $0xe20] sm:$0xff]
    %v742 = vld [vmem:[#allocation6 + $0xe28] sm:$0xff]
    %v743 = vld [vmem:[#allocation6 + $0xe30] sm:$0xff]
    %v744 = vld [vmem:[#allocation6 + $0xe38] sm:$0xff]
    %v745 = vld [vmem:[#allocation6 + $0xe40] sm:$0xff]
    %v746 = vld [vmem:[#allocation6 + $0xe48] sm:$0xff]
    %v747 = vld [vmem:[#allocation6 + $0xe50] sm:$0xff]
    %v748 = vld [vmem:[#allocation6 + $0xe58] sm:$0xff]
    %v749 = vld [vmem:[#allocation6 + $0xe60] sm:$0xff]
    %v750 = vld [vmem:[#allocation6 + $0xe68] sm:$0xff]
    %v751 = vld [vmem:[#allocation6 + $0xe70] sm:$0xff]
    %v752 = vld [vmem:[#allocation6 + $0xe78] sm:$0xff]
    %v753 = vld [vmem:[#allocation6 + $0xe80] sm:$0xff]
    %v754 = vld [vmem:[#allocation6 + $0xe88] sm:$0xff]
    %v755 = vld [vmem:[#allocation6 + $0xe90] sm:$0xff]
    %v756 = vld [vmem:[#allocation6 + $0xe98] sm:$0xff]
    %v757 = vld [vmem:[#allocation6 + $0xea0] sm:$0xff]
    %v758 = vld [vmem:[#allocation6 + $0xea8] sm:$0xff]
    %v759 = vld [vmem:[#allocation6 + $0xeb0] sm:$0xff]
    %v760 = vld [vmem:[#allocation6 + $0xeb8] sm:$0xff]
    %v761 = vld [vmem:[#allocation6 + $0xec0] sm:$0xff]
    %v762 = vld [vmem:[#allocation6 + $0xec8] sm:$0xff]
    %v763 = vld [vmem:[#allocation6 + $0xed0] sm:$0xff]
    %v764 = vld [vmem:[#allocation6 + $0xed8] sm:$0xff]
    %v765 = vld [vmem:[#allocation6 + $0xee0] sm:$0xff]
    %v766 = vld [vmem:[#allocation6 + $0xee8] sm:$0xff]
    %v767 = vld [vmem:[#allocation6 + $0xef0] sm:$0xff]
    %v768 = vld [vmem:[#allocation6 + $0xef8] sm:$0xff]
    %v769 = vld [vmem:[#allocation6 + $0xf00] sm:$0xff]
    %v770 = vld [vmem:[#allocation6 + $0xf08] sm:$0xff]
    %v771 = vld [vmem:[#allocation6 + $0xf10] sm:$0xff]
    %v772 = vld [vmem:[#allocation6 + $0xf18] sm:$0xff]
    %v773 = vld [vmem:[#allocation6 + $0xf20] sm:$0xff]
    %v774 = vld [vmem:[#allocation6 + $0xf28] sm:$0xff]
    %v775 = vld [vmem:[#allocation6 + $0xf30] sm:$0xff]
    %v776 = vld [vmem:[#allocation6 + $0xf38] sm:$0xff]
    %v777 = vld [vmem:[#allocation6 + $0xf40] sm:$0xff]
    %v778 = vld [vmem:[#allocation6 + $0xf48] sm:$0xff]
    %v779 = vld [vmem:[#allocation6 + $0xf50] sm:$0xff]
    %v780 = vld [vmem:[#allocation6 + $0xf58] sm:$0xff]
    %v781 = vld [vmem:[#allocation6 + $0xf60] sm:$0xff]
    %v782 = vld [vmem:[#allocation6 + $0xf68] sm:$0xff]
    %v783 = vld [vmem:[#allocation6 + $0xf70] sm:$0xff]
    %v784 = vld [vmem:[#allocation6 + $0xf78] sm:$0xff]
    %v785 = vld [vmem:[#allocation6 + $0xf80] sm:$0xff]
    %v786 = vld [vmem:[#allocation6 + $0xf88] sm:$0xff]
    %v787 = vld [vmem:[#allocation6 + $0xf90] sm:$0xff]
    %v788 = vld [vmem:[#allocation6 + $0xf98] sm:$0xff]
    %v789 = vld [vmem:[#allocation6 + $0xfa0] sm:$0xff]
    %v790 = vld [vmem:[#allocation6 + $0xfa8] sm:$0xff]
    %v791 = vld [vmem:[#allocation6 + $0xfb0] sm:$0xff]
    %v792 = vld [vmem:[#allocation6 + $0xfb8] sm:$0xff]
    %v793 = vld [vmem:[#allocation6 + $0xfc0] sm:$0xff]
    %v794 = vld [vmem:[#allocation6 + $0xfc8] sm:$0xff]
    %v795 = vld [vmem:[#allocation6 + $0xfd0] sm:$0xff]
    %v796 = vld [vmem:[#allocation6 + $0xfd8] sm:$0xff]
    %v797 = vld [vmem:[#allocation6 + $0xfe0] sm:$0xff]
    %v798 = vld [vmem:[#allocation6 + $0xfe8] sm:$0xff]
    %v799 = vld [vmem:[#allocation6 + $0xff0] sm:$0xff]
    %v800 = vld [vmem:[#allocation6 + $0xff8] sm:$0xff]
    %v801 = vld [vmem:[#allocation6 + $0x1000] sm:$0xff]
    %v802 = vld [vmem:[#allocation6 + $0x1008] sm:$0xff]
    %v803 = vld [vmem:[#allocation6 + $0x1010] sm:$0xff]
    %v804 = vld [vmem:[#allocation6 + $0x1018] sm:$0xff]
    %v805 = vld [vmem:[#allocation6 + $0x1020] sm:$0xff]
    %v806 = vld [vmem:[#allocation6 + $0x1028] sm:$0xff]
    %v807 = vld [vmem:[#allocation6 + $0x1030] sm:$0xff]
    %v808 = vld [vmem:[#allocation6 + $0x1038] sm:$0xff]
    %v809 = vld [vmem:[#allocation6 + $0x1040] sm:$0xff]
    %v810 = vld [vmem:[#allocation6 + $0x1048] sm:$0xff]
    %v811 = vld [vmem:[#allocation6 + $0x1050] sm:$0xff]
    %v812 = vld [vmem:[#allocation6 + $0x1058] sm:$0xff]
    %v813 = vld [vmem:[#allocation6 + $0x1060] sm:$0xff]
    %v814 = vld [vmem:[#allocation6 + $0x1068] sm:$0xff]
    %v815 = vld [vmem:[#allocation6 + $0x1070] sm:$0xff]
    %v816 = vld [vmem:[#allocation6 + $0x1078] sm:$0xff]
    %v817 = vld [vmem:[#allocation6 + $0x1080] sm:$0xff]
    %v818 = vld [vmem:[#allocation6 + $0x1088] sm:$0xff]
    %v819 = vld [vmem:[#allocation6 + $0x1090] sm:$0xff]
    %v820 = vld [vmem:[#allocation6 + $0x1098] sm:$0xff]
    %v821 = vld [vmem:[#allocation6 + $0x10a0] sm:$0xff]
    %v822 = vld [vmem:[#allocation6 + $0x10a8] sm:$0xff]
    %v823 = vld [vmem:[#allocation6 + $0x10b0] sm:$0xff]
    %v824 = vld [vmem:[#allocation6 + $0x10b8] sm:$0xff]
    %v825 = vld [vmem:[#allocation6 + $0x10c0] sm:$0xff]
    %v826 = vld [vmem:[#allocation6 + $0x10c8] sm:$0xff]
    %v827 = vld [vmem:[#allocation6 + $0x10d0] sm:$0xff]
    %v828 = vld [vmem:[#allocation6 + $0x10d8] sm:$0xff]
    %v829 = vld [vmem:[#allocation6 + $0x10e0] sm:$0xff]
    %v830 = vld [vmem:[#allocation6 + $0x10e8] sm:$0xff]
    %v831 = vld [vmem:[#allocation6 + $0x10f0] sm:$0xff]
    %v832 = vld [vmem:[#allocation6 + $0x10f8] sm:$0xff]
    %v833 = vld [vmem:[#allocation6 + $0x1100] sm:$0xff]
    %v834 = vld [vmem:[#allocation6 + $0x1108] sm:$0xff]
    %v835 = vld [vmem:[#allocation6 + $0x1110] sm:$0xff]
    %v836 = vld [vmem:[#allocation6 + $0x1118] sm:$0xff]
    %v837 = vld [vmem:[#allocation6 + $0x1120] sm:$0xff]
    %v838 = vld [vmem:[#allocation6 + $0x1128] sm:$0xff]
    %v839 = vld [vmem:[#allocation6 + $0x1130] sm:$0xff]
    %v840 = vld [vmem:[#allocation6 + $0x1138] sm:$0xff]
    %v841 = vld [vmem:[#allocation6 + $0x1140] sm:$0xff]
    %v842 = vld [vmem:[#allocation6 + $0x1148] sm:$0xff]
    %v843 = vld [vmem:[#allocation6 + $0x1150] sm:$0xff]
    %v844 = vld [vmem:[#allocation6 + $0x1158] sm:$0xff]
    %v845 = vld [vmem:[#allocation6 + $0x1160] sm:$0xff]
    %v846 = vld [vmem:[#allocation6 + $0x1168] sm:$0xff]
    %v847 = vld [vmem:[#allocation6 + $0x1170] sm:$0xff]
    %v848 = vld [vmem:[#allocation6 + $0x1178] sm:$0xff]
    %v849 = vld [vmem:[#allocation6 + $0x1180] sm:$0xff]
    %v850 = vld [vmem:[#allocation6 + $0x1188] sm:$0xff]
    %v851 = vld [vmem:[#allocation6 + $0x1190] sm:$0xff]
    %v852 = vld [vmem:[#allocation6 + $0x1198] sm:$0xff]
    %v853 = vld [vmem:[#allocation6 + $0x11a0] sm:$0xff]
    %v854 = vld [vmem:[#allocation6 + $0x11a8] sm:$0xff]
    %v855 = vld [vmem:[#allocation6 + $0x11b0] sm:$0xff]
    %v856 = vld [vmem:[#allocation6 + $0x11b8] sm:$0xff]
    %v857 = vld [vmem:[#allocation6 + $0x11c0] sm:$0xff]
    %v858 = vld [vmem:[#allocation6 + $0x11c8] sm:$0xff]
    %v859 = vld [vmem:[#allocation6 + $0x11d0] sm:$0xff]
    %v860 = vld [vmem:[#allocation6 + $0x11d8] sm:$0xff]
    %v861 = vld [vmem:[#allocation6 + $0x11e0] sm:$0xff]
    %v862 = vld [vmem:[#allocation6 + $0x11e8] sm:$0xff]
    %v863 = vld [vmem:[#allocation6 + $0x11f0] sm:$0xff]
    %v864 = vld [vmem:[#allocation6 + $0x11f8] sm:$0xff]
    %v865 = vld [vmem:[#allocation6 + $0x1200] sm:$0xff]
    %v866 = vld [vmem:[#allocation6 + $0x1208] sm:$0xff]
    %v867 = vld [vmem:[#allocation6 + $0x1210] sm:$0xff]
    %v868 = vld [vmem:[#allocation6 + $0x1218] sm:$0xff]
    %v869 = vld [vmem:[#allocation6 + $0x1220] sm:$0xff]
    %v870 = vld [vmem:[#allocation6 + $0x1228] sm:$0xff]
    %v871 = vld [vmem:[#allocation6 + $0x1230] sm:$0xff]
    %v872 = vld [vmem:[#allocation6 + $0x1238] sm:$0xff]
    %v873 = vld [vmem:[#allocation6 + $0x1240] sm:$0xff]
    %v874 = vld [vmem:[#allocation6 + $0x1248] sm:$0xff]
    %v875 = vld [vmem:[#allocation6 + $0x1250] sm:$0xff]
    %v876 = vld [vmem:[#allocation6 + $0x1258] sm:$0xff]
    %v877 = vld [vmem:[#allocation6 + $0x1260] sm:$0xff]
    %v878 = vld [vmem:[#allocation6 + $0x1268] sm:$0xff]
    %v879 = vld [vmem:[#allocation6 + $0x1270] sm:$0xff]
    %v880 = vld [vmem:[#allocation6 + $0x1278] sm:$0xff]
    %v881 = vld [vmem:[#allocation6 + $0x1280] sm:$0xff]
    %v882 = vld [vmem:[#allocation6 + $0x1288] sm:$0xff]
    %v883 = vld [vmem:[#allocation6 + $0x1290] sm:$0xff]
    %v884 = vld [vmem:[#allocation6 + $0x1298] sm:$0xff]
    %v885 = vld [vmem:[#allocation6 + $0x12a0] sm:$0xff]
    %v886 = vld [vmem:[#allocation6 + $0x12a8] sm:$0xff]
    %v887 = vld [vmem:[#allocation6 + $0x12b0] sm:$0xff]
    %v888 = vld [vmem:[#allocation6 + $0x12b8] sm:$0xff]
    %v889 = vld [vmem:[#allocation6 + $0x12c0] sm:$0xff]
    %v890 = vld [vmem:[#allocation6 + $0x12c8] sm:$0xff]
    %v891 = vld [vmem:[#allocation6 + $0x12d0] sm:$0xff]
    %v892 = vld [vmem:[#allocation6 + $0x12d8] sm:$0xff]
    %v893 = vld [vmem:[#allocation6 + $0x12e0] sm:$0xff]
    %v894 = vld [vmem:[#allocation6 + $0x12e8] sm:$0xff]
    %v895 = vld [vmem:[#allocation6 + $0x12f0] sm:$0xff]
    %v896 = vld [vmem:[#allocation6 + $0x12f8] sm:$0xff]
    %v897 = vld [vmem:[#allocation6 + $0x1300] sm:$0xff]
    %v898 = vld [vmem:[#allocation6 + $0x1308] sm:$0xff]
    %v899 = vld [vmem:[#allocation6 + $0x1310] sm:$0xff]
    %v900 = vld [vmem:[#allocation6 + $0x1318] sm:$0xff]
    %v901 = vld [vmem:[#allocation6 + $0x1320] sm:$0xff]
    %v902 = vld [vmem:[#allocation6 + $0x1328] sm:$0xff]
    %v903 = vld [vmem:[#allocation6 + $0x1330] sm:$0xff]
    %v904 = vld [vmem:[#allocation6 + $0x1338] sm:$0xff]
    %v905 = vld [vmem:[#allocation6 + $0x1340] sm:$0xff]
    %v906 = vld [vmem:[#allocation6 + $0x1348] sm:$0xff]
    %v907 = vld [vmem:[#allocation6 + $0x1350] sm:$0xff]
    %v908 = vld [vmem:[#allocation6 + $0x1358] sm:$0xff]
    %v909 = vld [vmem:[#allocation6 + $0x1360] sm:$0xff]
    %v910 = vld [vmem:[#allocation6 + $0x1368] sm:$0xff]
    %v911 = vld [vmem:[#allocation6 + $0x1370] sm:$0xff]
    %v912 = vld [vmem:[#allocation6 + $0x1378] sm:$0xff]
    %v913 = vld [vmem:[#allocation6 + $0x1380] sm:$0xff]
    %v914 = vld [vmem:[#allocation6 + $0x1388] sm:$0xff]
    %v915 = vld [vmem:[#allocation6 + $0x1390] sm:$0xff]
    %v916 = vld [vmem:[#allocation6 + $0x1398] sm:$0xff]
    %v917 = vld [vmem:[#allocation6 + $0x13a0] sm:$0xff]
    %v918 = vld [vmem:[#allocation6 + $0x13a8] sm:$0xff]
    %v919 = vld [vmem:[#allocation6 + $0x13b0] sm:$0xff]
    %v920 = vld [vmem:[#allocation6 + $0x13b8] sm:$0xff]
    %v921 = vld [vmem:[#allocation6 + $0x13c0] sm:$0xff]
    %v922 = vld [vmem:[#allocation6 + $0x13c8] sm:$0xff]
    %v923 = vld [vmem:[#allocation6 + $0x13d0] sm:$0xff]
    %v924 = vld [vmem:[#allocation6 + $0x13d8] sm:$0xff]
    %v925 = vld [vmem:[#allocation6 + $0x13e0] sm:$0xff]
    %v926 = vld [vmem:[#allocation6 + $0x13e8] sm:$0xff]
    %v927 = vld [vmem:[#allocation6 + $0x13f0] sm:$0xff]
    %v928 = vld [vmem:[#allocation6 + $0x13f8] sm:$0xff]
    %v929 = vld [vmem:[#allocation6 + $0x1400] sm:$0xff]
    %v930 = vld [vmem:[#allocation6 + $0x1408] sm:$0xff]
    %v931 = vld [vmem:[#allocation6 + $0x1410] sm:$0xff]
    %v932 = vld [vmem:[#allocation6 + $0x1418] sm:$0xff]
    %v933 = vld [vmem:[#allocation6 + $0x1420] sm:$0xff]
    %v934 = vld [vmem:[#allocation6 + $0x1428] sm:$0xff]
    %v935 = vld [vmem:[#allocation6 + $0x1430] sm:$0xff]
    %v936 = vld [vmem:[#allocation6 + $0x1438] sm:$0xff]
    %v937 = vld [vmem:[#allocation6 + $0x1440] sm:$0xff]
    %v938 = vld [vmem:[#allocation6 + $0x1448] sm:$0xff]
    %v939 = vld [vmem:[#allocation6 + $0x1450] sm:$0xff]
    %v940 = vld [vmem:[#allocation6 + $0x1458] sm:$0xff]
    %v941 = vld [vmem:[#allocation6 + $0x1460] sm:$0xff]
    %v942 = vld [vmem:[#allocation6 + $0x1468] sm:$0xff]
    %v943 = vld [vmem:[#allocation6 + $0x1470] sm:$0xff]
    %v944 = vld [vmem:[#allocation6 + $0x1478] sm:$0xff]
    %v945 = vld [vmem:[#allocation6 + $0x1480] sm:$0xff]
    %v946 = vld [vmem:[#allocation6 + $0x1488] sm:$0xff]
    %v947 = vld [vmem:[#allocation6 + $0x1490] sm:$0xff]
    %v948 = vld [vmem:[#allocation6 + $0x1498] sm:$0xff]
    %v949 = vld [vmem:[#allocation6 + $0x14a0] sm:$0xff]
    %v950 = vld [vmem:[#allocation6 + $0x14a8] sm:$0xff]
    %v951 = vld [vmem:[#allocation6 + $0x14b0] sm:$0xff]
    %v952 = vld [vmem:[#allocation6 + $0x14b8] sm:$0xff]
    %v953 = vld [vmem:[#allocation6 + $0x14c0] sm:$0xff]
    %v954 = vld [vmem:[#allocation6 + $0x14c8] sm:$0xff]
    %v955 = vld [vmem:[#allocation6 + $0x14d0] sm:$0xff]
    %v956 = vld [vmem:[#allocation6 + $0x14d8] sm:$0xff]
    %v957 = vld [vmem:[#allocation6 + $0x14e0] sm:$0xff]
    %v958 = vld [vmem:[#allocation6 + $0x14e8] sm:$0xff]
    %v959 = vld [vmem:[#allocation6 + $0x14f0] sm:$0xff]
    %v960 = vld [vmem:[#allocation6 + $0x14f8] sm:$0xff]
    %v961 = vld [vmem:[#allocation6 + $0x1500] sm:$0xff]
    %v962 = vld [vmem:[#allocation6 + $0x1508] sm:$0xff]
    %v963 = vld [vmem:[#allocation6 + $0x1510] sm:$0xff]
    %v964 = vld [vmem:[#allocation6 + $0x1518] sm:$0xff]
    %v965 = vld [vmem:[#allocation6 + $0x1520] sm:$0xff]
    %v966 = vld [vmem:[#allocation6 + $0x1528] sm:$0xff]
    %v967 = vld [vmem:[#allocation6 + $0x1530] sm:$0xff]
    %v968 = vld [vmem:[#allocation6 + $0x1538] sm:$0xff]
    %v969 = vld [vmem:[#allocation6 + $0x1540] sm:$0xff]
    %v970 = vld [vmem:[#allocation6 + $0x1548] sm:$0xff]
    %v971 = vld [vmem:[#allocation6 + $0x1550] sm:$0xff]
    %v972 = vld [vmem:[#allocation6 + $0x1558] sm:$0xff]
    %v973 = vld [vmem:[#allocation6 + $0x1560] sm:$0xff]
    %v974 = vld [vmem:[#allocation6 + $0x1568] sm:$0xff]
    %v975 = vld [vmem:[#allocation6 + $0x1570] sm:$0xff]
    %v976 = vld [vmem:[#allocation6 + $0x1578] sm:$0xff]
    %v977 = vld [vmem:[#allocation6 + $0x1580] sm:$0xff]
    %v978 = vld [vmem:[#allocation6 + $0x1588] sm:$0xff]
    %v979 = vld [vmem:[#allocation6 + $0x1590] sm:$0xff]
    %v980 = vld [vmem:[#allocation6 + $0x1598] sm:$0xff]
    %v981 = vld [vmem:[#allocation6 + $0x15a0] sm:$0xff]
    %v982 = vld [vmem:[#allocation6 + $0x15a8] sm:$0xff]
    %v983 = vld [vmem:[#allocation6 + $0x15b0] sm:$0xff]
    %v984 = vld [vmem:[#allocation6 + $0x15b8] sm:$0xff]
    %v985 = vld [vmem:[#allocation6 + $0x15c0] sm:$0xff]
    %v986 = vld [vmem:[#allocation6 + $0x15c8] sm:$0xff]
    %v987 = vld [vmem:[#allocation6 + $0x15d0] sm:$0xff]
    %v988 = vld [vmem:[#allocation6 + $0x15d8] sm:$0xff]
    %v989 = vld [vmem:[#allocation6 + $0x15e0] sm:$0xff]
    %v990 = vld [vmem:[#allocation6 + $0x15e8] sm:$0xff]
    %v991 = vld [vmem:[#allocation6 + $0x15f0] sm:$0xff]
    %v992 = vld [vmem:[#allocation6 + $0x15f8] sm:$0xff]
    %v993 = vld [vmem:[#allocation6 + $0x1600] sm:$0xff]
    %v994 = vld [vmem:[#allocation6 + $0x1608] sm:$0xff]
    %v995 = vld [vmem:[#allocation6 + $0x1610] sm:$0xff]
    %v996 = vld [vmem:[#allocation6 + $0x1618] sm:$0xff]
    %v997 = vld [vmem:[#allocation6 + $0x1620] sm:$0xff]
    %v998 = vld [vmem:[#allocation6 + $0x1628] sm:$0xff]
    %v999 = vld [vmem:[#allocation6 + $0x1630] sm:$0xff]
    %v1000 = vld [vmem:[#allocation6 + $0x1638] sm:$0xff]
    %v1001 = vld [vmem:[#allocation6 + $0x1640] sm:$0xff]
    %v1002 = vld [vmem:[#allocation6 + $0x1648] sm:$0xff]
    %v1003 = vld [vmem:[#allocation6 + $0x1650] sm:$0xff]
    %v1004 = vld [vmem:[#allocation6 + $0x1658] sm:$0xff]
    %v1005 = vld [vmem:[#allocation6 + $0x1660] sm:$0xff]
    %v1006 = vld [vmem:[#allocation6 + $0x1668] sm:$0xff]
    %v1007 = vld [vmem:[#allocation6 + $0x1670] sm:$0xff]
    %v1008 = vld [vmem:[#allocation6 + $0x1678] sm:$0xff]
    %v1009 = vld [vmem:[#allocation6 + $0x1680] sm:$0xff]
    %v1010 = vld [vmem:[#allocation6 + $0x1688] sm:$0xff]
    %v1011 = vld [vmem:[#allocation6 + $0x1690] sm:$0xff]
    %v1012 = vld [vmem:[#allocation6 + $0x1698] sm:$0xff]
    %v1013 = vld [vmem:[#allocation6 + $0x16a0] sm:$0xff]
    %v1014 = vld [vmem:[#allocation6 + $0x16a8] sm:$0xff]
    %v1015 = vld [vmem:[#allocation6 + $0x16b0] sm:$0xff]
    %v1016 = vld [vmem:[#allocation6 + $0x16b8] sm:$0xff]
    %v1017 = vld [vmem:[#allocation6 + $0x16c0] sm:$0xff]
    %v1018 = vld [vmem:[#allocation6 + $0x16c8] sm:$0xff]
    %v1019 = vld [vmem:[#allocation6 + $0x16d0] sm:$0xff]
    %v1020 = vld [vmem:[#allocation6 + $0x16d8] sm:$0xff]
    %v1021 = vld [vmem:[#allocation6 + $0x16e0] sm:$0xff]
    %v1022 = vld [vmem:[#allocation6 + $0x16e8] sm:$0xff]
    %v1023 = vld [vmem:[#allocation6 + $0x16f0] sm:$0xff]
    %v1024 = vld [vmem:[#allocation6 + $0x16f8] sm:$0xff]
    %v1025 = vld [vmem:[#allocation6 + $0x1700] sm:$0xff]
    %v1026 = vld [vmem:[#allocation6 + $0x1708] sm:$0xff]
    %v1027 = vld [vmem:[#allocation6 + $0x1710] sm:$0xff]
    %v1028 = vld [vmem:[#allocation6 + $0x1718] sm:$0xff]
    %v1029 = vld [vmem:[#allocation6 + $0x1720] sm:$0xff]
    %v1030 = vld [vmem:[#allocation6 + $0x1728] sm:$0xff]
    %v1031 = vld [vmem:[#allocation6 + $0x1730] sm:$0xff]
    %v1032 = vld [vmem:[#allocation6 + $0x1738] sm:$0xff]
    %v1033 = vld [vmem:[#allocation6 + $0x1740] sm:$0xff]
    %v1034 = vld [vmem:[#allocation6 + $0x1748] sm:$0xff]
    %v1035 = vld [vmem:[#allocation6 + $0x1750] sm:$0xff]
    %v1036 = vld [vmem:[#allocation6 + $0x1758] sm:$0xff]
    %v1037 = vld [vmem:[#allocation6 + $0x1760] sm:$0xff]
    %v1038 = vld [vmem:[#allocation6 + $0x1768] sm:$0xff]
    %v1039 = vld [vmem:[#allocation6 + $0x1770] sm:$0xff]
    %v1040 = vld [vmem:[#allocation6 + $0x1778] sm:$0xff]
    %v1041 = vld [vmem:[#allocation6 + $0x1780] sm:$0xff]
    %v1042 = vld [vmem:[#allocation6 + $0x1788] sm:$0xff]
    %v1043 = vld [vmem:[#allocation6 + $0x1790] sm:$0xff]
    %v1044 = vld [vmem:[#allocation6 + $0x1798] sm:$0xff]
    %v1045 = vld [vmem:[#allocation6 + $0x17a0] sm:$0xff]
    %v1046 = vld [vmem:[#allocation6 + $0x17a8] sm:$0xff]
    %v1047 = vld [vmem:[#allocation6 + $0x17b0] sm:$0xff]
    %v1048 = vld [vmem:[#allocation6 + $0x17b8] sm:$0xff]
    %v1049 = vld [vmem:[#allocation6 + $0x17c0] sm:$0xff]
    %v1050 = vld [vmem:[#allocation6 + $0x17c8] sm:$0xff]
    %v1051 = vld [vmem:[#allocation6 + $0x17d0] sm:$0xff]
    %v1052 = vld [vmem:[#allocation6 + $0x17d8] sm:$0xff]
    %v1053 = vld [vmem:[#allocation6 + $0x17e0] sm:$0xff]
    %v1054 = vld [vmem:[#allocation6 + $0x17e8] sm:$0xff]
    %v1055 = vld [vmem:[#allocation6 + $0x17f0] sm:$0xff]
    %v1056 = vld [vmem:[#allocation6 + $0x17f8] sm:$0xff]
    %v1057 = vld [vmem:[#allocation6 + $0x1800] sm:$0xff]
    %v1058 = vld [vmem:[#allocation6 + $0x1808] sm:$0xff]
    %v1059 = vld [vmem:[#allocation6 + $0x1810] sm:$0xff]
    %v1060 = vld [vmem:[#allocation6 + $0x1818] sm:$0xff]
    %v1061 = vld [vmem:[#allocation6 + $0x1820] sm:$0xff]
    %v1062 = vld [vmem:[#allocation6 + $0x1828] sm:$0xff]
    %v1063 = vld [vmem:[#allocation6 + $0x1830] sm:$0xff]
    %v1064 = vld [vmem:[#allocation6 + $0x1838] sm:$0xff]
    %v1065 = vld [vmem:[#allocation6 + $0x1840] sm:$0xff]
    %v1066 = vld [vmem:[#allocation6 + $0x1848] sm:$0xff]
    %v1067 = vld [vmem:[#allocation6 + $0x1850] sm:$0xff]
    %v1068 = vld [vmem:[#allocation6 + $0x1858] sm:$0xff]
    %v1069 = vld [vmem:[#allocation6 + $0x1860] sm:$0xff]
    %v1070 = vld [vmem:[#allocation6 + $0x1868] sm:$0xff]
    %v1071 = vld [vmem:[#allocation6 + $0x1870] sm:$0xff]
    %v1072 = vld [vmem:[#allocation6 + $0x1878] sm:$0xff]
    %v1073 = vld [vmem:[#allocation6 + $0x1880] sm:$0xff]
    %v1074 = vld [vmem:[#allocation6 + $0x1888] sm:$0xff]
    %v1075 = vld [vmem:[#allocation6 + $0x1890] sm:$0xff]
    %v1076 = vld [vmem:[#allocation6 + $0x1898] sm:$0xff]
    %v1077 = vld [vmem:[#allocation6 + $0x18a0] sm:$0xff]
    %v1078 = vld [vmem:[#allocation6 + $0x18a8] sm:$0xff]
    %v1079 = vld [vmem:[#allocation6 + $0x18b0] sm:$0xff]
    %v1080 = vld [vmem:[#allocation6 + $0x18b8] sm:$0xff]
    %v1081 = vld [vmem:[#allocation6 + $0x18c0] sm:$0xff]
    %v1082 = vld [vmem:[#allocation6 + $0x18c8] sm:$0xff]
    %v1083 = vld [vmem:[#allocation6 + $0x18d0] sm:$0xff]
    %v1084 = vld [vmem:[#allocation6 + $0x18d8] sm:$0xff]
    %v1085 = vld [vmem:[#allocation6 + $0x18e0] sm:$0xff]
    %v1086 = vld [vmem:[#allocation6 + $0x18e8] sm:$0xff]
    %v1087 = vld [vmem:[#allocation6 + $0x18f0] sm:$0xff]
    %v1088 = vld [vmem:[#allocation6 + $0x18f8] sm:$0xff]
    %v1089 = vld [vmem:[#allocation6 + $0x1900] sm:$0xff]
    %v1090 = vld [vmem:[#allocation6 + $0x1908] sm:$0xff]
    %v1091 = vld [vmem:[#allocation6 + $0x1910] sm:$0xff]
    %v1092 = vld [vmem:[#allocation6 + $0x1918] sm:$0xff]
    %v1093 = vld [vmem:[#allocation6 + $0x1920] sm:$0xff]
    %v1094 = vld [vmem:[#allocation6 + $0x1928] sm:$0xff]
    %v1095 = vld [vmem:[#allocation6 + $0x1930] sm:$0xff]
    %v1096 = vld [vmem:[#allocation6 + $0x1938] sm:$0xff]
    %v1097 = vld [vmem:[#allocation6 + $0x1940] sm:$0xff]
    %v1098 = vld [vmem:[#allocation6 + $0x1948] sm:$0xff]
    %v1099 = vld [vmem:[#allocation6 + $0x1950] sm:$0xff]
    %v1100 = vld [vmem:[#allocation6 + $0x1958] sm:$0xff]
    %v1101 = vld [vmem:[#allocation6 + $0x1960] sm:$0xff]
    %v1102 = vld [vmem:[#allocation6 + $0x1968] sm:$0xff]
    %v1103 = vld [vmem:[#allocation6 + $0x1970] sm:$0xff]
    %v1104 = vld [vmem:[#allocation6 + $0x1978] sm:$0xff]
    %v1105 = vld [vmem:[#allocation6 + $0x1980] sm:$0xff]
    %v1106 = vld [vmem:[#allocation6 + $0x1988] sm:$0xff]
    %v1107 = vld [vmem:[#allocation6 + $0x1990] sm:$0xff]
    %v1108 = vld [vmem:[#allocation6 + $0x1998] sm:$0xff]
    %v1109 = vld [vmem:[#allocation6 + $0x19a0] sm:$0xff]
    %v1110 = vld [vmem:[#allocation6 + $0x19a8] sm:$0xff]
    %v1111 = vld [vmem:[#allocation6 + $0x19b0] sm:$0xff]
    %v1112 = vld [vmem:[#allocation6 + $0x19b8] sm:$0xff]
    %v1113 = vld [vmem:[#allocation6 + $0x19c0] sm:$0xff]
    %v1114 = vld [vmem:[#allocation6 + $0x19c8] sm:$0xff]
    %v1115 = vld [vmem:[#allocation6 + $0x19d0] sm:$0xff]
    %v1116 = vld [vmem:[#allocation6 + $0x19d8] sm:$0xff]
    %v1117 = vld [vmem:[#allocation6 + $0x19e0] sm:$0xff]
    %v1118 = vld [vmem:[#allocation6 + $0x19e8] sm:$0xff]
    %v1119 = vld [vmem:[#allocation6 + $0x19f0] sm:$0xff]
    %v1120 = vld [vmem:[#allocation6 + $0x19f8] sm:$0xff]
    %v1121 = vld [vmem:[#allocation6 + $0x1a00] sm:$0xff]
    %v1122 = vld [vmem:[#allocation6 + $0x1a08] sm:$0xff]
    %v1123 = vld [vmem:[#allocation6 + $0x1a10] sm:$0xff]
    %v1124 = vld [vmem:[#allocation6 + $0x1a18] sm:$0xff]
    %v1125 = vld [vmem:[#allocation6 + $0x1a20] sm:$0xff]
    %v1126 = vld [vmem:[#allocation6 + $0x1a28] sm:$0xff]
    %v1127 = vld [vmem:[#allocation6 + $0x1a30] sm:$0xff]
    %v1128 = vld [vmem:[#allocation6 + $0x1a38] sm:$0xff]
    %v1129 = vld [vmem:[#allocation6 + $0x1a40] sm:$0xff]
    %v1130 = vld [vmem:[#allocation6 + $0x1a48] sm:$0xff]
    %v1131 = vld [vmem:[#allocation6 + $0x1a50] sm:$0xff]
    %v1132 = vld [vmem:[#allocation6 + $0x1a58] sm:$0xff]
    %v1133 = vld [vmem:[#allocation6 + $0x1a60] sm:$0xff]
    %v1134 = vld [vmem:[#allocation6 + $0x1a68] sm:$0xff]
    %v1135 = vld [vmem:[#allocation6 + $0x1a70] sm:$0xff]
    %v1136 = vld [vmem:[#allocation6 + $0x1a78] sm:$0xff]
    %v1137 = vld [vmem:[#allocation6 + $0x1a80] sm:$0xff]
    %v1138 = vld [vmem:[#allocation6 + $0x1a88] sm:$0xff]
    %v1139 = vld [vmem:[#allocation6 + $0x1a90] sm:$0xff]
    %v1140 = vld [vmem:[#allocation6 + $0x1a98] sm:$0xff]
    %v1141 = vld [vmem:[#allocation6 + $0x1aa0] sm:$0xff]
    %v1142 = vld [vmem:[#allocation6 + $0x1aa8] sm:$0xff]
    %v1143 = vld [vmem:[#allocation6 + $0x1ab0] sm:$0xff]
    %v1144 = vld [vmem:[#allocation6 + $0x1ab8] sm:$0xff]
    %v1145 = vld [vmem:[#allocation6 + $0x1ac0] sm:$0xff]
    %v1146 = vld [vmem:[#allocation6 + $0x1ac8] sm:$0xff]
    %v1147 = vld [vmem:[#allocation6 + $0x1ad0] sm:$0xff]
    %v1148 = vld [vmem:[#allocation6 + $0x1ad8] sm:$0xff]
    %v1149 = vld [vmem:[#allocation6 + $0x1ae0] sm:$0xff]
    %v1150 = vld [vmem:[#allocation6 + $0x1ae8] sm:$0xff]
    %v1151 = vld [vmem:[#allocation6 + $0x1af0] sm:$0xff]
    %v1152 = vld [vmem:[#allocation6 + $0x1af8] sm:$0xff]
    %v1153 = vld [vmem:[#allocation6 + $0x1b00] sm:$0xff]
    %v1154 = vld [vmem:[#allocation6 + $0x1b08] sm:$0xff]
    %v1155 = vld [vmem:[#allocation6 + $0x1b10] sm:$0xff]
    %v1156 = vld [vmem:[#allocation6 + $0x1b18] sm:$0xff]
    %v1157 = vld [vmem:[#allocation6 + $0x1b20] sm:$0xff]
    %v1158 = vld [vmem:[#allocation6 + $0x1b28] sm:$0xff]
    %v1159 = vld [vmem:[#allocation6 + $0x1b30] sm:$0xff]
    %v1160 = vld [vmem:[#allocation6 + $0x1b38] sm:$0xff]
    %v1161 = vld [vmem:[#allocation6 + $0x1b40] sm:$0xff]
    %v1162 = vld [vmem:[#allocation6 + $0x1b48] sm:$0xff]
    %v1163 = vld [vmem:[#allocation6 + $0x1b50] sm:$0xff]
    %v1164 = vld [vmem:[#allocation6 + $0x1b58] sm:$0xff]
    %v1165 = vld [vmem:[#allocation6 + $0x1b60] sm:$0xff]
    %v1166 = vld [vmem:[#allocation6 + $0x1b68] sm:$0xff]
    %v1167 = vld [vmem:[#allocation6 + $0x1b70] sm:$0xff]
    %v1168 = vld [vmem:[#allocation6 + $0x1b78] sm:$0xff]
    %v1169 = vld [vmem:[#allocation6 + $0x1b80] sm:$0xff]
    %v1170 = vld [vmem:[#allocation6 + $0x1b88] sm:$0xff]
    %v1171 = vld [vmem:[#allocation6 + $0x1b90] sm:$0xff]
    %v1172 = vld [vmem:[#allocation6 + $0x1b98] sm:$0xff]
    %v1173 = vld [vmem:[#allocation6 + $0x1ba0] sm:$0xff]
    %v1174 = vld [vmem:[#allocation6 + $0x1ba8] sm:$0xff]
    %v1175 = vld [vmem:[#allocation6 + $0x1bb0] sm:$0xff]
    %v1176 = vld [vmem:[#allocation6 + $0x1bb8] sm:$0xff]
    %v1177 = vld [vmem:[#allocation6 + $0x1bc0] sm:$0xff]
    %v1178 = vld [vmem:[#allocation6 + $0x1bc8] sm:$0xff]
    %v1179 = vld [vmem:[#allocation6 + $0x1bd0] sm:$0xff]
    %v1180 = vld [vmem:[#allocation6 + $0x1bd8] sm:$0xff]
    %v1181 = vld [vmem:[#allocation6 + $0x1be0] sm:$0xff]
    %v1182 = vld [vmem:[#allocation6 + $0x1be8] sm:$0xff]
    %v1183 = vld [vmem:[#allocation6 + $0x1bf0] sm:$0xff]
    %v1184 = vld [vmem:[#allocation6 + $0x1bf8] sm:$0xff]
    %v1185 = vld [vmem:[#allocation6 + $0x1c00] sm:$0xff]
    %v1186 = vld [vmem:[#allocation6 + $0x1c08] sm:$0xff]
    %v1187 = vld [vmem:[#allocation6 + $0x1c10] sm:$0xff]
    %v1188 = vld [vmem:[#allocation6 + $0x1c18] sm:$0xff]
    %v1189 = vld [vmem:[#allocation6 + $0x1c20] sm:$0xff]
    %v1190 = vld [vmem:[#allocation6 + $0x1c28] sm:$0xff]
    %v1191 = vld [vmem:[#allocation6 + $0x1c30] sm:$0xff]
    %v1192 = vld [vmem:[#allocation6 + $0x1c38] sm:$0xff]
    %v1193 = vld [vmem:[#allocation6 + $0x1c40] sm:$0xff]
    %v1194 = vld [vmem:[#allocation6 + $0x1c48] sm:$0xff]
    %v1195 = vld [vmem:[#allocation6 + $0x1c50] sm:$0xff]
    %v1196 = vld [vmem:[#allocation6 + $0x1c58] sm:$0xff]
    %v1197 = vld [vmem:[#allocation6 + $0x1c60] sm:$0xff]
    %v1198 = vld [vmem:[#allocation6 + $0x1c68] sm:$0xff]
    %v1199 = vld [vmem:[#allocation6 + $0x1c70] sm:$0xff]
    %v1200 = vld [vmem:[#allocation6 + $0x1c78] sm:$0xff]
    %v1201 = vld [vmem:[#allocation6 + $0x1c80] sm:$0xff]
    %v1202 = vld [vmem:[#allocation6 + $0x1c88] sm:$0xff]
    %v1203 = vld [vmem:[#allocation6 + $0x1c90] sm:$0xff]
    %v1204 = vld [vmem:[#allocation6 + $0x1c98] sm:$0xff]
    %v1205 = vld [vmem:[#allocation6 + $0x1ca0] sm:$0xff]
    %v1206 = vld [vmem:[#allocation6 + $0x1ca8] sm:$0xff]
    %v1207 = vld [vmem:[#allocation6 + $0x1cb0] sm:$0xff]
    %v1208 = vld [vmem:[#allocation6 + $0x1cb8] sm:$0xff]
    %v1209 = vld [vmem:[#allocation6 + $0x1cc0] sm:$0xff]
    %v1210 = vld [vmem:[#allocation6 + $0x1cc8] sm:$0xff]
    %v1211 = vld [vmem:[#allocation6 + $0x1cd0] sm:$0xff]
    %v1212 = vld [vmem:[#allocation6 + $0x1cd8] sm:$0xff]
    %v1213 = vld [vmem:[#allocation6 + $0x1ce0] sm:$0xff]
    %v1214 = vld [vmem:[#allocation6 + $0x1ce8] sm:$0xff]
    %v1215 = vld [vmem:[#allocation6 + $0x1cf0] sm:$0xff]
    %v1216 = vld [vmem:[#allocation6 + $0x1cf8] sm:$0xff]
    %v1217 = vld [vmem:[#allocation6 + $0x1d00] sm:$0xff]
    %v1218 = vld [vmem:[#allocation6 + $0x1d08] sm:$0xff]
    %v1219 = vld [vmem:[#allocation6 + $0x1d10] sm:$0xff]
    %v1220 = vld [vmem:[#allocation6 + $0x1d18] sm:$0xff]
    %v1221 = vld [vmem:[#allocation6 + $0x1d20] sm:$0xff]
    %v1222 = vld [vmem:[#allocation6 + $0x1d28] sm:$0xff]
    %v1223 = vld [vmem:[#allocation6 + $0x1d30] sm:$0xff]
    %v1224 = vld [vmem:[#allocation6 + $0x1d38] sm:$0xff]
    %v1225 = vld [vmem:[#allocation6 + $0x1d40] sm:$0xff]
    %v1226 = vld [vmem:[#allocation6 + $0x1d48] sm:$0xff]
    %v1227 = vld [vmem:[#allocation6 + $0x1d50] sm:$0xff]
    %v1228 = vld [vmem:[#allocation6 + $0x1d58] sm:$0xff]
    %v1229 = vld [vmem:[#allocation6 + $0x1d60] sm:$0xff]
    %v1230 = vld [vmem:[#allocation6 + $0x1d68] sm:$0xff]
    %v1231 = vld [vmem:[#allocation6 + $0x1d70] sm:$0xff]
    %v1232 = vld [vmem:[#allocation6 + $0x1d78] sm:$0xff]
    %v1233 = vld [vmem:[#allocation6 + $0x1d80] sm:$0xff]
    %v1234 = vld [vmem:[#allocation6 + $0x1d88] sm:$0xff]
    %v1235 = vld [vmem:[#allocation6 + $0x1d90] sm:$0xff]
    %v1236 = vld [vmem:[#allocation6 + $0x1d98] sm:$0xff]
    %v1237 = vld [vmem:[#allocation6 + $0x1da0] sm:$0xff]
    %v1238 = vld [vmem:[#allocation6 + $0x1da8] sm:$0xff]
    %v1239 = vld [vmem:[#allocation6 + $0x1db0] sm:$0xff]
    %v1240 = vld [vmem:[#allocation6 + $0x1db8] sm:$0xff]
    %v1241 = vld [vmem:[#allocation6 + $0x1dc0] sm:$0xff]
    %v1242 = vld [vmem:[#allocation6 + $0x1dc8] sm:$0xff]
    %v1243 = vld [vmem:[#allocation6 + $0x1dd0] sm:$0xff]
    %v1244 = vld [vmem:[#allocation6 + $0x1dd8] sm:$0xff]
    %v1245 = vld [vmem:[#allocation6 + $0x1de0] sm:$0xff]
    %v1246 = vld [vmem:[#allocation6 + $0x1de8] sm:$0xff]
    %v1247 = vld [vmem:[#allocation6 + $0x1df0] sm:$0xff]
    %v1248 = vld [vmem:[#allocation6 + $0x1df8] sm:$0xff]
    %v1249 = vld [vmem:[#allocation6 + $0x1e00] sm:$0xff]
    %v1250 = vld [vmem:[#allocation6 + $0x1e08] sm:$0xff]
    %v1251 = vld [vmem:[#allocation6 + $0x1e10] sm:$0xff]
    %v1252 = vld [vmem:[#allocation6 + $0x1e18] sm:$0xff]
    %v1253 = vld [vmem:[#allocation6 + $0x1e20] sm:$0xff]
    %v1254 = vld [vmem:[#allocation6 + $0x1e28] sm:$0xff]
    %v1255 = vld [vmem:[#allocation6 + $0x1e30] sm:$0xff]
    %v1256 = vld [vmem:[#allocation6 + $0x1e38] sm:$0xff]
    %v1257 = vld [vmem:[#allocation6 + $0x1e40] sm:$0xff]
    %v1258 = vld [vmem:[#allocation6 + $0x1e48] sm:$0xff]
    %v1259 = vld [vmem:[#allocation6 + $0x1e50] sm:$0xff]
    %v1260 = vld [vmem:[#allocation6 + $0x1e58] sm:$0xff]
    %v1261 = vld [vmem:[#allocation6 + $0x1e60] sm:$0xff]
    %v1262 = vld [vmem:[#allocation6 + $0x1e68] sm:$0xff]
    %v1263 = vld [vmem:[#allocation6 + $0x1e70] sm:$0xff]
    %v1264 = vld [vmem:[#allocation6 + $0x1e78] sm:$0xff]
    %v1265 = vld [vmem:[#allocation6 + $0x1e80] sm:$0xff]
    %v1266 = vld [vmem:[#allocation6 + $0x1e88] sm:$0xff]
    %v1267 = vld [vmem:[#allocation6 + $0x1e90] sm:$0xff]
    %v1268 = vld [vmem:[#allocation6 + $0x1e98] sm:$0xff]
    %v1269 = vld [vmem:[#allocation6 + $0x1ea0] sm:$0xff]
    %v1270 = vld [vmem:[#allocation6 + $0x1ea8] sm:$0xff]
    %v1271 = vld [vmem:[#allocation6 + $0x1eb0] sm:$0xff]
    %v1272 = vld [vmem:[#allocation6 + $0x1eb8] sm:$0xff]
    %v1273 = vld [vmem:[#allocation6 + $0x1ec0] sm:$0xff]
    %v1274 = vld [vmem:[#allocation6 + $0x1ec8] sm:$0xff]
    %v1275 = vld [vmem:[#allocation6 + $0x1ed0] sm:$0xff]
    %v1276 = vld [vmem:[#allocation6 + $0x1ed8] sm:$0xff]
    %v1277 = vld [vmem:[#allocation6 + $0x1ee0] sm:$0xff]
    %v1278 = vld [vmem:[#allocation6 + $0x1ee8] sm:$0xff]
    %v1279 = vld [vmem:[#allocation6 + $0x1ef0] sm:$0xff]
    %v1280 = vld [vmem:[#allocation6 + $0x1ef8] sm:$0xff]
    %v1281 = vld [vmem:[#allocation6 + $0x1f00] sm:$0xff]
    %v1282 = vld [vmem:[#allocation6 + $0x1f08] sm:$0xff]
    %v1283 = vld [vmem:[#allocation6 + $0x1f10] sm:$0xff]
    %v1284 = vld [vmem:[#allocation6 + $0x1f18] sm:$0xff]
    %v1285 = vld [vmem:[#allocation6 + $0x1f20] sm:$0xff]
    %v1286 = vld [vmem:[#allocation6 + $0x1f28] sm:$0xff]
    %v1287 = vld [vmem:[#allocation6 + $0x1f30] sm:$0xff]
    %v1288 = vld [vmem:[#allocation6 + $0x1f38] sm:$0xff]
    %v1289 = vld [vmem:[#allocation6 + $0x1f40] sm:$0xff]
    %v1290 = vld [vmem:[#allocation6 + $0x1f48] sm:$0xff]
    %v1291 = vld [vmem:[#allocation6 + $0x1f50] sm:$0xff]
    %v1292 = vld [vmem:[#allocation6 + $0x1f58] sm:$0xff]
    %v1293 = vld [vmem:[#allocation6 + $0x1f60] sm:$0xff]
    %v1294 = vld [vmem:[#allocation6 + $0x1f68] sm:$0xff]
    %v1295 = vld [vmem:[#allocation6 + $0x1f70] sm:$0xff]
    %v1296 = vld [vmem:[#allocation6 + $0x1f78] sm:$0xff]
    %v1297 = vld [vmem:[#allocation6 + $0x1f80] sm:$0xff]
    %v1298 = vld [vmem:[#allocation6 + $0x1f88] sm:$0xff]
    %v1299 = vld [vmem:[#allocation6 + $0x1f90] sm:$0xff]
    %v1300 = vld [vmem:[#allocation6 + $0x1f98] sm:$0xff]
    %v1301 = vld [vmem:[#allocation6 + $0x1fa0] sm:$0xff]
    %v1302 = vld [vmem:[#allocation6 + $0x1fa8] sm:$0xff]
    %v1303 = vld [vmem:[#allocation6 + $0x1fb0] sm:$0xff]
    %v1304 = vld [vmem:[#allocation6 + $0x1fb8] sm:$0xff]
    %v1305 = vld [vmem:[#allocation6 + $0x1fc0] sm:$0xff]
    %v1306 = vld [vmem:[#allocation6 + $0x1fc8] sm:$0xff]
    %v1307 = vld [vmem:[#allocation6 + $0x1fd0] sm:$0xff]
    %v1308 = vld [vmem:[#allocation6 + $0x1fd8] sm:$0xff]
    %v1309 = vld [vmem:[#allocation6 + $0x1fe0] sm:$0xff]
    %v1310 = vld [vmem:[#allocation6 + $0x1fe8] sm:$0xff]
    %v1311 = vld [vmem:[#allocation6 + $0x1ff0] sm:$0xff]
    %v1312 = vld [vmem:[#allocation6 + $0x1ff8] sm:$0xff]
    %v1313 = vld [vmem:[#allocation8] sm:$0xff]
    %v1315 = vperm.slane %v1313, 0
    %v1316 = vperm.slane %v1313, 1
    %v1317 = vperm.slane %v1313, 2
    %v1318 = vperm.slane %v1313, 3
    %v1319 = vperm.slane %v1313, 4
    %v1320 = vperm.slane %v1313, 5
    %v1321 = vperm.slane %v1313, 6
    %v1322 = vperm.slane %v1313, 7
    %1333 = vst [vmem:[#allocation1] ss:$4 sm:$0xff] %v287
    %s1334 = scalar_lea.vmem [#allocation1], 32
    %1335 = vst [vmem:[%s1334] ss:$4 sm:$0xff] %v288
    %v1336 = vld.sshfl [vmem:[#allocation1] sm:$0xff pattern:$0x73625140]
    %v1337 = vld.sshfl [vmem:[#allocation1 + $0x8] sm:$0xff pattern:$0x73625140]
    %v1338 = vld.sshfl [vmem:[#allocation1 + $0x10] sm:$0xff pattern:$0x73625140]
    %v1339 = vld.sshfl [vmem:[#allocation1 + $0x18] sm:$0xff pattern:$0x73625140]
    %v1340 = vld.sshfl [vmem:[#allocation1 + $0x20] sm:$0xff pattern:$0x73625140]
    %v1341 = vld.sshfl [vmem:[#allocation1 + $0x28] sm:$0xff pattern:$0x73625140]
    %v1342 = vld.sshfl [vmem:[#allocation1 + $0x30] sm:$0xff pattern:$0x73625140]
    %v1343 = vld.sshfl [vmem:[#allocation1 + $0x38] sm:$0xff pattern:$0x73625140]
    %1352 = vmatpush.msra.mxu0 %v409
    %1353 = vmatpush.msra.mxu0 %v401
    %1354 = vmatpush.msra.mxu0 %v393
    %1355 = vmatpush.msra.mxu0 %v385
    %1356 = vmatpush.msra.mxu0 %v377
    %1357 = vmatpush.msra.mxu0 %v369
    %1358 = vmatpush.msra.mxu0 %v361
    %1359 = vmatpush.msra.mxu0 %v353
    %1360 = vmatpush.msra.mxu0 %v345
    %1361 = vmatpush.msra.mxu0 %v337
    %1362 = vmatpush.msra.mxu0 %v329
    %1363 = vmatpush.msra.mxu0 %v321
    %1364 = vmatpush.msra.mxu0 %v313
    %1365 = vmatpush.msra.mxu0 %v305
    %1366 = vmatpush.msra.mxu0 %v297
    %1367 = vmatpush.msra.mxu0 %v289
    %1368 = vmatmul.f32.gmra.mxu0 %v1336
    %v1369 = vpop.f32.mrf.mxu0
    %v1370 = vadd.f32 %v1315, %v1369
    %1371 = vdwg.mxu0
    %1372 = vmatpush.msra.mxu0 %v537
    %1373 = vmatpush.msra.mxu0 %v529
    %1374 = vmatpush.msra.mxu0 %v521
    %1375 = vmatpush.msra.mxu0 %v513
    %1376 = vmatpush.msra.mxu0 %v505
    %1377 = vmatpush.msra.mxu0 %v497
    %1378 = vmatpush.msra.mxu0 %v489
    %1379 = vmatpush.msra.mxu0 %v481
    %1380 = vmatpush.msra.mxu0 %v473
    %1381 = vmatpush.msra.mxu0 %v465
    %1382 = vmatpush.msra.mxu0 %v457
    %1383 = vmatpush.msra.mxu0 %v449
    %1384 = vmatpush.msra.mxu0 %v441
    %1385 = vmatpush.msra.mxu0 %v433
    %1386 = vmatpush.msra.mxu0 %v425
    %1387 = vmatpush.msra.mxu0 %v417
    %1388 = vmatmul.f32.gmra.mxu0 %v1337
    %v1389 = vpop.f32.mrf.mxu0
    %v1390 = vadd.f32 %v1370, %v1389
    %1391 = vdwg.mxu0
    %1392 = vmatpush.msra.mxu0 %v665
    %1393 = vmatpush.msra.mxu0 %v657
    %1394 = vmatpush.msra.mxu0 %v649
    %1395 = vmatpush.msra.mxu0 %v641
    %1396 = vmatpush.msra.mxu0 %v633
    %1397 = vmatpush.msra.mxu0 %v625
    %1398 = vmatpush.msra.mxu0 %v617
    %1399 = vmatpush.msra.mxu0 %v609
    %1400 = vmatpush.msra.mxu0 %v601
    %1401 = vmatpush.msra.mxu0 %v593
    %1402 = vmatpush.msra.mxu0 %v585
    %1403 = vmatpush.msra.mxu0 %v577
    %1404 = vmatpush.msra.mxu0 %v569
    %1405 = vmatpush.msra.mxu0 %v561
    %1406 = vmatpush.msra.mxu0 %v553
    %1407 = vmatpush.msra.mxu0 %v545
    %1408 = vmatmul.f32.gmra.mxu0 %v1338
    %v1409 = vpop.f32.mrf.mxu0
    %v1410 = vadd.f32 %v1390, %v1409
    %1411 = vdwg.mxu0
    %1412 = vmatpush.msra.mxu0 %v793
    %1413 = vmatpush.msra.mxu0 %v785
    %1414 = vmatpush.msra.mxu0 %v777
    %1415 = vmatpush.msra.mxu0 %v769
    %1416 = vmatpush.msra.mxu0 %v761
    %1417 = vmatpush.msra.mxu0 %v753
    %1418 = vmatpush.msra.mxu0 %v745
    %1419 = vmatpush.msra.mxu0 %v737
    %1420 = vmatpush.msra.mxu0 %v729
    %1421 = vmatpush.msra.mxu0 %v721
    %1422 = vmatpush.msra.mxu0 %v713
    %1423 = vmatpush.msra.mxu0 %v705
    %1424 = vmatpush.msra.mxu0 %v697
    %1425 = vmatpush.msra.mxu0 %v689
    %1426 = vmatpush.msra.mxu0 %v681
    %1427 = vmatpush.msra.mxu0 %v673
    %1428 = vmatmul.f32.gmra.mxu0 %v1339
    %v1429 = vpop.f32.mrf.mxu0
    %v1430 = vadd.f32 %v1410, %v1429
    %1431 = vdwg.mxu0
    %1432 = vmatpush.msra.mxu0 %v921
    %1433 = vmatpush.msra.mxu0 %v913
    %1434 = vmatpush.msra.mxu0 %v905
    %1435 = vmatpush.msra.mxu0 %v897
    %1436 = vmatpush.msra.mxu0 %v889
    %1437 = vmatpush.msra.mxu0 %v881
    %1438 = vmatpush.msra.mxu0 %v873
    %1439 = vmatpush.msra.mxu0 %v865
    %1440 = vmatpush.msra.mxu0 %v857
    %1441 = vmatpush.msra.mxu0 %v849
    %1442 = vmatpush.msra.mxu0 %v841
    %1443 = vmatpush.msra.mxu0 %v833
    %1444 = vmatpush.msra.mxu0 %v825
    %1445 = vmatpush.msra.mxu0 %v817
    %1446 = vmatpush.msra.mxu0 %v809
    %1447 = vmatpush.msra.mxu0 %v801
    %1448 = vmatmul.f32.gmra.mxu0 %v1340
    %v1449 = vpop.f32.mrf.mxu0
    %v1450 = vadd.f32 %v1430, %v1449
    %1451 = vdwg.mxu0
    %1452 = vmatpush.msra.mxu0 %v1049
    %1453 = vmatpush.msra.mxu0 %v1041
    %1454 = vmatpush.msra.mxu0 %v1033
    %1455 = vmatpush.msra.mxu0 %v1025
    %1456 = vmatpush.msra.mxu0 %v1017
    %1457 = vmatpush.msra.mxu0 %v1009
    %1458 = vmatpush.msra.mxu0 %v1001
    %1459 = vmatpush.msra.mxu0 %v993
    %1460 = vmatpush.msra.mxu0 %v985
    %1461 = vmatpush.msra.mxu0 %v977
    %1462 = vmatpush.msra.mxu0 %v969
    %1463 = vmatpush.msra.mxu0 %v961
    %1464 = vmatpush.msra.mxu0 %v953
    %1465 = vmatpush.msra.mxu0 %v945
    %1466 = vmatpush.msra.mxu0 %v937
    %1467 = vmatpush.msra.mxu0 %v929
    %1468 = vmatmul.f32.gmra.mxu0 %v1341
    %v1469 = vpop.f32.mrf.mxu0
    %v1470 = vadd.f32 %v1450, %v1469
    %1471 = vdwg.mxu0
    %1472 = vmatpush.msra.mxu0 %v1177
    %1473 = vmatpush.msra.mxu0 %v1169
    %1474 = vmatpush.msra.mxu0 %v1161
    %1475 = vmatpush.msra.mxu0 %v1153
    %1476 = vmatpush.msra.mxu0 %v1145
    %1477 = vmatpush.msra.mxu0 %v1137
    %1478 = vmatpush.msra.mxu0 %v1129
    %1479 = vmatpush.msra.mxu0 %v1121
    %1480 = vmatpush.msra.mxu0 %v1113
    %1481 = vmatpush.msra.mxu0 %v1105
    %1482 = vmatpush.msra.mxu0 %v1097
    %1483 = vmatpush.msra.mxu0 %v1089
    %1484 = vmatpush.msra.mxu0 %v1081
    %1485 = vmatpush.msra.mxu0 %v1073
    %1486 = vmatpush.msra.mxu0 %v1065
    %1487 = vmatpush.msra.mxu0 %v1057
    %1488 = vmatmul.f32.gmra.mxu0 %v1342
    %v1489 = vpop.f32.mrf.mxu0
    %v1490 = vadd.f32 %v1470, %v1489
    %1491 = vdwg.mxu0
    %1492 = vmatpush.msra.mxu0 %v1305
    %1493 = vmatpush.msra.mxu0 %v1297
    %1494 = vmatpush.msra.mxu0 %v1289
    %1495 = vmatpush.msra.mxu0 %v1281
    %1496 = vmatpush.msra.mxu0 %v1273
    %1497 = vmatpush.msra.mxu0 %v1265
    %1498 = vmatpush.msra.mxu0 %v1257
    %1499 = vmatpush.msra.mxu0 %v1249
    %1500 = vmatpush.msra.mxu0 %v1241
    %1501 = vmatpush.msra.mxu0 %v1233
    %1502 = vmatpush.msra.mxu0 %v1225
    %1503 = vmatpush.msra.mxu0 %v1217
    %1504 = vmatpush.msra.mxu0 %v1209
    %1505 = vmatpush.msra.mxu0 %v1201
    %1506 = vmatpush.msra.mxu0 %v1193
    %1507 = vmatpush.msra.mxu0 %v1185
    %1508 = vmatmul.f32.gmra.mxu0 %v1343
    %v1509 = vpop.f32.mrf.mxu0
    %v1510 = vadd.f32 %v1490, %v1509
    %1511 = vdwg.mxu0
    %1512 = vmatpush.msra.mxu0 %v410
    %1513 = vmatpush.msra.mxu0 %v402
    %1514 = vmatpush.msra.mxu0 %v394
    %1515 = vmatpush.msra.mxu0 %v386
    %1516 = vmatpush.msra.mxu0 %v378
    %1517 = vmatpush.msra.mxu0 %v370
    %1518 = vmatpush.msra.mxu0 %v362
    %1519 = vmatpush.msra.mxu0 %v354
    %1520 = vmatpush.msra.mxu0 %v346
    %1521 = vmatpush.msra.mxu0 %v338
    %1522 = vmatpush.msra.mxu0 %v330
    %1523 = vmatpush.msra.mxu0 %v322
    %1524 = vmatpush.msra.mxu0 %v314
    %1525 = vmatpush.msra.mxu0 %v306
    %1526 = vmatpush.msra.mxu0 %v298
    %1527 = vmatpush.msra.mxu0 %v290
    %1528 = vmatmul.f32.gmra.mxu0 %v1336
    %v1529 = vpop.f32.mrf.mxu0
    %v1530 = vadd.f32 %v1316, %v1529
    %1531 = vdwg.mxu0
    %1532 = vmatpush.msra.mxu0 %v538
    %1533 = vmatpush.msra.mxu0 %v530
    %1534 = vmatpush.msra.mxu0 %v522
    %1535 = vmatpush.msra.mxu0 %v514
    %1536 = vmatpush.msra.mxu0 %v506
    %1537 = vmatpush.msra.mxu0 %v498
    %1538 = vmatpush.msra.mxu0 %v490
    %1539 = vmatpush.msra.mxu0 %v482
    %1540 = vmatpush.msra.mxu0 %v474
    %1541 = vmatpush.msra.mxu0 %v466
    %1542 = vmatpush.msra.mxu0 %v458
    %1543 = vmatpush.msra.mxu0 %v450
    %1544 = vmatpush.msra.mxu0 %v442
    %1545 = vmatpush.msra.mxu0 %v434
    %1546 = vmatpush.msra.mxu0 %v426
    %1547 = vmatpush.msra.mxu0 %v418
    %1548 = vmatmul.f32.gmra.mxu0 %v1337
    %v1549 = vpop.f32.mrf.mxu0
    %v1550 = vadd.f32 %v1530, %v1549
    %1551 = vdwg.mxu0
    %1552 = vmatpush.msra.mxu0 %v666
    %1553 = vmatpush.msra.mxu0 %v658
    %1554 = vmatpush.msra.mxu0 %v650
    %1555 = vmatpush.msra.mxu0 %v642
    %1556 = vmatpush.msra.mxu0 %v634
    %1557 = vmatpush.msra.mxu0 %v626
    %1558 = vmatpush.msra.mxu0 %v618
    %1559 = vmatpush.msra.mxu0 %v610
    %1560 = vmatpush.msra.mxu0 %v602
    %1561 = vmatpush.msra.mxu0 %v594
    %1562 = vmatpush.msra.mxu0 %v586
    %1563 = vmatpush.msra.mxu0 %v578
    %1564 = vmatpush.msra.mxu0 %v570
    %1565 = vmatpush.msra.mxu0 %v562
    %1566 = vmatpush.msra.mxu0 %v554
    %1567 = vmatpush.msra.mxu0 %v546
    %1568 = vmatmul.f32.gmra.mxu0 %v1338
    %v1569 = vpop.f32.mrf.mxu0
    %v1570 = vadd.f32 %v1550, %v1569
    %1571 = vdwg.mxu0
    %1572 = vmatpush.msra.mxu0 %v794
    %1573 = vmatpush.msra.mxu0 %v786
    %1574 = vmatpush.msra.mxu0 %v778
    %1575 = vmatpush.msra.mxu0 %v770
    %1576 = vmatpush.msra.mxu0 %v762
    %1577 = vmatpush.msra.mxu0 %v754
    %1578 = vmatpush.msra.mxu0 %v746
    %1579 = vmatpush.msra.mxu0 %v738
    %1580 = vmatpush.msra.mxu0 %v730
    %1581 = vmatpush.msra.mxu0 %v722
    %1582 = vmatpush.msra.mxu0 %v714
    %1583 = vmatpush.msra.mxu0 %v706
    %1584 = vmatpush.msra.mxu0 %v698
    %1585 = vmatpush.msra.mxu0 %v690
    %1586 = vmatpush.msra.mxu0 %v682
    %1587 = vmatpush.msra.mxu0 %v674
    %1588 = vmatmul.f32.gmra.mxu0 %v1339
    %v1589 = vpop.f32.mrf.mxu0
    %v1590 = vadd.f32 %v1570, %v1589
    %1591 = vdwg.mxu0
    %1592 = vmatpush.msra.mxu0 %v922
    %1593 = vmatpush.msra.mxu0 %v914
    %1594 = vmatpush.msra.mxu0 %v906
    %1595 = vmatpush.msra.mxu0 %v898
    %1596 = vmatpush.msra.mxu0 %v890
    %1597 = vmatpush.msra.mxu0 %v882
    %1598 = vmatpush.msra.mxu0 %v874
    %1599 = vmatpush.msra.mxu0 %v866
    %1600 = vmatpush.msra.mxu0 %v858
    %1601 = vmatpush.msra.mxu0 %v850
    %1602 = vmatpush.msra.mxu0 %v842
    %1603 = vmatpush.msra.mxu0 %v834
    %1604 = vmatpush.msra.mxu0 %v826
    %1605 = vmatpush.msra.mxu0 %v818
    %1606 = vmatpush.msra.mxu0 %v810
    %1607 = vmatpush.msra.mxu0 %v802
    %1608 = vmatmul.f32.gmra.mxu0 %v1340
    %v1609 = vpop.f32.mrf.mxu0
    %v1610 = vadd.f32 %v1590, %v1609
    %1611 = vdwg.mxu0
    %1612 = vmatpush.msra.mxu0 %v1050
    %1613 = vmatpush.msra.mxu0 %v1042
    %1614 = vmatpush.msra.mxu0 %v1034
    %1615 = vmatpush.msra.mxu0 %v1026
    %1616 = vmatpush.msra.mxu0 %v1018
    %1617 = vmatpush.msra.mxu0 %v1010
    %1618 = vmatpush.msra.mxu0 %v1002
    %1619 = vmatpush.msra.mxu0 %v994
    %1620 = vmatpush.msra.mxu0 %v986
    %1621 = vmatpush.msra.mxu0 %v978
    %1622 = vmatpush.msra.mxu0 %v970
    %1623 = vmatpush.msra.mxu0 %v962
    %1624 = vmatpush.msra.mxu0 %v954
    %1625 = vmatpush.msra.mxu0 %v946
    %1626 = vmatpush.msra.mxu0 %v938
    %1627 = vmatpush.msra.mxu0 %v930
    %1628 = vmatmul.f32.gmra.mxu0 %v1341
    %v1629 = vpop.f32.mrf.mxu0
    %v1630 = vadd.f32 %v1610, %v1629
    %1631 = vdwg.mxu0
    %1632 = vmatpush.msra.mxu0 %v1178
    %1633 = vmatpush.msra.mxu0 %v1170
    %1634 = vmatpush.msra.mxu0 %v1162
    %1635 = vmatpush.msra.mxu0 %v1154
    %1636 = vmatpush.msra.mxu0 %v1146
    %1637 = vmatpush.msra.mxu0 %v1138
    %1638 = vmatpush.msra.mxu0 %v1130
    %1639 = vmatpush.msra.mxu0 %v1122
    %1640 = vmatpush.msra.mxu0 %v1114
    %1641 = vmatpush.msra.mxu0 %v1106
    %1642 = vmatpush.msra.mxu0 %v1098
    %1643 = vmatpush.msra.mxu0 %v1090
    %1644 = vmatpush.msra.mxu0 %v1082
    %1645 = vmatpush.msra.mxu0 %v1074
    %1646 = vmatpush.msra.mxu0 %v1066
    %1647 = vmatpush.msra.mxu0 %v1058
    %1648 = vmatmul.f32.gmra.mxu0 %v1342
    %v1649 = vpop.f32.mrf.mxu0
    %v1650 = vadd.f32 %v1630, %v1649
    %1651 = vdwg.mxu0
    %1652 = vmatpush.msra.mxu0 %v1306
    %1653 = vmatpush.msra.mxu0 %v1298
    %1654 = vmatpush.msra.mxu0 %v1290
    %1655 = vmatpush.msra.mxu0 %v1282
    %1656 = vmatpush.msra.mxu0 %v1274
    %1657 = vmatpush.msra.mxu0 %v1266
    %1658 = vmatpush.msra.mxu0 %v1258
    %1659 = vmatpush.msra.mxu0 %v1250
    %1660 = vmatpush.msra.mxu0 %v1242
    %1661 = vmatpush.msra.mxu0 %v1234
    %1662 = vmatpush.msra.mxu0 %v1226
    %1663 = vmatpush.msra.mxu0 %v1218
    %1664 = vmatpush.msra.mxu0 %v1210
    %1665 = vmatpush.msra.mxu0 %v1202
    %1666 = vmatpush.msra.mxu0 %v1194
    %1667 = vmatpush.msra.mxu0 %v1186
    %1668 = vmatmul.f32.gmra.mxu0 %v1343
    %v1669 = vpop.f32.mrf.mxu0
    %v1670 = vadd.f32 %v1650, %v1669
    %1671 = vdwg.mxu0
    %1672 = vmatpush.msra.mxu0 %v411
    %1673 = vmatpush.msra.mxu0 %v403
    %1674 = vmatpush.msra.mxu0 %v395
    %1675 = vmatpush.msra.mxu0 %v387
    %1676 = vmatpush.msra.mxu0 %v379
    %1677 = vmatpush.msra.mxu0 %v371
    %1678 = vmatpush.msra.mxu0 %v363
    %1679 = vmatpush.msra.mxu0 %v355
    %1680 = vmatpush.msra.mxu0 %v347
    %1681 = vmatpush.msra.mxu0 %v339
    %1682 = vmatpush.msra.mxu0 %v331
    %1683 = vmatpush.msra.mxu0 %v323
    %1684 = vmatpush.msra.mxu0 %v315
    %1685 = vmatpush.msra.mxu0 %v307
    %1686 = vmatpush.msra.mxu0 %v299
    %1687 = vmatpush.msra.mxu0 %v291
    %1688 = vmatmul.f32.gmra.mxu0 %v1336
    %v1689 = vpop.f32.mrf.mxu0
    %v1690 = vadd.f32 %v1317, %v1689
    %1691 = vdwg.mxu0
    %1692 = vmatpush.msra.mxu0 %v539
    %1693 = vmatpush.msra.mxu0 %v531
    %1694 = vmatpush.msra.mxu0 %v523
    %1695 = vmatpush.msra.mxu0 %v515
    %1696 = vmatpush.msra.mxu0 %v507
    %1697 = vmatpush.msra.mxu0 %v499
    %1698 = vmatpush.msra.mxu0 %v491
    %1699 = vmatpush.msra.mxu0 %v483
    %1700 = vmatpush.msra.mxu0 %v475
    %1701 = vmatpush.msra.mxu0 %v467
    %1702 = vmatpush.msra.mxu0 %v459
    %1703 = vmatpush.msra.mxu0 %v451
    %1704 = vmatpush.msra.mxu0 %v443
    %1705 = vmatpush.msra.mxu0 %v435
    %1706 = vmatpush.msra.mxu0 %v427
    %1707 = vmatpush.msra.mxu0 %v419
    %1708 = vmatmul.f32.gmra.mxu0 %v1337
    %v1709 = vpop.f32.mrf.mxu0
    %v1710 = vadd.f32 %v1690, %v1709
    %1711 = vdwg.mxu0
    %1712 = vmatpush.msra.mxu0 %v667
    %1713 = vmatpush.msra.mxu0 %v659
    %1714 = vmatpush.msra.mxu0 %v651
    %1715 = vmatpush.msra.mxu0 %v643
    %1716 = vmatpush.msra.mxu0 %v635
    %1717 = vmatpush.msra.mxu0 %v627
    %1718 = vmatpush.msra.mxu0 %v619
    %1719 = vmatpush.msra.mxu0 %v611
    %1720 = vmatpush.msra.mxu0 %v603
    %1721 = vmatpush.msra.mxu0 %v595
    %1722 = vmatpush.msra.mxu0 %v587
    %1723 = vmatpush.msra.mxu0 %v579
    %1724 = vmatpush.msra.mxu0 %v571
    %1725 = vmatpush.msra.mxu0 %v563
    %1726 = vmatpush.msra.mxu0 %v555
    %1727 = vmatpush.msra.mxu0 %v547
    %1728 = vmatmul.f32.gmra.mxu0 %v1338
    %v1729 = vpop.f32.mrf.mxu0
    %v1730 = vadd.f32 %v1710, %v1729
    %1731 = vdwg.mxu0
    %1732 = vmatpush.msra.mxu0 %v795
    %1733 = vmatpush.msra.mxu0 %v787
    %1734 = vmatpush.msra.mxu0 %v779
    %1735 = vmatpush.msra.mxu0 %v771
    %1736 = vmatpush.msra.mxu0 %v763
    %1737 = vmatpush.msra.mxu0 %v755
    %1738 = vmatpush.msra.mxu0 %v747
    %1739 = vmatpush.msra.mxu0 %v739
    %1740 = vmatpush.msra.mxu0 %v731
    %1741 = vmatpush.msra.mxu0 %v723
    %1742 = vmatpush.msra.mxu0 %v715
    %1743 = vmatpush.msra.mxu0 %v707
    %1744 = vmatpush.msra.mxu0 %v699
    %1745 = vmatpush.msra.mxu0 %v691
    %1746 = vmatpush.msra.mxu0 %v683
    %1747 = vmatpush.msra.mxu0 %v675
    %1748 = vmatmul.f32.gmra.mxu0 %v1339
    %v1749 = vpop.f32.mrf.mxu0
    %v1750 = vadd.f32 %v1730, %v1749
    %1751 = vdwg.mxu0
    %1752 = vmatpush.msra.mxu0 %v923
    %1753 = vmatpush.msra.mxu0 %v915
    %1754 = vmatpush.msra.mxu0 %v907
    %1755 = vmatpush.msra.mxu0 %v899
    %1756 = vmatpush.msra.mxu0 %v891
    %1757 = vmatpush.msra.mxu0 %v883
    %1758 = vmatpush.msra.mxu0 %v875
    %1759 = vmatpush.msra.mxu0 %v867
    %1760 = vmatpush.msra.mxu0 %v859
    %1761 = vmatpush.msra.mxu0 %v851
    %1762 = vmatpush.msra.mxu0 %v843
    %1763 = vmatpush.msra.mxu0 %v835
    %1764 = vmatpush.msra.mxu0 %v827
    %1765 = vmatpush.msra.mxu0 %v819
    %1766 = vmatpush.msra.mxu0 %v811
    %1767 = vmatpush.msra.mxu0 %v803
    %1768 = vmatmul.f32.gmra.mxu0 %v1340
    %v1769 = vpop.f32.mrf.mxu0
    %v1770 = vadd.f32 %v1750, %v1769
    %1771 = vdwg.mxu0
    %1772 = vmatpush.msra.mxu0 %v1051
    %1773 = vmatpush.msra.mxu0 %v1043
    %1774 = vmatpush.msra.mxu0 %v1035
    %1775 = vmatpush.msra.mxu0 %v1027
    %1776 = vmatpush.msra.mxu0 %v1019
    %1777 = vmatpush.msra.mxu0 %v1011
    %1778 = vmatpush.msra.mxu0 %v1003
    %1779 = vmatpush.msra.mxu0 %v995
    %1780 = vmatpush.msra.mxu0 %v987
    %1781 = vmatpush.msra.mxu0 %v979
    %1782 = vmatpush.msra.mxu0 %v971
    %1783 = vmatpush.msra.mxu0 %v963
    %1784 = vmatpush.msra.mxu0 %v955
    %1785 = vmatpush.msra.mxu0 %v947
    %1786 = vmatpush.msra.mxu0 %v939
    %1787 = vmatpush.msra.mxu0 %v931
    %1788 = vmatmul.f32.gmra.mxu0 %v1341
    %v1789 = vpop.f32.mrf.mxu0
    %v1790 = vadd.f32 %v1770, %v1789
    %1791 = vdwg.mxu0
    %1792 = vmatpush.msra.mxu0 %v1179
    %1793 = vmatpush.msra.mxu0 %v1171
    %1794 = vmatpush.msra.mxu0 %v1163
    %1795 = vmatpush.msra.mxu0 %v1155
    %1796 = vmatpush.msra.mxu0 %v1147
    %1797 = vmatpush.msra.mxu0 %v1139
    %1798 = vmatpush.msra.mxu0 %v1131
    %1799 = vmatpush.msra.mxu0 %v1123
    %1800 = vmatpush.msra.mxu0 %v1115
    %1801 = vmatpush.msra.mxu0 %v1107
    %1802 = vmatpush.msra.mxu0 %v1099
    %1803 = vmatpush.msra.mxu0 %v1091
    %1804 = vmatpush.msra.mxu0 %v1083
    %1805 = vmatpush.msra.mxu0 %v1075
    %1806 = vmatpush.msra.mxu0 %v1067
    %1807 = vmatpush.msra.mxu0 %v1059
    %1808 = vmatmul.f32.gmra.mxu0 %v1342
    %v1809 = vpop.f32.mrf.mxu0
    %v1810 = vadd.f32 %v1790, %v1809
    %1811 = vdwg.mxu0
    %1812 = vmatpush.msra.mxu0 %v1307
    %1813 = vmatpush.msra.mxu0 %v1299
    %1814 = vmatpush.msra.mxu0 %v1291
    %1815 = vmatpush.msra.mxu0 %v1283
    %1816 = vmatpush.msra.mxu0 %v1275
    %1817 = vmatpush.msra.mxu0 %v1267
    %1818 = vmatpush.msra.mxu0 %v1259
    %1819 = vmatpush.msra.mxu0 %v1251
    %1820 = vmatpush.msra.mxu0 %v1243
    %1821 = vmatpush.msra.mxu0 %v1235
    %1822 = vmatpush.msra.mxu0 %v1227
    %1823 = vmatpush.msra.mxu0 %v1219
    %1824 = vmatpush.msra.mxu0 %v1211
    %1825 = vmatpush.msra.mxu0 %v1203
    %1826 = vmatpush.msra.mxu0 %v1195
    %1827 = vmatpush.msra.mxu0 %v1187
    %1828 = vmatmul.f32.gmra.mxu0 %v1343
    %v1829 = vpop.f32.mrf.mxu0
    %v1830 = vadd.f32 %v1810, %v1829
    %1831 = vdwg.mxu0
    %1832 = vmatpush.msra.mxu0 %v412
    %1833 = vmatpush.msra.mxu0 %v404
    %1834 = vmatpush.msra.mxu0 %v396
    %1835 = vmatpush.msra.mxu0 %v388
    %1836 = vmatpush.msra.mxu0 %v380
    %1837 = vmatpush.msra.mxu0 %v372
    %1838 = vmatpush.msra.mxu0 %v364
    %1839 = vmatpush.msra.mxu0 %v356
    %1840 = vmatpush.msra.mxu0 %v348
    %1841 = vmatpush.msra.mxu0 %v340
    %1842 = vmatpush.msra.mxu0 %v332
    %1843 = vmatpush.msra.mxu0 %v324
    %1844 = vmatpush.msra.mxu0 %v316
    %1845 = vmatpush.msra.mxu0 %v308
    %1846 = vmatpush.msra.mxu0 %v300
    %1847 = vmatpush.msra.mxu0 %v292
    %1848 = vmatmul.f32.gmra.mxu0 %v1336
    %v1849 = vpop.f32.mrf.mxu0
    %v1850 = vadd.f32 %v1318, %v1849
    %1851 = vdwg.mxu0
    %1852 = vmatpush.msra.mxu0 %v540
    %1853 = vmatpush.msra.mxu0 %v532
    %1854 = vmatpush.msra.mxu0 %v524
    %1855 = vmatpush.msra.mxu0 %v516
    %1856 = vmatpush.msra.mxu0 %v508
    %1857 = vmatpush.msra.mxu0 %v500
    %1858 = vmatpush.msra.mxu0 %v492
    %1859 = vmatpush.msra.mxu0 %v484
    %1860 = vmatpush.msra.mxu0 %v476
    %1861 = vmatpush.msra.mxu0 %v468
    %1862 = vmatpush.msra.mxu0 %v460
    %1863 = vmatpush.msra.mxu0 %v452
    %1864 = vmatpush.msra.mxu0 %v444
    %1865 = vmatpush.msra.mxu0 %v436
    %1866 = vmatpush.msra.mxu0 %v428
    %1867 = vmatpush.msra.mxu0 %v420
    %1868 = vmatmul.f32.gmra.mxu0 %v1337
    %v1869 = vpop.f32.mrf.mxu0
    %v1870 = vadd.f32 %v1850, %v1869
    %1871 = vdwg.mxu0
    %1872 = vmatpush.msra.mxu0 %v668
    %1873 = vmatpush.msra.mxu0 %v660
    %1874 = vmatpush.msra.mxu0 %v652
    %1875 = vmatpush.msra.mxu0 %v644
    %1876 = vmatpush.msra.mxu0 %v636
    %1877 = vmatpush.msra.mxu0 %v628
    %1878 = vmatpush.msra.mxu0 %v620
    %1879 = vmatpush.msra.mxu0 %v612
    %1880 = vmatpush.msra.mxu0 %v604
    %1881 = vmatpush.msra.mxu0 %v596
    %1882 = vmatpush.msra.mxu0 %v588
    %1883 = vmatpush.msra.mxu0 %v580
    %1884 = vmatpush.msra.mxu0 %v572
    %1885 = vmatpush.msra.mxu0 %v564
    %1886 = vmatpush.msra.mxu0 %v556
    %1887 = vmatpush.msra.mxu0 %v548
    %1888 = vmatmul.f32.gmra.mxu0 %v1338
    %v1889 = vpop.f32.mrf.mxu0
    %v1890 = vadd.f32 %v1870, %v1889
    %1891 = vdwg.mxu0
    %1892 = vmatpush.msra.mxu0 %v796
    %1893 = vmatpush.msra.mxu0 %v788
    %1894 = vmatpush.msra.mxu0 %v780
    %1895 = vmatpush.msra.mxu0 %v772
    %1896 = vmatpush.msra.mxu0 %v764
    %1897 = vmatpush.msra.mxu0 %v756
    %1898 = vmatpush.msra.mxu0 %v748
    %1899 = vmatpush.msra.mxu0 %v740
    %1900 = vmatpush.msra.mxu0 %v732
    %1901 = vmatpush.msra.mxu0 %v724
    %1902 = vmatpush.msra.mxu0 %v716
    %1903 = vmatpush.msra.mxu0 %v708
    %1904 = vmatpush.msra.mxu0 %v700
    %1905 = vmatpush.msra.mxu0 %v692
    %1906 = vmatpush.msra.mxu0 %v684
    %1907 = vmatpush.msra.mxu0 %v676
    %1908 = vmatmul.f32.gmra.mxu0 %v1339
    %v1909 = vpop.f32.mrf.mxu0
    %v1910 = vadd.f32 %v1890, %v1909
    %1911 = vdwg.mxu0
    %1912 = vmatpush.msra.mxu0 %v924
    %1913 = vmatpush.msra.mxu0 %v916
    %1914 = vmatpush.msra.mxu0 %v908
    %1915 = vmatpush.msra.mxu0 %v900
    %1916 = vmatpush.msra.mxu0 %v892
    %1917 = vmatpush.msra.mxu0 %v884
    %1918 = vmatpush.msra.mxu0 %v876
    %1919 = vmatpush.msra.mxu0 %v868
    %1920 = vmatpush.msra.mxu0 %v860
    %1921 = vmatpush.msra.mxu0 %v852
    %1922 = vmatpush.msra.mxu0 %v844
    %1923 = vmatpush.msra.mxu0 %v836
    %1924 = vmatpush.msra.mxu0 %v828
    %1925 = vmatpush.msra.mxu0 %v820
    %1926 = vmatpush.msra.mxu0 %v812
    %1927 = vmatpush.msra.mxu0 %v804
    %1928 = vmatmul.f32.gmra.mxu0 %v1340
    %v1929 = vpop.f32.mrf.mxu0
    %v1930 = vadd.f32 %v1910, %v1929
    %1931 = vdwg.mxu0
    %1932 = vmatpush.msra.mxu0 %v1052
    %1933 = vmatpush.msra.mxu0 %v1044
    %1934 = vmatpush.msra.mxu0 %v1036
    %1935 = vmatpush.msra.mxu0 %v1028
    %1936 = vmatpush.msra.mxu0 %v1020
    %1937 = vmatpush.msra.mxu0 %v1012
    %1938 = vmatpush.msra.mxu0 %v1004
    %1939 = vmatpush.msra.mxu0 %v996
    %1940 = vmatpush.msra.mxu0 %v988
    %1941 = vmatpush.msra.mxu0 %v980
    %1942 = vmatpush.msra.mxu0 %v972
    %1943 = vmatpush.msra.mxu0 %v964
    %1944 = vmatpush.msra.mxu0 %v956
    %1945 = vmatpush.msra.mxu0 %v948
    %1946 = vmatpush.msra.mxu0 %v940
    %1947 = vmatpush.msra.mxu0 %v932
    %1948 = vmatmul.f32.gmra.mxu0 %v1341
    %v1949 = vpop.f32.mrf.mxu0
    %v1950 = vadd.f32 %v1930, %v1949
    %1951 = vdwg.mxu0
    %1952 = vmatpush.msra.mxu0 %v1180
    %1953 = vmatpush.msra.mxu0 %v1172
    %1954 = vmatpush.msra.mxu0 %v1164
    %1955 = vmatpush.msra.mxu0 %v1156
    %1956 = vmatpush.msra.mxu0 %v1148
    %1957 = vmatpush.msra.mxu0 %v1140
    %1958 = vmatpush.msra.mxu0 %v1132
    %1959 = vmatpush.msra.mxu0 %v1124
    %1960 = vmatpush.msra.mxu0 %v1116
    %1961 = vmatpush.msra.mxu0 %v1108
    %1962 = vmatpush.msra.mxu0 %v1100
    %1963 = vmatpush.msra.mxu0 %v1092
    %1964 = vmatpush.msra.mxu0 %v1084
    %1965 = vmatpush.msra.mxu0 %v1076
    %1966 = vmatpush.msra.mxu0 %v1068
    %1967 = vmatpush.msra.mxu0 %v1060
    %1968 = vmatmul.f32.gmra.mxu0 %v1342
    %v1969 = vpop.f32.mrf.mxu0
    %v1970 = vadd.f32 %v1950, %v1969
    %1971 = vdwg.mxu0
    %1972 = vmatpush.msra.mxu0 %v1308
    %1973 = vmatpush.msra.mxu0 %v1300
    %1974 = vmatpush.msra.mxu0 %v1292
    %1975 = vmatpush.msra.mxu0 %v1284
    %1976 = vmatpush.msra.mxu0 %v1276
    %1977 = vmatpush.msra.mxu0 %v1268
    %1978 = vmatpush.msra.mxu0 %v1260
    %1979 = vmatpush.msra.mxu0 %v1252
    %1980 = vmatpush.msra.mxu0 %v1244
    %1981 = vmatpush.msra.mxu0 %v1236
    %1982 = vmatpush.msra.mxu0 %v1228
    %1983 = vmatpush.msra.mxu0 %v1220
    %1984 = vmatpush.msra.mxu0 %v1212
    %1985 = vmatpush.msra.mxu0 %v1204
    %1986 = vmatpush.msra.mxu0 %v1196
    %1987 = vmatpush.msra.mxu0 %v1188
    %1988 = vmatmul.f32.gmra.mxu0 %v1343
    %v1989 = vpop.f32.mrf.mxu0
    %v1990 = vadd.f32 %v1970, %v1989
    %1991 = vdwg.mxu0
    %1992 = vmatpush.msra.mxu0 %v413
    %1993 = vmatpush.msra.mxu0 %v405
    %1994 = vmatpush.msra.mxu0 %v397
    %1995 = vmatpush.msra.mxu0 %v389
    %1996 = vmatpush.msra.mxu0 %v381
    %1997 = vmatpush.msra.mxu0 %v373
    %1998 = vmatpush.msra.mxu0 %v365
    %1999 = vmatpush.msra.mxu0 %v357
    %2000 = vmatpush.msra.mxu0 %v349
    %2001 = vmatpush.msra.mxu0 %v341
    %2002 = vmatpush.msra.mxu0 %v333
    %2003 = vmatpush.msra.mxu0 %v325
    %2004 = vmatpush.msra.mxu0 %v317
    %2005 = vmatpush.msra.mxu0 %v309
    %2006 = vmatpush.msra.mxu0 %v301
    %2007 = vmatpush.msra.mxu0 %v293
    %2008 = vmatmul.f32.gmra.mxu0 %v1336
    %v2009 = vpop.f32.mrf.mxu0
    %v2010 = vadd.f32 %v1319, %v2009
    %2011 = vdwg.mxu0
    %2012 = vmatpush.msra.mxu0 %v541
    %2013 = vmatpush.msra.mxu0 %v533
    %2014 = vmatpush.msra.mxu0 %v525
    %2015 = vmatpush.msra.mxu0 %v517
    %2016 = vmatpush.msra.mxu0 %v509
    %2017 = vmatpush.msra.mxu0 %v501
    %2018 = vmatpush.msra.mxu0 %v493
    %2019 = vmatpush.msra.mxu0 %v485
    %2020 = vmatpush.msra.mxu0 %v477
    %2021 = vmatpush.msra.mxu0 %v469
    %2022 = vmatpush.msra.mxu0 %v461
    %2023 = vmatpush.msra.mxu0 %v453
    %2024 = vmatpush.msra.mxu0 %v445
    %2025 = vmatpush.msra.mxu0 %v437
    %2026 = vmatpush.msra.mxu0 %v429
    %2027 = vmatpush.msra.mxu0 %v421
    %2028 = vmatmul.f32.gmra.mxu0 %v1337
    %v2029 = vpop.f32.mrf.mxu0
    %v2030 = vadd.f32 %v2010, %v2029
    %2031 = vdwg.mxu0
    %2032 = vmatpush.msra.mxu0 %v669
    %2033 = vmatpush.msra.mxu0 %v661
    %2034 = vmatpush.msra.mxu0 %v653
    %2035 = vmatpush.msra.mxu0 %v645
    %2036 = vmatpush.msra.mxu0 %v637
    %2037 = vmatpush.msra.mxu0 %v629
    %2038 = vmatpush.msra.mxu0 %v621
    %2039 = vmatpush.msra.mxu0 %v613
    %2040 = vmatpush.msra.mxu0 %v605
    %2041 = vmatpush.msra.mxu0 %v597
    %2042 = vmatpush.msra.mxu0 %v589
    %2043 = vmatpush.msra.mxu0 %v581
    %2044 = vmatpush.msra.mxu0 %v573
    %2045 = vmatpush.msra.mxu0 %v565
    %2046 = vmatpush.msra.mxu0 %v557
    %2047 = vmatpush.msra.mxu0 %v549
    %2048 = vmatmul.f32.gmra.mxu0 %v1338
    %v2049 = vpop.f32.mrf.mxu0
    %v2050 = vadd.f32 %v2030, %v2049
    %2051 = vdwg.mxu0
    %2052 = vmatpush.msra.mxu0 %v797
    %2053 = vmatpush.msra.mxu0 %v789
    %2054 = vmatpush.msra.mxu0 %v781
    %2055 = vmatpush.msra.mxu0 %v773
    %2056 = vmatpush.msra.mxu0 %v765
    %2057 = vmatpush.msra.mxu0 %v757
    %2058 = vmatpush.msra.mxu0 %v749
    %2059 = vmatpush.msra.mxu0 %v741
    %2060 = vmatpush.msra.mxu0 %v733
    %2061 = vmatpush.msra.mxu0 %v725
    %2062 = vmatpush.msra.mxu0 %v717
    %2063 = vmatpush.msra.mxu0 %v709
    %2064 = vmatpush.msra.mxu0 %v701
    %2065 = vmatpush.msra.mxu0 %v693
    %2066 = vmatpush.msra.mxu0 %v685
    %2067 = vmatpush.msra.mxu0 %v677
    %2068 = vmatmul.f32.gmra.mxu0 %v1339
    %v2069 = vpop.f32.mrf.mxu0
    %v2070 = vadd.f32 %v2050, %v2069
    %2071 = vdwg.mxu0
    %2072 = vmatpush.msra.mxu0 %v925
    %2073 = vmatpush.msra.mxu0 %v917
    %2074 = vmatpush.msra.mxu0 %v909
    %2075 = vmatpush.msra.mxu0 %v901
    %2076 = vmatpush.msra.mxu0 %v893
    %2077 = vmatpush.msra.mxu0 %v885
    %2078 = vmatpush.msra.mxu0 %v877
    %2079 = vmatpush.msra.mxu0 %v869
    %2080 = vmatpush.msra.mxu0 %v861
    %2081 = vmatpush.msra.mxu0 %v853
    %2082 = vmatpush.msra.mxu0 %v845
    %2083 = vmatpush.msra.mxu0 %v837
    %2084 = vmatpush.msra.mxu0 %v829
    %2085 = vmatpush.msra.mxu0 %v821
    %2086 = vmatpush.msra.mxu0 %v813
    %2087 = vmatpush.msra.mxu0 %v805
    %2088 = vmatmul.f32.gmra.mxu0 %v1340
    %v2089 = vpop.f32.mrf.mxu0
    %v2090 = vadd.f32 %v2070, %v2089
    %2091 = vdwg.mxu0
    %2092 = vmatpush.msra.mxu0 %v1053
    %2093 = vmatpush.msra.mxu0 %v1045
    %2094 = vmatpush.msra.mxu0 %v1037
    %2095 = vmatpush.msra.mxu0 %v1029
    %2096 = vmatpush.msra.mxu0 %v1021
    %2097 = vmatpush.msra.mxu0 %v1013
    %2098 = vmatpush.msra.mxu0 %v1005
    %2099 = vmatpush.msra.mxu0 %v997
    %2100 = vmatpush.msra.mxu0 %v989
    %2101 = vmatpush.msra.mxu0 %v981
    %2102 = vmatpush.msra.mxu0 %v973
    %2103 = vmatpush.msra.mxu0 %v965
    %2104 = vmatpush.msra.mxu0 %v957
    %2105 = vmatpush.msra.mxu0 %v949
    %2106 = vmatpush.msra.mxu0 %v941
    %2107 = vmatpush.msra.mxu0 %v933
    %2108 = vmatmul.f32.gmra.mxu0 %v1341
    %v2109 = vpop.f32.mrf.mxu0
    %v2110 = vadd.f32 %v2090, %v2109
    %2111 = vdwg.mxu0
    %2112 = vmatpush.msra.mxu0 %v1181
    %2113 = vmatpush.msra.mxu0 %v1173
    %2114 = vmatpush.msra.mxu0 %v1165
    %2115 = vmatpush.msra.mxu0 %v1157
    %2116 = vmatpush.msra.mxu0 %v1149
    %2117 = vmatpush.msra.mxu0 %v1141
    %2118 = vmatpush.msra.mxu0 %v1133
    %2119 = vmatpush.msra.mxu0 %v1125
    %2120 = vmatpush.msra.mxu0 %v1117
    %2121 = vmatpush.msra.mxu0 %v1109
    %2122 = vmatpush.msra.mxu0 %v1101
    %2123 = vmatpush.msra.mxu0 %v1093
    %2124 = vmatpush.msra.mxu0 %v1085
    %2125 = vmatpush.msra.mxu0 %v1077
    %2126 = vmatpush.msra.mxu0 %v1069
    %2127 = vmatpush.msra.mxu0 %v1061
    %2128 = vmatmul.f32.gmra.mxu0 %v1342
    %v2129 = vpop.f32.mrf.mxu0
    %v2130 = vadd.f32 %v2110, %v2129
    %2131 = vdwg.mxu0
    %2132 = vmatpush.msra.mxu0 %v1309
    %2133 = vmatpush.msra.mxu0 %v1301
    %2134 = vmatpush.msra.mxu0 %v1293
    %2135 = vmatpush.msra.mxu0 %v1285
    %2136 = vmatpush.msra.mxu0 %v1277
    %2137 = vmatpush.msra.mxu0 %v1269
    %2138 = vmatpush.msra.mxu0 %v1261
    %2139 = vmatpush.msra.mxu0 %v1253
    %2140 = vmatpush.msra.mxu0 %v1245
    %2141 = vmatpush.msra.mxu0 %v1237
    %2142 = vmatpush.msra.mxu0 %v1229
    %2143 = vmatpush.msra.mxu0 %v1221
    %2144 = vmatpush.msra.mxu0 %v1213
    %2145 = vmatpush.msra.mxu0 %v1205
    %2146 = vmatpush.msra.mxu0 %v1197
    %2147 = vmatpush.msra.mxu0 %v1189
    %2148 = vmatmul.f32.gmra.mxu0 %v1343
    %v2149 = vpop.f32.mrf.mxu0
    %v2150 = vadd.f32 %v2130, %v2149
    %2151 = vdwg.mxu0
    %2152 = vmatpush.msra.mxu0 %v414
    %2153 = vmatpush.msra.mxu0 %v406
    %2154 = vmatpush.msra.mxu0 %v398
    %2155 = vmatpush.msra.mxu0 %v390
    %2156 = vmatpush.msra.mxu0 %v382
    %2157 = vmatpush.msra.mxu0 %v374
    %2158 = vmatpush.msra.mxu0 %v366
    %2159 = vmatpush.msra.mxu0 %v358
    %2160 = vmatpush.msra.mxu0 %v350
    %2161 = vmatpush.msra.mxu0 %v342
    %2162 = vmatpush.msra.mxu0 %v334
    %2163 = vmatpush.msra.mxu0 %v326
    %2164 = vmatpush.msra.mxu0 %v318
    %2165 = vmatpush.msra.mxu0 %v310
    %2166 = vmatpush.msra.mxu0 %v302
    %2167 = vmatpush.msra.mxu0 %v294
    %2168 = vmatmul.f32.gmra.mxu0 %v1336
    %v2169 = vpop.f32.mrf.mxu0
    %v2170 = vadd.f32 %v1320, %v2169
    %2171 = vdwg.mxu0
    %2172 = vmatpush.msra.mxu0 %v542
    %2173 = vmatpush.msra.mxu0 %v534
    %2174 = vmatpush.msra.mxu0 %v526
    %2175 = vmatpush.msra.mxu0 %v518
    %2176 = vmatpush.msra.mxu0 %v510
    %2177 = vmatpush.msra.mxu0 %v502
    %2178 = vmatpush.msra.mxu0 %v494
    %2179 = vmatpush.msra.mxu0 %v486
    %2180 = vmatpush.msra.mxu0 %v478
    %2181 = vmatpush.msra.mxu0 %v470
    %2182 = vmatpush.msra.mxu0 %v462
    %2183 = vmatpush.msra.mxu0 %v454
    %2184 = vmatpush.msra.mxu0 %v446
    %2185 = vmatpush.msra.mxu0 %v438
    %2186 = vmatpush.msra.mxu0 %v430
    %2187 = vmatpush.msra.mxu0 %v422
    %2188 = vmatmul.f32.gmra.mxu0 %v1337
    %v2189 = vpop.f32.mrf.mxu0
    %v2190 = vadd.f32 %v2170, %v2189
    %2191 = vdwg.mxu0
    %2192 = vmatpush.msra.mxu0 %v670
    %2193 = vmatpush.msra.mxu0 %v662
    %2194 = vmatpush.msra.mxu0 %v654
    %2195 = vmatpush.msra.mxu0 %v646
    %2196 = vmatpush.msra.mxu0 %v638
    %2197 = vmatpush.msra.mxu0 %v630
    %2198 = vmatpush.msra.mxu0 %v622
    %2199 = vmatpush.msra.mxu0 %v614
    %2200 = vmatpush.msra.mxu0 %v606
    %2201 = vmatpush.msra.mxu0 %v598
    %2202 = vmatpush.msra.mxu0 %v590
    %2203 = vmatpush.msra.mxu0 %v582
    %2204 = vmatpush.msra.mxu0 %v574
    %2205 = vmatpush.msra.mxu0 %v566
    %2206 = vmatpush.msra.mxu0 %v558
    %2207 = vmatpush.msra.mxu0 %v550
    %2208 = vmatmul.f32.gmra.mxu0 %v1338
    %v2209 = vpop.f32.mrf.mxu0
    %v2210 = vadd.f32 %v2190, %v2209
    %2211 = vdwg.mxu0
    %2212 = vmatpush.msra.mxu0 %v798
    %2213 = vmatpush.msra.mxu0 %v790
    %2214 = vmatpush.msra.mxu0 %v782
    %2215 = vmatpush.msra.mxu0 %v774
    %2216 = vmatpush.msra.mxu0 %v766
    %2217 = vmatpush.msra.mxu0 %v758
    %2218 = vmatpush.msra.mxu0 %v750
    %2219 = vmatpush.msra.mxu0 %v742
    %2220 = vmatpush.msra.mxu0 %v734
    %2221 = vmatpush.msra.mxu0 %v726
    %2222 = vmatpush.msra.mxu0 %v718
    %2223 = vmatpush.msra.mxu0 %v710
    %2224 = vmatpush.msra.mxu0 %v702
    %2225 = vmatpush.msra.mxu0 %v694
    %2226 = vmatpush.msra.mxu0 %v686
    %2227 = vmatpush.msra.mxu0 %v678
    %2228 = vmatmul.f32.gmra.mxu0 %v1339
    %v2229 = vpop.f32.mrf.mxu0
    %v2230 = vadd.f32 %v2210, %v2229
    %2231 = vdwg.mxu0
    %2232 = vmatpush.msra.mxu0 %v926
    %2233 = vmatpush.msra.mxu0 %v918
    %2234 = vmatpush.msra.mxu0 %v910
    %2235 = vmatpush.msra.mxu0 %v902
    %2236 = vmatpush.msra.mxu0 %v894
    %2237 = vmatpush.msra.mxu0 %v886
    %2238 = vmatpush.msra.mxu0 %v878
    %2239 = vmatpush.msra.mxu0 %v870
    %2240 = vmatpush.msra.mxu0 %v862
    %2241 = vmatpush.msra.mxu0 %v854
    %2242 = vmatpush.msra.mxu0 %v846
    %2243 = vmatpush.msra.mxu0 %v838
    %2244 = vmatpush.msra.mxu0 %v830
    %2245 = vmatpush.msra.mxu0 %v822
    %2246 = vmatpush.msra.mxu0 %v814
    %2247 = vmatpush.msra.mxu0 %v806
    %2248 = vmatmul.f32.gmra.mxu0 %v1340
    %v2249 = vpop.f32.mrf.mxu0
    %v2250 = vadd.f32 %v2230, %v2249
    %2251 = vdwg.mxu0
    %2252 = vmatpush.msra.mxu0 %v1054
    %2253 = vmatpush.msra.mxu0 %v1046
    %2254 = vmatpush.msra.mxu0 %v1038
    %2255 = vmatpush.msra.mxu0 %v1030
    %2256 = vmatpush.msra.mxu0 %v1022
    %2257 = vmatpush.msra.mxu0 %v1014
    %2258 = vmatpush.msra.mxu0 %v1006
    %2259 = vmatpush.msra.mxu0 %v998
    %2260 = vmatpush.msra.mxu0 %v990
    %2261 = vmatpush.msra.mxu0 %v982
    %2262 = vmatpush.msra.mxu0 %v974
    %2263 = vmatpush.msra.mxu0 %v966
    %2264 = vmatpush.msra.mxu0 %v958
    %2265 = vmatpush.msra.mxu0 %v950
    %2266 = vmatpush.msra.mxu0 %v942
    %2267 = vmatpush.msra.mxu0 %v934
    %2268 = vmatmul.f32.gmra.mxu0 %v1341
    %v2269 = vpop.f32.mrf.mxu0
    %v2270 = vadd.f32 %v2250, %v2269
    %2271 = vdwg.mxu0
    %2272 = vmatpush.msra.mxu0 %v1182
    %2273 = vmatpush.msra.mxu0 %v1174
    %2274 = vmatpush.msra.mxu0 %v1166
    %2275 = vmatpush.msra.mxu0 %v1158
    %2276 = vmatpush.msra.mxu0 %v1150
    %2277 = vmatpush.msra.mxu0 %v1142
    %2278 = vmatpush.msra.mxu0 %v1134
    %2279 = vmatpush.msra.mxu0 %v1126
    %2280 = vmatpush.msra.mxu0 %v1118
    %2281 = vmatpush.msra.mxu0 %v1110
    %2282 = vmatpush.msra.mxu0 %v1102
    %2283 = vmatpush.msra.mxu0 %v1094
    %2284 = vmatpush.msra.mxu0 %v1086
    %2285 = vmatpush.msra.mxu0 %v1078
    %2286 = vmatpush.msra.mxu0 %v1070
    %2287 = vmatpush.msra.mxu0 %v1062
    %2288 = vmatmul.f32.gmra.mxu0 %v1342
    %v2289 = vpop.f32.mrf.mxu0
    %v2290 = vadd.f32 %v2270, %v2289
    %2291 = vdwg.mxu0
    %2292 = vmatpush.msra.mxu0 %v1310
    %2293 = vmatpush.msra.mxu0 %v1302
    %2294 = vmatpush.msra.mxu0 %v1294
    %2295 = vmatpush.msra.mxu0 %v1286
    %2296 = vmatpush.msra.mxu0 %v1278
    %2297 = vmatpush.msra.mxu0 %v1270
    %2298 = vmatpush.msra.mxu0 %v1262
    %2299 = vmatpush.msra.mxu0 %v1254
    %2300 = vmatpush.msra.mxu0 %v1246
    %2301 = vmatpush.msra.mxu0 %v1238
    %2302 = vmatpush.msra.mxu0 %v1230
    %2303 = vmatpush.msra.mxu0 %v1222
    %2304 = vmatpush.msra.mxu0 %v1214
    %2305 = vmatpush.msra.mxu0 %v1206
    %2306 = vmatpush.msra.mxu0 %v1198
    %2307 = vmatpush.msra.mxu0 %v1190
    %2308 = vmatmul.f32.gmra.mxu0 %v1343
    %v2309 = vpop.f32.mrf.mxu0
    %v2310 = vadd.f32 %v2290, %v2309
    %2311 = vdwg.mxu0
    %2312 = vmatpush.msra.mxu0 %v415
    %2313 = vmatpush.msra.mxu0 %v407
    %2314 = vmatpush.msra.mxu0 %v399
    %2315 = vmatpush.msra.mxu0 %v391
    %2316 = vmatpush.msra.mxu0 %v383
    %2317 = vmatpush.msra.mxu0 %v375
    %2318 = vmatpush.msra.mxu0 %v367
    %2319 = vmatpush.msra.mxu0 %v359
    %2320 = vmatpush.msra.mxu0 %v351
    %2321 = vmatpush.msra.mxu0 %v343
    %2322 = vmatpush.msra.mxu0 %v335
    %2323 = vmatpush.msra.mxu0 %v327
    %2324 = vmatpush.msra.mxu0 %v319
    %2325 = vmatpush.msra.mxu0 %v311
    %2326 = vmatpush.msra.mxu0 %v303
    %2327 = vmatpush.msra.mxu0 %v295
    %2328 = vmatmul.f32.gmra.mxu0 %v1336
    %v2329 = vpop.f32.mrf.mxu0
    %v2330 = vadd.f32 %v1321, %v2329
    %2331 = vdwg.mxu0
    %2332 = vmatpush.msra.mxu0 %v543
    %2333 = vmatpush.msra.mxu0 %v535
    %2334 = vmatpush.msra.mxu0 %v527
    %2335 = vmatpush.msra.mxu0 %v519
    %2336 = vmatpush.msra.mxu0 %v511
    %2337 = vmatpush.msra.mxu0 %v503
    %2338 = vmatpush.msra.mxu0 %v495
    %2339 = vmatpush.msra.mxu0 %v487
    %2340 = vmatpush.msra.mxu0 %v479
    %2341 = vmatpush.msra.mxu0 %v471
    %2342 = vmatpush.msra.mxu0 %v463
    %2343 = vmatpush.msra.mxu0 %v455
    %2344 = vmatpush.msra.mxu0 %v447
    %2345 = vmatpush.msra.mxu0 %v439
    %2346 = vmatpush.msra.mxu0 %v431
    %2347 = vmatpush.msra.mxu0 %v423
    %2348 = vmatmul.f32.gmra.mxu0 %v1337
    %v2349 = vpop.f32.mrf.mxu0
    %v2350 = vadd.f32 %v2330, %v2349
    %2351 = vdwg.mxu0
    %2352 = vmatpush.msra.mxu0 %v671
    %2353 = vmatpush.msra.mxu0 %v663
    %2354 = vmatpush.msra.mxu0 %v655
    %2355 = vmatpush.msra.mxu0 %v647
    %2356 = vmatpush.msra.mxu0 %v639
    %2357 = vmatpush.msra.mxu0 %v631
    %2358 = vmatpush.msra.mxu0 %v623
    %2359 = vmatpush.msra.mxu0 %v615
    %2360 = vmatpush.msra.mxu0 %v607
    %2361 = vmatpush.msra.mxu0 %v599
    %2362 = vmatpush.msra.mxu0 %v591
    %2363 = vmatpush.msra.mxu0 %v583
    %2364 = vmatpush.msra.mxu0 %v575
    %2365 = vmatpush.msra.mxu0 %v567
    %2366 = vmatpush.msra.mxu0 %v559
    %2367 = vmatpush.msra.mxu0 %v551
    %2368 = vmatmul.f32.gmra.mxu0 %v1338
    %v2369 = vpop.f32.mrf.mxu0
    %v2370 = vadd.f32 %v2350, %v2369
    %2371 = vdwg.mxu0
    %2372 = vmatpush.msra.mxu0 %v799
    %2373 = vmatpush.msra.mxu0 %v791
    %2374 = vmatpush.msra.mxu0 %v783
    %2375 = vmatpush.msra.mxu0 %v775
    %2376 = vmatpush.msra.mxu0 %v767
    %2377 = vmatpush.msra.mxu0 %v759
    %2378 = vmatpush.msra.mxu0 %v751
    %2379 = vmatpush.msra.mxu0 %v743
    %2380 = vmatpush.msra.mxu0 %v735
    %2381 = vmatpush.msra.mxu0 %v727
    %2382 = vmatpush.msra.mxu0 %v719
    %2383 = vmatpush.msra.mxu0 %v711
    %2384 = vmatpush.msra.mxu0 %v703
    %2385 = vmatpush.msra.mxu0 %v695
    %2386 = vmatpush.msra.mxu0 %v687
    %2387 = vmatpush.msra.mxu0 %v679
    %2388 = vmatmul.f32.gmra.mxu0 %v1339
    %v2389 = vpop.f32.mrf.mxu0
    %v2390 = vadd.f32 %v2370, %v2389
    %2391 = vdwg.mxu0
    %2392 = vmatpush.msra.mxu0 %v927
    %2393 = vmatpush.msra.mxu0 %v919
    %2394 = vmatpush.msra.mxu0 %v911
    %2395 = vmatpush.msra.mxu0 %v903
    %2396 = vmatpush.msra.mxu0 %v895
    %2397 = vmatpush.msra.mxu0 %v887
    %2398 = vmatpush.msra.mxu0 %v879
    %2399 = vmatpush.msra.mxu0 %v871
    %2400 = vmatpush.msra.mxu0 %v863
    %2401 = vmatpush.msra.mxu0 %v855
    %2402 = vmatpush.msra.mxu0 %v847
    %2403 = vmatpush.msra.mxu0 %v839
    %2404 = vmatpush.msra.mxu0 %v831
    %2405 = vmatpush.msra.mxu0 %v823
    %2406 = vmatpush.msra.mxu0 %v815
    %2407 = vmatpush.msra.mxu0 %v807
    %2408 = vmatmul.f32.gmra.mxu0 %v1340
    %v2409 = vpop.f32.mrf.mxu0
    %v2410 = vadd.f32 %v2390, %v2409
    %2411 = vdwg.mxu0
    %2412 = vmatpush.msra.mxu0 %v1055
    %2413 = vmatpush.msra.mxu0 %v1047
    %2414 = vmatpush.msra.mxu0 %v1039
    %2415 = vmatpush.msra.mxu0 %v1031
    %2416 = vmatpush.msra.mxu0 %v1023
    %2417 = vmatpush.msra.mxu0 %v1015
    %2418 = vmatpush.msra.mxu0 %v1007
    %2419 = vmatpush.msra.mxu0 %v999
    %2420 = vmatpush.msra.mxu0 %v991
    %2421 = vmatpush.msra.mxu0 %v983
    %2422 = vmatpush.msra.mxu0 %v975
    %2423 = vmatpush.msra.mxu0 %v967
    %2424 = vmatpush.msra.mxu0 %v959
    %2425 = vmatpush.msra.mxu0 %v951
    %2426 = vmatpush.msra.mxu0 %v943
    %2427 = vmatpush.msra.mxu0 %v935
    %2428 = vmatmul.f32.gmra.mxu0 %v1341
    %v2429 = vpop.f32.mrf.mxu0
    %v2430 = vadd.f32 %v2410, %v2429
    %2431 = vdwg.mxu0
    %2432 = vmatpush.msra.mxu0 %v1183
    %2433 = vmatpush.msra.mxu0 %v1175
    %2434 = vmatpush.msra.mxu0 %v1167
    %2435 = vmatpush.msra.mxu0 %v1159
    %2436 = vmatpush.msra.mxu0 %v1151
    %2437 = vmatpush.msra.mxu0 %v1143
    %2438 = vmatpush.msra.mxu0 %v1135
    %2439 = vmatpush.msra.mxu0 %v1127
    %2440 = vmatpush.msra.mxu0 %v1119
    %2441 = vmatpush.msra.mxu0 %v1111
    %2442 = vmatpush.msra.mxu0 %v1103
    %2443 = vmatpush.msra.mxu0 %v1095
    %2444 = vmatpush.msra.mxu0 %v1087
    %2445 = vmatpush.msra.mxu0 %v1079
    %2446 = vmatpush.msra.mxu0 %v1071
    %2447 = vmatpush.msra.mxu0 %v1063
    %2448 = vmatmul.f32.gmra.mxu0 %v1342
    %v2449 = vpop.f32.mrf.mxu0
    %v2450 = vadd.f32 %v2430, %v2449
    %2451 = vdwg.mxu0
    %2452 = vmatpush.msra.mxu0 %v1311
    %2453 = vmatpush.msra.mxu0 %v1303
    %2454 = vmatpush.msra.mxu0 %v1295
    %2455 = vmatpush.msra.mxu0 %v1287
    %2456 = vmatpush.msra.mxu0 %v1279
    %2457 = vmatpush.msra.mxu0 %v1271
    %2458 = vmatpush.msra.mxu0 %v1263
    %2459 = vmatpush.msra.mxu0 %v1255
    %2460 = vmatpush.msra.mxu0 %v1247
    %2461 = vmatpush.msra.mxu0 %v1239
    %2462 = vmatpush.msra.mxu0 %v1231
    %2463 = vmatpush.msra.mxu0 %v1223
    %2464 = vmatpush.msra.mxu0 %v1215
    %2465 = vmatpush.msra.mxu0 %v1207
    %2466 = vmatpush.msra.mxu0 %v1199
    %2467 = vmatpush.msra.mxu0 %v1191
    %2468 = vmatmul.f32.gmra.mxu0 %v1343
    %v2469 = vpop.f32.mrf.mxu0
    %v2470 = vadd.f32 %v2450, %v2469
    %2471 = vdwg.mxu0
    %2472 = vmatpush.msra.mxu0 %v416
    %2473 = vmatpush.msra.mxu0 %v408
    %2474 = vmatpush.msra.mxu0 %v400
    %2475 = vmatpush.msra.mxu0 %v392
    %2476 = vmatpush.msra.mxu0 %v384
    %2477 = vmatpush.msra.mxu0 %v376
    %2478 = vmatpush.msra.mxu0 %v368
    %2479 = vmatpush.msra.mxu0 %v360
    %2480 = vmatpush.msra.mxu0 %v352
    %2481 = vmatpush.msra.mxu0 %v344
    %2482 = vmatpush.msra.mxu0 %v336
    %2483 = vmatpush.msra.mxu0 %v328
    %2484 = vmatpush.msra.mxu0 %v320
    %2485 = vmatpush.msra.mxu0 %v312
    %2486 = vmatpush.msra.mxu0 %v304
    %2487 = vmatpush.msra.mxu0 %v296
    %2488 = vmatmul.f32.gmra.mxu0 %v1336
    %v2489 = vpop.f32.mrf.mxu0
    %v2490 = vadd.f32 %v1322, %v2489
    %2491 = vdwg.mxu0
    %2492 = vmatpush.msra.mxu0 %v544
    %2493 = vmatpush.msra.mxu0 %v536
    %2494 = vmatpush.msra.mxu0 %v528
    %2495 = vmatpush.msra.mxu0 %v520
    %2496 = vmatpush.msra.mxu0 %v512
    %2497 = vmatpush.msra.mxu0 %v504
    %2498 = vmatpush.msra.mxu0 %v496
    %2499 = vmatpush.msra.mxu0 %v488
    %2500 = vmatpush.msra.mxu0 %v480
    %2501 = vmatpush.msra.mxu0 %v472
    %2502 = vmatpush.msra.mxu0 %v464
    %2503 = vmatpush.msra.mxu0 %v456
    %2504 = vmatpush.msra.mxu0 %v448
    %2505 = vmatpush.msra.mxu0 %v440
    %2506 = vmatpush.msra.mxu0 %v432
    %2507 = vmatpush.msra.mxu0 %v424
    %2508 = vmatmul.f32.gmra.mxu0 %v1337
    %v2509 = vpop.f32.mrf.mxu0
    %v2510 = vadd.f32 %v2490, %v2509
    %2511 = vdwg.mxu0
    %2512 = vmatpush.msra.mxu0 %v672
    %2513 = vmatpush.msra.mxu0 %v664
    %2514 = vmatpush.msra.mxu0 %v656
    %2515 = vmatpush.msra.mxu0 %v648
    %2516 = vmatpush.msra.mxu0 %v640
    %2517 = vmatpush.msra.mxu0 %v632
    %2518 = vmatpush.msra.mxu0 %v624
    %2519 = vmatpush.msra.mxu0 %v616
    %2520 = vmatpush.msra.mxu0 %v608
    %2521 = vmatpush.msra.mxu0 %v600
    %2522 = vmatpush.msra.mxu0 %v592
    %2523 = vmatpush.msra.mxu0 %v584
    %2524 = vmatpush.msra.mxu0 %v576
    %2525 = vmatpush.msra.mxu0 %v568
    %2526 = vmatpush.msra.mxu0 %v560
    %2527 = vmatpush.msra.mxu0 %v552
    %2528 = vmatmul.f32.gmra.mxu0 %v1338
    %v2529 = vpop.f32.mrf.mxu0
    %v2530 = vadd.f32 %v2510, %v2529
    %2531 = vdwg.mxu0
    %2532 = vmatpush.msra.mxu0 %v800
    %2533 = vmatpush.msra.mxu0 %v792
    %2534 = vmatpush.msra.mxu0 %v784
    %2535 = vmatpush.msra.mxu0 %v776
    %2536 = vmatpush.msra.mxu0 %v768
    %2537 = vmatpush.msra.mxu0 %v760
    %2538 = vmatpush.msra.mxu0 %v752
    %2539 = vmatpush.msra.mxu0 %v744
    %2540 = vmatpush.msra.mxu0 %v736
    %2541 = vmatpush.msra.mxu0 %v728
    %2542 = vmatpush.msra.mxu0 %v720
    %2543 = vmatpush.msra.mxu0 %v712
    %2544 = vmatpush.msra.mxu0 %v704
    %2545 = vmatpush.msra.mxu0 %v696
    %2546 = vmatpush.msra.mxu0 %v688
    %2547 = vmatpush.msra.mxu0 %v680
    %2548 = vmatmul.f32.gmra.mxu0 %v1339
    %v2549 = vpop.f32.mrf.mxu0
    %v2550 = vadd.f32 %v2530, %v2549
    %2551 = vdwg.mxu0
    %2552 = vmatpush.msra.mxu0 %v928
    %2553 = vmatpush.msra.mxu0 %v920
    %2554 = vmatpush.msra.mxu0 %v912
    %2555 = vmatpush.msra.mxu0 %v904
    %2556 = vmatpush.msra.mxu0 %v896
    %2557 = vmatpush.msra.mxu0 %v888
    %2558 = vmatpush.msra.mxu0 %v880
    %2559 = vmatpush.msra.mxu0 %v872
    %2560 = vmatpush.msra.mxu0 %v864
    %2561 = vmatpush.msra.mxu0 %v856
    %2562 = vmatpush.msra.mxu0 %v848
    %2563 = vmatpush.msra.mxu0 %v840
    %2564 = vmatpush.msra.mxu0 %v832
    %2565 = vmatpush.msra.mxu0 %v824
    %2566 = vmatpush.msra.mxu0 %v816
    %2567 = vmatpush.msra.mxu0 %v808
    %2568 = vmatmul.f32.gmra.mxu0 %v1340
    %v2569 = vpop.f32.mrf.mxu0
    %v2570 = vadd.f32 %v2550, %v2569
    %2571 = vdwg.mxu0
    %2572 = vmatpush.msra.mxu0 %v1056
    %2573 = vmatpush.msra.mxu0 %v1048
    %2574 = vmatpush.msra.mxu0 %v1040
    %2575 = vmatpush.msra.mxu0 %v1032
    %2576 = vmatpush.msra.mxu0 %v1024
    %2577 = vmatpush.msra.mxu0 %v1016
    %2578 = vmatpush.msra.mxu0 %v1008
    %2579 = vmatpush.msra.mxu0 %v1000
    %2580 = vmatpush.msra.mxu0 %v992
    %2581 = vmatpush.msra.mxu0 %v984
    %2582 = vmatpush.msra.mxu0 %v976
    %2583 = vmatpush.msra.mxu0 %v968
    %2584 = vmatpush.msra.mxu0 %v960
    %2585 = vmatpush.msra.mxu0 %v952
    %2586 = vmatpush.msra.mxu0 %v944
    %2587 = vmatpush.msra.mxu0 %v936
    %2588 = vmatmul.f32.gmra.mxu0 %v1341
    %v2589 = vpop.f32.mrf.mxu0
    %v2590 = vadd.f32 %v2570, %v2589
    %2591 = vdwg.mxu0
    %2592 = vmatpush.msra.mxu0 %v1184
    %2593 = vmatpush.msra.mxu0 %v1176
    %2594 = vmatpush.msra.mxu0 %v1168
    %2595 = vmatpush.msra.mxu0 %v1160
    %2596 = vmatpush.msra.mxu0 %v1152
    %2597 = vmatpush.msra.mxu0 %v1144
    %2598 = vmatpush.msra.mxu0 %v1136
    %2599 = vmatpush.msra.mxu0 %v1128
    %2600 = vmatpush.msra.mxu0 %v1120
    %2601 = vmatpush.msra.mxu0 %v1112
    %2602 = vmatpush.msra.mxu0 %v1104
    %2603 = vmatpush.msra.mxu0 %v1096
    %2604 = vmatpush.msra.mxu0 %v1088
    %2605 = vmatpush.msra.mxu0 %v1080
    %2606 = vmatpush.msra.mxu0 %v1072
    %2607 = vmatpush.msra.mxu0 %v1064
    %2608 = vmatmul.f32.gmra.mxu0 %v1342
    %v2609 = vpop.f32.mrf.mxu0
    %v2610 = vadd.f32 %v2590, %v2609
    %2611 = vdwg.mxu0
    %2612 = vmatpush.msra.mxu0 %v1312
    %2613 = vmatpush.msra.mxu0 %v1304
    %2614 = vmatpush.msra.mxu0 %v1296
    %2615 = vmatpush.msra.mxu0 %v1288
    %2616 = vmatpush.msra.mxu0 %v1280
    %2617 = vmatpush.msra.mxu0 %v1272
    %2618 = vmatpush.msra.mxu0 %v1264
    %2619 = vmatpush.msra.mxu0 %v1256
    %2620 = vmatpush.msra.mxu0 %v1248
    %2621 = vmatpush.msra.mxu0 %v1240
    %2622 = vmatpush.msra.mxu0 %v1232
    %2623 = vmatpush.msra.mxu0 %v1224
    %2624 = vmatpush.msra.mxu0 %v1216
    %2625 = vmatpush.msra.mxu0 %v1208
    %2626 = vmatpush.msra.mxu0 %v1200
    %2627 = vmatpush.msra.mxu0 %v1192
    %2628 = vmatmul.f32.gmra.mxu0 %v1343
    %v2629 = vpop.f32.mrf.mxu0
    %v2630 = vadd.f32 %v2610, %v2629
    %2631 = vdwg.mxu0
    %v2632 = vmax.f32 %v1510, 0.0
    %v2633 = vmax.f32 %v1670, 0.0
    %v2634 = vmax.f32 %v1830, 0.0
    %v2635 = vmax.f32 %v1990, 0.0
    %v2636 = vmax.f32 %v2150, 0.0
    %v2637 = vmax.f32 %v2310, 0.0
    %v2638 = vmax.f32 %v2470, 0.0
    %v2639 = vmax.f32 %v2630, 0.0
    %v2640 = vmax.f32 %v2632, %v2634
    %v2641 = vmax.f32 %v2633, %v2635
    %v2642 = vmax.f32 %v2636, %v2638
    %v2643 = vmax.f32 %v2637, %v2639
    %v2644 = vmax.f32 %v2640, %v2642
    %v2645 = vmax.f32 %v2641, %v2643
    %v2646 = vld [vmem:[#allocation15] sm:$0xff]
    %v2647 = vld [vmem:[#allocation15 + $0x8] sm:$0xff]
    %v2648 = vld [vmem:[#allocation15 + $0x10] sm:$0xff]
    %v2649 = vld [vmem:[#allocation15 + $0x18] sm:$0xff]
    %v2650 = vld [vmem:[#allocation15 + $0x20] sm:$0xff]
    %v2651 = vld [vmem:[#allocation15 + $0x28] sm:$0xff]
    %v2652 = vld [vmem:[#allocation15 + $0x30] sm:$0xff]
    %v2653 = vld [vmem:[#allocation15 + $0x38] sm:$0xff]
    %v2654 = vld [vmem:[#allocation15 + $0x40] sm:$0xff]
    %v2655 = vld [vmem:[#allocation15 + $0x48] sm:$0xff]
    %v2656 = vld [vmem:[#allocation15 + $0x50] sm:$0xff]
    %v2657 = vld [vmem:[#allocation15 + $0x58] sm:$0xff]
    %v2658 = vld [vmem:[#allocation15 + $0x60] sm:$0xff]
    %v2659 = vld [vmem:[#allocation15 + $0x68] sm:$0xff]
    %v2660 = vld [vmem:[#allocation15 + $0x70] sm:$0xff]
    %v2661 = vld [vmem:[#allocation15 + $0x78] sm:$0xff]
    %v2662 = vld [vmem:[#allocation15 + $0x80] sm:$0xff]
    %v2663 = vld [vmem:[#allocation15 + $0x88] sm:$0xff]
    %v2664 = vld [vmem:[#allocation15 + $0x90] sm:$0xff]
    %v2665 = vld [vmem:[#allocation15 + $0x98] sm:$0xff]
    %v2666 = vld [vmem:[#allocation15 + $0xa0] sm:$0xff]
    %v2667 = vld [vmem:[#allocation15 + $0xa8] sm:$0xff]
    %v2668 = vld [vmem:[#allocation15 + $0xb0] sm:$0xff]
    %v2669 = vld [vmem:[#allocation15 + $0xb8] sm:$0xff]
    %v2670 = vld [vmem:[#allocation17] sm:$0xff]
    %v2671 = vld [vmem:[#allocation17 + $0x8] sm:$0xff]
    %v2672 = vld [vmem:[#allocation17 + $0x10] sm:$0xff]
    %v2673 = vld [vmem:[#allocation17 + $0x18] sm:$0xff]
    %v2674 = vld [vmem:[#allocation17 + $0x20] sm:$0xff]
    %v2675 = vld [vmem:[#allocation17 + $0x28] sm:$0xff]
    %v2676 = vld [vmem:[#allocation17 + $0x30] sm:$0xff]
    %v2677 = vld [vmem:[#allocation17 + $0x38] sm:$0xff]
    %v2678 = vld [vmem:[#allocation17 + $0x40] sm:$0xff]
    %v2679 = vld [vmem:[#allocation17 + $0x48] sm:$0xff]
    %v2680 = vld [vmem:[#allocation17 + $0x50] sm:$0xff]
    %v2681 = vld [vmem:[#allocation17 + $0x58] sm:$0xff]
    %v2682 = vld [vmem:[#allocation17 + $0x60] sm:$0xff]
    %v2683 = vld [vmem:[#allocation17 + $0x68] sm:$0xff]
    %v2684 = vld [vmem:[#allocation17 + $0x70] sm:$0xff]
    %v2685 = vld [vmem:[#allocation17 + $0x78] sm:$0xff]
    %v2686 = vld [vmem:[#allocation17 + $0x80] sm:$0xff]
    %v2687 = vld [vmem:[#allocation17 + $0x88] sm:$0xff]
    %v2688 = vld [vmem:[#allocation17 + $0x90] sm:$0xff]
    %v2689 = vld [vmem:[#allocation17 + $0x98] sm:$0xff]
    %v2690 = vld [vmem:[#allocation17 + $0xa0] sm:$0xff]
    %v2691 = vld [vmem:[#allocation17 + $0xa8] sm:$0xff]
    %v2692 = vld [vmem:[#allocation17 + $0xb0] sm:$0xff]
    %v2693 = vld [vmem:[#allocation17 + $0xb8] sm:$0xff]
    %v2694 = vld [vmem:[#allocation17 + $0xc0] sm:$0xff]
    %v2695 = vld [vmem:[#allocation17 + $0xc8] sm:$0xff]
    %v2696 = vld [vmem:[#allocation17 + $0xd0] sm:$0xff]
    %v2697 = vld [vmem:[#allocation17 + $0xd8] sm:$0xff]
    %v2698 = vld [vmem:[#allocation17 + $0xe0] sm:$0xff]
    %v2699 = vld [vmem:[#allocation17 + $0xe8] sm:$0xff]
    %v2700 = vld [vmem:[#allocation17 + $0xf0] sm:$0xff]
    %v2701 = vld [vmem:[#allocation17 + $0xf8] sm:$0xff]
    %v2702 = vld [vmem:[#allocation17 + $0x100] sm:$0xff]
    %v2703 = vld [vmem:[#allocation17 + $0x108] sm:$0xff]
    %v2704 = vld [vmem:[#allocation17 + $0x110] sm:$0xff]
    %v2705 = vld [vmem:[#allocation17 + $0x118] sm:$0xff]
    %v2706 = vld [vmem:[#allocation17 + $0x120] sm:$0xff]
    %v2707 = vld [vmem:[#allocation17 + $0x128] sm:$0xff]
    %v2708 = vld [vmem:[#allocation17 + $0x130] sm:$0xff]
    %v2709 = vld [vmem:[#allocation17 + $0x138] sm:$0xff]
    %v2710 = vld [vmem:[#allocation17 + $0x140] sm:$0xff]
    %v2711 = vld [vmem:[#allocation17 + $0x148] sm:$0xff]
    %v2712 = vld [vmem:[#allocation17 + $0x150] sm:$0xff]
    %v2713 = vld [vmem:[#allocation17 + $0x158] sm:$0xff]
    %v2714 = vld [vmem:[#allocation17 + $0x160] sm:$0xff]
    %v2715 = vld [vmem:[#allocation17 + $0x168] sm:$0xff]
    %v2716 = vld [vmem:[#allocation17 + $0x170] sm:$0xff]
    %v2717 = vld [vmem:[#allocation17 + $0x178] sm:$0xff]
    %v2718 = vld [vmem:[#allocation17 + $0x180] sm:$0xff]
    %v2719 = vld [vmem:[#allocation17 + $0x188] sm:$0xff]
    %v2720 = vld [vmem:[#allocation17 + $0x190] sm:$0xff]
    %v2721 = vld [vmem:[#allocation17 + $0x198] sm:$0xff]
    %v2722 = vld [vmem:[#allocation17 + $0x1a0] sm:$0xff]
    %v2723 = vld [vmem:[#allocation17 + $0x1a8] sm:$0xff]
    %v2724 = vld [vmem:[#allocation17 + $0x1b0] sm:$0xff]
    %v2725 = vld [vmem:[#allocation17 + $0x1b8] sm:$0xff]
    %v2726 = vld [vmem:[#allocation17 + $0x1c0] sm:$0xff]
    %v2727 = vld [vmem:[#allocation17 + $0x1c8] sm:$0xff]
    %v2728 = vld [vmem:[#allocation17 + $0x1d0] sm:$0xff]
    %v2729 = vld [vmem:[#allocation17 + $0x1d8] sm:$0xff]
    %v2730 = vld [vmem:[#allocation17 + $0x1e0] sm:$0xff]
    %v2731 = vld [vmem:[#allocation17 + $0x1e8] sm:$0xff]
    %v2732 = vld [vmem:[#allocation17 + $0x1f0] sm:$0xff]
    %v2733 = vld [vmem:[#allocation17 + $0x1f8] sm:$0xff]
    %v2734 = vld [vmem:[#allocation17 + $0x200] sm:$0xff]
    %v2735 = vld [vmem:[#allocation17 + $0x208] sm:$0xff]
    %v2736 = vld [vmem:[#allocation17 + $0x210] sm:$0xff]
    %v2737 = vld [vmem:[#allocation17 + $0x218] sm:$0xff]
    %v2738 = vld [vmem:[#allocation17 + $0x220] sm:$0xff]
    %v2739 = vld [vmem:[#allocation17 + $0x228] sm:$0xff]
    %v2740 = vld [vmem:[#allocation17 + $0x230] sm:$0xff]
    %v2741 = vld [vmem:[#allocation17 + $0x238] sm:$0xff]
    %v2742 = vld [vmem:[#allocation17 + $0x240] sm:$0xff]
    %v2743 = vld [vmem:[#allocation17 + $0x248] sm:$0xff]
    %v2744 = vld [vmem:[#allocation17 + $0x250] sm:$0xff]
    %v2745 = vld [vmem:[#allocation17 + $0x258] sm:$0xff]
    %v2746 = vld [vmem:[#allocation17 + $0x260] sm:$0xff]
    %v2747 = vld [vmem:[#allocation17 + $0x268] sm:$0xff]
    %v2748 = vld [vmem:[#allocation17 + $0x270] sm:$0xff]
    %v2749 = vld [vmem:[#allocation17 + $0x278] sm:$0xff]
    %v2750 = vld [vmem:[#allocation17 + $0x280] sm:$0xff]
    %v2751 = vld [vmem:[#allocation17 + $0x288] sm:$0xff]
    %v2752 = vld [vmem:[#allocation17 + $0x290] sm:$0xff]
    %v2753 = vld [vmem:[#allocation17 + $0x298] sm:$0xff]
    %v2754 = vld [vmem:[#allocation17 + $0x2a0] sm:$0xff]
    %v2755 = vld [vmem:[#allocation17 + $0x2a8] sm:$0xff]
    %v2756 = vld [vmem:[#allocation17 + $0x2b0] sm:$0xff]
    %v2757 = vld [vmem:[#allocation17 + $0x2b8] sm:$0xff]
    %v2758 = vld [vmem:[#allocation17 + $0x2c0] sm:$0xff]
    %v2759 = vld [vmem:[#allocation17 + $0x2c8] sm:$0xff]
    %v2760 = vld [vmem:[#allocation17 + $0x2d0] sm:$0xff]
    %v2761 = vld [vmem:[#allocation17 + $0x2d8] sm:$0xff]
    %v2762 = vld [vmem:[#allocation17 + $0x2e0] sm:$0xff]
    %v2763 = vld [vmem:[#allocation17 + $0x2e8] sm:$0xff]
    %v2764 = vld [vmem:[#allocation17 + $0x2f0] sm:$0xff]
    %v2765 = vld [vmem:[#allocation17 + $0x2f8] sm:$0xff]
    %2766 = vmatpush.msra.mxu0 %v2715
    %2767 = vmatpush.msra.mxu0 %v2712
    %2768 = vmatpush.msra.mxu0 %v2709
    %2769 = vmatpush.msra.mxu0 %v2706
    %2770 = vmatpush.msra.mxu0 %v2703
    %2771 = vmatpush.msra.mxu0 %v2700
    %2772 = vmatpush.msra.mxu0 %v2697
    %2773 = vmatpush.msra.mxu0 %v2694
    %2774 = vmatpush.msra.mxu0 %v2691
    %2775 = vmatpush.msra.mxu0 %v2688
    %2776 = vmatpush.msra.mxu0 %v2685
    %2777 = vmatpush.msra.mxu0 %v2682
    %2778 = vmatpush.msra.mxu0 %v2679
    %2779 = vmatpush.msra.mxu0 %v2676
    %2780 = vmatpush.msra.mxu0 %v2673
    %2781 = vmatpush.msra.mxu0 %v2670
    %2782 = vmatmul.f32.gmra.mxu0 %v2644
    %v2783 = vpop.f32.mrf.mxu0
    %v2784 = vadd.f32 0.0, %v2783
    %2785 = vdwg.mxu0
    %2786 = vmatpush.msra.mxu0 %v2763
    %2787 = vmatpush.msra.mxu0 %v2760
    %2788 = vmatpush.msra.mxu0 %v2757
    %2789 = vmatpush.msra.mxu0 %v2754
    %2790 = vmatpush.msra.mxu0 %v2751
    %2791 = vmatpush.msra.mxu0 %v2748
    %2792 = vmatpush.msra.mxu0 %v2745
    %2793 = vmatpush.msra.mxu0 %v2742
    %2794 = vmatpush.msra.mxu0 %v2739
    %2795 = vmatpush.msra.mxu0 %v2736
    %2796 = vmatpush.msra.mxu0 %v2733
    %2797 = vmatpush.msra.mxu0 %v2730
    %2798 = vmatpush.msra.mxu0 %v2727
    %2799 = vmatpush.msra.mxu0 %v2724
    %2800 = vmatpush.msra.mxu0 %v2721
    %2801 = vmatpush.msra.mxu0 %v2718
    %2802 = vmatmul.f32.gmra.mxu0 %v2645
    %v2803 = vpop.f32.mrf.mxu0
    %v2804 = vadd.f32 %v2784, %v2803
    %2805 = vdwg.mxu0
    %2806 = vmatpush.msra.mxu0 %v2716
    %2807 = vmatpush.msra.mxu0 %v2713
    %2808 = vmatpush.msra.mxu0 %v2710
    %2809 = vmatpush.msra.mxu0 %v2707
    %2810 = vmatpush.msra.mxu0 %v2704
    %2811 = vmatpush.msra.mxu0 %v2701
    %2812 = vmatpush.msra.mxu0 %v2698
    %2813 = vmatpush.msra.mxu0 %v2695
    %2814 = vmatpush.msra.mxu0 %v2692
    %2815 = vmatpush.msra.mxu0 %v2689
    %2816 = vmatpush.msra.mxu0 %v2686
    %2817 = vmatpush.msra.mxu0 %v2683
    %2818 = vmatpush.msra.mxu0 %v2680
    %2819 = vmatpush.msra.mxu0 %v2677
    %2820 = vmatpush.msra.mxu0 %v2674
    %2821 = vmatpush.msra.mxu0 %v2671
    %2822 = vmatmul.f32.gmra.mxu0 %v2644
    %v2823 = vpop.f32.mrf.mxu0
    %v2824 = vadd.f32 0.0, %v2823
    %2825 = vdwg.mxu0
    %2826 = vmatpush.msra.mxu0 %v2764
    %2827 = vmatpush.msra.mxu0 %v2761
    %2828 = vmatpush.msra.mxu0 %v2758
    %2829 = vmatpush.msra.mxu0 %v2755
    %2830 = vmatpush.msra.mxu0 %v2752
    %2831 = vmatpush.msra.mxu0 %v2749
    %2832 = vmatpush.msra.mxu0 %v2746
    %2833 = vmatpush.msra.mxu0 %v2743
    %2834 = vmatpush.msra.mxu0 %v2740
    %2835 = vmatpush.msra.mxu0 %v2737
    %2836 = vmatpush.msra.mxu0 %v2734
    %2837 = vmatpush.msra.mxu0 %v2731
    %2838 = vmatpush.msra.mxu0 %v2728
    %2839 = vmatpush.msra.mxu0 %v2725
    %2840 = vmatpush.msra.mxu0 %v2722
    %2841 = vmatpush.msra.mxu0 %v2719
    %2842 = vmatmul.f32.gmra.mxu0 %v2645
    %v2843 = vpop.f32.mrf.mxu0
    %v2844 = vadd.f32 %v2824, %v2843
    %2845 = vdwg.mxu0
    %2846 = vmatpush.msra.mxu0 %v2717
    %2847 = vmatpush.msra.mxu0 %v2714
    %2848 = vmatpush.msra.mxu0 %v2711
    %2849 = vmatpush.msra.mxu0 %v2708
    %2850 = vmatpush.msra.mxu0 %v2705
    %2851 = vmatpush.msra.mxu0 %v2702
    %2852 = vmatpush.msra.mxu0 %v2699
    %2853 = vmatpush.msra.mxu0 %v2696
    %2854 = vmatpush.msra.mxu0 %v2693
    %2855 = vmatpush.msra.mxu0 %v2690
    %2856 = vmatpush.msra.mxu0 %v2687
    %2857 = vmatpush.msra.mxu0 %v2684
    %2858 = vmatpush.msra.mxu0 %v2681
    %2859 = vmatpush.msra.mxu0 %v2678
    %2860 = vmatpush.msra.mxu0 %v2675
    %2861 = vmatpush.msra.mxu0 %v2672
    %2862 = vmatmul.f32.gmra.mxu0 %v2644
    %v2863 = vpop.f32.mrf.mxu0
    %v2864 = vadd.f32 0.0, %v2863
    %2865 = vdwg.mxu0
    %2866 = vmatpush.msra.mxu0 %v2765
    %2867 = vmatpush.msra.mxu0 %v2762
    %2868 = vmatpush.msra.mxu0 %v2759
    %2869 = vmatpush.msra.mxu0 %v2756
    %2870 = vmatpush.msra.mxu0 %v2753
    %2871 = vmatpush.msra.mxu0 %v2750
    %2872 = vmatpush.msra.mxu0 %v2747
    %2873 = vmatpush.msra.mxu0 %v2744
    %2874 = vmatpush.msra.mxu0 %v2741
    %2875 = vmatpush.msra.mxu0 %v2738
    %2876 = vmatpush.msra.mxu0 %v2735
    %2877 = vmatpush.msra.mxu0 %v2732
    %2878 = vmatpush.msra.mxu0 %v2729
    %2879 = vmatpush.msra.mxu0 %v2726
    %2880 = vmatpush.msra.mxu0 %v2723
    %2881 = vmatpush.msra.mxu0 %v2720
    %2882 = vmatmul.f32.gmra.mxu0 %v2645
    %v2883 = vpop.f32.mrf.mxu0
    %v2884 = vadd.f32 %v2864, %v2883
    %2885 = vdwg.mxu0
    %vm2886 = vcmask 523264
    %v2888 = vsel %vm2886, %v286, 0
    %2890 = vmatpush.msra.mxu0 0.0
    %2891 = vmatpush.msra.mxu0 0.0
    %2892 = vmatpush.msra.mxu0 0.0
    %2893 = vmatpush.msra.mxu0 0.0
    %2894 = vmatpush.msra.mxu0 0.0
    %2895 = vmatpush.msra.mxu0 0.0
    %2896 = vmatpush.msra.mxu0 0.0
    %2897 = vmatpush.msra.mxu0 0.0
    %2898 = vmatpush.msra.mxu0 %v2667
    %2899 = vmatpush.msra.mxu0 %v2664
    %2900 = vmatpush.msra.mxu0 %v2661
    %2901 = vmatpush.msra.mxu0 %v2658
    %2902 = vmatpush.msra.mxu0 %v2655
    %2903 = vmatpush.msra.mxu0 %v2652
    %2904 = vmatpush.msra.mxu0 %v2649
    %2905 = vmatpush.msra.mxu0 %v2646
    %2906 = vmatmul.f32.gmra.mxu0 %v2888
    %v2907 = vpop.f32.mrf.mxu0
    %v2908 = vadd.f32 %v2804, %v2907
    %2909 = vdwg.mxu0
    %2910 = vmatpush.msra.mxu0 0.0
    %2911 = vmatpush.msra.mxu0 0.0
    %2912 = vmatpush.msra.mxu0 0.0
    %2913 = vmatpush.msra.mxu0 0.0
    %2914 = vmatpush.msra.mxu0 0.0
    %2915 = vmatpush.msra.mxu0 0.0
    %2916 = vmatpush.msra.mxu0 0.0
    %2917 = vmatpush.msra.mxu0 0.0
    %2918 = vmatpush.msra.mxu0 %v2668
    %2919 = vmatpush.msra.mxu0 %v2665
    %2920 = vmatpush.msra.mxu0 %v2662
    %2921 = vmatpush.msra.mxu0 %v2659
    %2922 = vmatpush.msra.mxu0 %v2656
    %2923 = vmatpush.msra.mxu0 %v2653
    %2924 = vmatpush.msra.mxu0 %v2650
    %2925 = vmatpush.msra.mxu0 %v2647
    %2926 = vmatmul.f32.gmra.mxu0 %v2888
    %v2927 = vpop.f32.mrf.mxu0
    %v2928 = vadd.f32 %v2844, %v2927
    %2929 = vdwg.mxu0
    %2930 = vmatpush.msra.mxu0 0.0
    %2931 = vmatpush.msra.mxu0 0.0
    %2932 = vmatpush.msra.mxu0 0.0
    %2933 = vmatpush.msra.mxu0 0.0
    %2934 = vmatpush.msra.mxu0 0.0
    %2935 = vmatpush.msra.mxu0 0.0
    %2936 = vmatpush.msra.mxu0 0.0
    %2937 = vmatpush.msra.mxu0 0.0
    %2938 = vmatpush.msra.mxu0 %v2669
    %2939 = vmatpush.msra.mxu0 %v2666
    %2940 = vmatpush.msra.mxu0 %v2663
    %2941 = vmatpush.msra.mxu0 %v2660
    %2942 = vmatpush.msra.mxu0 %v2657
    %2943 = vmatpush.msra.mxu0 %v2654
    %2944 = vmatpush.msra.mxu0 %v2651
    %2945 = vmatpush.msra.mxu0 %v2648
    %2946 = vmatmul.f32.gmra.mxu0 %v2888
    %v2947 = vpop.f32.mrf.mxu0
    %v2948 = vadd.f32 %v2884, %v2947
    %2949 = vdwg.mxu0
    %v2950 = vld [vmem:[#allocation2] sm:$0x1]
    %v2952 = vperm.slane %v2950, 0
    %2953 = vset.pattern.permute.xlu0 0
    %2954 = vperm.xlu0 %2953, %v2952
    %v2955 = vpop.permute.xlu0 %2954
    %v2957 = vadd.f32 %v2908, %v2955
    %v2958 = vadd.f32 %v2928, %v2955
    %v2959 = vadd.f32 %v2948, %v2955
    %v2963 = vrot.slane %v2958, 6
    %v2964 = vrot.slane %v2959, 4
    %vm2965 = vcmask 1041408
    %v2966 = vsel %vm2965, %v2957, %v2963
    %vm2967 = vcmask 1043456
    %v2968 = vsel %vm2967, %v2966, %v2964
    %2970 = vst [vmem:[#allocation22] sm:$0x3f] %v2968
    %v2971 = vlaneseq
    %v2972 = vand.u32 %v2971, 127
    %v2973 = vadd.s32 %v2972, 128
    %v2974 = vadd.s32 %v2972, 256
    %vm2975 = vcmp.lt.s32.totalorder %v2972, 289
    %vm2976 = vcmp.lt.s32.totalorder %v2973, 289
    %vm2977 = vcmp.lt.s32.totalorder %v2974, 289
    %v2978 = vsel %vm2975, %v2957, -1e+30
    %v2979 = vsel %vm2976, %v2958, -1e+30
    %v2980 = vsel %vm2977, %v2959, -1e+30
    %v2981 = vld [vmem:[%s11] sm:$0x3f]
    %v2982 = vadd.f32 %v2981, 1e-10
    %v2983 = vlog2.pop %v2982
    %v2984 = vmul.f32 %v2983, 0.6931472
    %v2985 = vsub.f32 1e-10, %v2984
    %v2986 = vlog2.pop %v2985
    %v2987 = vmul.f32 %v2986, 0.6931472
    %v2988 = vsub.f32 0.0, %v2987
    %2990 = vst [vmem:[#allocation1] ss:$4 sm:$0xff] %v2988
    %v2991 = vld.sshfl [vmem:[#allocation1] sm:$0xff pattern:$0x73625140]
    %v2992 = vld.sshfl [vmem:[#allocation1 + $0x8] sm:$0xff pattern:$0x73625140]
    %v2993 = vld.sshfl [vmem:[#allocation1 + $0x10] sm:$0xff pattern:$0x73625140]
    %v2997 = vadd.f32 %v2978, %v2991
    %v2998 = vadd.f32 %v2979, %v2992
    %v2999 = vadd.f32 %v2980, %v2993
    %v3000 = vsel %vm2965, %v2997, -inf
    %v3001 = vsel %vm2965, %v2998, -inf
    %v3002 = vsel %vm2965, %v2999, -inf
    %v3003 = vmax.f32 %v3000, %v3001
    %v3004 = vmax.f32 %v3003, %v3002
    %3005 = vmax.xlane.f32.xlu0 %v3004
    %v3006 = vpop.xlane.xlu0 %3005
    %v3007 = vsub.f32 %v2997, %v3006
    %v3008 = vsub.f32 %v2998, %v3006
    %v3009 = vsub.f32 %v2999, %v3006
    %v3010 = vmul.f32 %v3007, 1.442695
    %v3011 = vpow.pop %v3010
    %v3012 = vmul.f32 %v3008, 1.442695
    %v3013 = vpow.pop %v3012
    %v3014 = vmul.f32 %v3009, 1.442695
    %v3015 = vpow.pop %v3014
    %v3016 = vsel %vm2965, %v3011, 0.0
    %v3017 = vsel %vm2965, %v3013, 0.0
    %v3018 = vadd.f32 %v3016, %v3017
    %v3019 = vsel %vm2965, %v3015, 0.0
    %v3020 = vadd.f32 %v3018, %v3019
    %3021 = vadd.xlane.f32.xlu0 %v3020
    %v3022 = vpop.xlane.xlu0 %3021
    %v3023 = vrcp.pop %v3022
    %v3024 = vmul.f32 %v3022, %v3023
    %v3025 = vsub.f32 1.0, %v3024
    %v3026 = vmul.f32 %v3023, %v3025
    %v3027 = vadd.f32 %v3023, %v3026
    %vm3028 = vweird.f32 %v3022
    %vm3029 = vweird.f32 %v3023
    %vm3030 = vmor %vm3028, %vm3029
    %v3031 = vsel %vm3030, %v3023, %v3027
    %v3032 = vand.u32 2147483647, %v3022
    %vm3033 = vcmp.eq.f32.partialorder %v3032, 8.507059e+37
    %v3034 = vand.u32 %v3022, 2147483648
    %v3035 = vor.u32 1.1754944e-38, %v3034
    %v3036 = vsel %vm3033, %v3035, %v3031
    %v3037 = vmul.f32 %v3011, %v3036
    %v3038 = vmul.f32 %v3013, %v3036
    %v3039 = vmul.f32 %v3015, %v3036
    %v3040 = vmax.f32 %v3037, 1e-10
    %v3041 = vmax.f32 %v3038, 1e-10
    %v3042 = vmax.f32 %v3039, 1e-10
    %v3046 = vrot.slane %v3041, 6
    %v3047 = vrot.slane %v3042, 4
    %v3048 = vsel %vm2965, %v3040, %v3046
    %v3049 = vsel %vm2967, %v3048, %v3047
    %3051 = vst [vmem:[%s18] sm:$0x3f] %v3049
    %v3052 = vsel %vm2965, %v2978, -inf
    %v3053 = vsel %vm2965, %v2979, -inf
    %v3054 = vsel %vm2965, %v2980, -inf
    %v3055 = vmax.f32 %v3052, %v3053
    %v3056 = vmax.f32 %v3055, %v3054
    %3057 = vmax.xlane.f32.xlu0 %v3056
    %v3058 = vpop.xlane.xlu0 %3057
    %v3059 = vsub.f32 %v2978, %v3058
    %v3060 = vsub.f32 %v2979, %v3058
    %v3061 = vsub.f32 %v2980, %v3058
    %v3062 = vmul.f32 %v3059, 1.442695
    %v3063 = vpow.pop %v3062
    %v3064 = vmul.f32 %v3060, 1.442695
    %v3065 = vpow.pop %v3064
    %v3066 = vmul.f32 %v3061, 1.442695
    %v3067 = vpow.pop %v3066
    %v3068 = vsel %vm2965, %v3063, 0.0
    %v3069 = vsel %vm2965, %v3065, 0.0
    %v3070 = vadd.f32 %v3068, %v3069
    %v3071 = vsel %vm2965, %v3067, 0.0
    %v3072 = vadd.f32 %v3070, %v3071
    %3073 = vadd.xlane.f32.xlu0 %v3072
    %v3074 = vpop.xlane.xlu0 %3073
    %v3075 = vrcp.pop %v3074
    %v3076 = vmul.f32 %v3074, %v3075
    %v3077 = vsub.f32 1.0, %v3076
    %v3078 = vmul.f32 %v3075, %v3077
    %v3079 = vadd.f32 %v3075, %v3078
    %vm3080 = vweird.f32 %v3074
    %vm3081 = vweird.f32 %v3075
    %vm3082 = vmor %vm3080, %vm3081
    %v3083 = vsel %vm3082, %v3075, %v3079
    %v3084 = vand.u32 2147483647, %v3074
    %vm3085 = vcmp.eq.f32.partialorder %v3084, 8.507059e+37
    %v3086 = vand.u32 %v3074, 2147483648
    %v3087 = vor.u32 1.1754944e-38, %v3086
    %v3088 = vsel %vm3085, %v3087, %v3083
    %v3089 = vmul.f32 %v3063, %v3088
    %v3090 = vmul.f32 %v3065, %v3088
    %v3091 = vmul.f32 %v3067, %v3088
    %v3095 = vrot.slane %v3090, 6
    %v3096 = vrot.slane %v3091, 4
    %v3097 = vsel %vm2965, %v3089, %v3095
    %v3098 = vsel %vm2967, %v3097, %v3096
    %3100 = vst [vmem:[%s19] sm:$0x3f] %v3098
    %v3101 = vcvt.s32.f32 %v2972
    %v3102 = vcvt.s32.f32 %v2973
    %v3103 = vcvt.s32.f32 %v2974
    %v3104 = vsel %vm2965, %v3040, -inf
    %v3105 = vsel %vm2965, %v3041, -inf
    %v3106 = vsel %vm2965, %v3042, -inf
    %v3107 = vmax.f32 %v3104, %v3105
    %v3108 = vmax.f32 %v3107, %v3106
    %3109 = vmax.xlane.f32.xlu0 %v3108
    %v3110 = vpop.xlane.xlu0 %3109
    %vm3111 = vcmp.ge.f32.partialorder %v3040, %v3110
    %vm3112 = vcmp.ge.f32.partialorder %v3041, %v3110
    %vm3113 = vcmp.ge.f32.partialorder %v3042, %v3110
    %v3114 = vsel %vm3111, %v3101, 384.0
    %v3115 = vsel %vm3112, %v3102, 384.0
    %v3116 = vsel %vm3113, %v3103, 384.0
    %v3117 = vsel %vm2965, %v3114, inf
    %v3118 = vsel %vm2965, %v3115, inf
    %v3119 = vsel %vm2965, %v3116, inf
    %v3120 = vmin.f32 %v3117, %v3118
    %v3121 = vmin.f32 %v3120, %v3119
    %3122 = vmin.xlane.f32.xlu0 %v3121
    %v3123 = vpop.xlane.xlu0 %3122
    %vm3124 = vcmp.eq.f32.partialorder %v3101, %v3123
    %vm3125 = vcmp.eq.f32.partialorder %v3102, %v3123
    %vm3126 = vcmp.eq.f32.partialorder %v3103, %v3123
    %v3127 = vsel %vm3124, 1, 0
    %v3128 = vsel %vm3125, 1, 0
    %v3129 = vsel %vm3126, 1, 0
    %v3130 = vcvt.s32.f32 %v3127
    %v3131 = vcvt.s32.f32 %v3128
    %v3132 = vcvt.s32.f32 %v3129
    %v3133 = vsub.f32 %v3130, %v3040
    %v3134 = vsub.f32 %v3131, %v3041
    %v3135 = vsub.f32 %v3132, %v3042
    %v3136 = vadd.f32 %v3133, %v3040
    %v3137 = vadd.f32 %v3134, %v3041
    %v3138 = vadd.f32 %v3135, %v3042
    %v3142 = vrot.slane %v3137, 6
    %v3143 = vrot.slane %v3138, 4
    %v3144 = vsel %vm2965, %v3136, %v3142
    %v3145 = vsel %vm2967, %v3144, %v3143
    %3147 = vst [vmem:[%s17] sm:$0x3f] %v3145
    %v3148 = vld [vmem:[#allocation18] sm:$0x7]
    %v3149 = vld [vmem:[%s12] sm:$0x3f]
    %v3151 = vperm.slane %v3148, 0
    %v3152 = vperm.slane %v3148, 1
    %v3153 = vperm.slane %v3148, 2
    %3158 = vst [vmem:[#allocation1] ss:$4 sm:$0xff] %v3149
    %v3159 = vld.sshfl [vmem:[#allocation1] sm:$0xff pattern:$0x73625140]
    %v3160 = vld.sshfl [vmem:[#allocation1 + $0x8] sm:$0xff pattern:$0x73625140]
    %v3161 = vld.sshfl [vmem:[#allocation1 + $0x10] sm:$0xff pattern:$0x73625140]
    %v3165 = vadd.f32 %v3151, %v3159
    %v3166 = vadd.f32 %v3152, %v3160
    %v3167 = vadd.f32 %v3153, %v3161
    %v3168 = vld [vmem:[#allocation20] sm:$0x7]
    %v3169 = vld [vmem:[%s13] sm:$0x3f]
    %v3171 = vperm.slane %v3168, 0
    %v3172 = vperm.slane %v3168, 1
    %v3173 = vperm.slane %v3168, 2
    %3178 = vst [vmem:[#allocation1] ss:$4 sm:$0xff] %v3169
    %v3179 = vld.sshfl [vmem:[#allocation1] sm:$0xff pattern:$0x73625140]
    %v3180 = vld.sshfl [vmem:[#allocation1 + $0x8] sm:$0xff pattern:$0x73625140]
    %v3181 = vld.sshfl [vmem:[#allocation1 + $0x10] sm:$0xff pattern:$0x73625140]
    %v3185 = vadd.f32 %v3171, %v3179
    %v3186 = vadd.f32 %v3172, %v3180
    %v3187 = vadd.f32 %v3173, %v3181
    %v3188 = vmul.f32 %v3165, %v3136
    %v3189 = vmul.f32 %v3166, %v3137
    %v3190 = vmul.f32 %v3167, %v3138
    %v3191 = vsel %vm2965, %v3188, 0.0
    %v3192 = vsel %vm2965, %v3189, 0.0
    %v3193 = vadd.f32 %v3191, %v3192
    %v3194 = vsel %vm2965, %v3190, 0.0
    %v3195 = vadd.f32 %v3193, %v3194
    %3196 = vadd.xlane.f32.xlu0 %v3195
    %v3197 = vpop.xlane.xlu0 %3196
    %v3198 = vmul.f32 %v3185, %v3136
    %v3199 = vmul.f32 %v3186, %v3137
    %v3200 = vmul.f32 %v3187, %v3138
    %v3201 = vsel %vm2965, %v3198, 0.0
    %v3202 = vsel %vm2965, %v3199, 0.0
    %v3203 = vadd.f32 %v3201, %v3202
    %v3204 = vsel %vm2965, %v3200, 0.0
    %v3205 = vadd.f32 %v3203, %v3204
    %3206 = vadd.xlane.f32.xlu0 %v3205
    %v3207 = vpop.xlane.xlu0 %3206
    %vm3208 = vcmask 7168
    %v3209 = vsel %vm3208, %v3197, %v3207
    %v3210 = vmul.f32 %v3209, 0.25
    %vm3211 = vcmask 9216
    %3212 = vst.msk [vmem:[#allocation21] sm:$0x3] %vm3211, %v3210
    // Predicated region
    $region110: #{_forward_impl.1} parent=1 // pred_check
      _
    $region111: #{_forward_impl.1} parent=1 // pred_check_branch
      %3214 = sbr.rel (0) target = $region113
    $region112: #{_forward_impl.1} parent=1 // pred_region
      %3216 = vsyncadd [#allocation5], 0
      %s3218 = sshll.u32 [#allocation21], 4
      %s3219 = int_to_ptr.vmem [resolvable:$true] %s3218
      %s3220 = sshll.u32 %s16, 4
      %s3221 = int_to_ptr.hbm [resolvable:$true] %s3220
      %3223 = dma.vmem_to_hbm [thread:$0]  %s3219, 32, %s3221, [#allocation5]
    $region113: #{_forward_impl.1} parent=1 // pred_fallthru
      _
    // Predicated region
    $region114: #{_forward_impl.1} parent=1 // pred_check
      _
    $region115: #{_forward_impl.1} parent=1 // pred_check_branch
      %3225 = sbr.rel (0) target = $region117
    $region116: #{_forward_impl.1} parent=1 // pred_region
      _
    $region117: #{_forward_impl.1} parent=1 // pred_fallthru
      _
    // Predicated region
    $region118: #{_forward_impl.1} parent=1 // pred_check
      _
    $region119: #{_forward_impl.1} parent=1 // pred_check_branch
      %3227 = sbr.rel (0) target = $region121
    $region120: #{_forward_impl.1} parent=1 // pred_region
      _
    $region121: #{_forward_impl.1} parent=1 // pred_fallthru
      _
    // Predicated region
    $region122: #{_forward_impl.1} parent=1 // pred_check
      _
    $region123: #{_forward_impl.1} parent=1 // pred_check_branch
      %3229 = sbr.rel (0) target = $region125
    $region124: #{_forward_impl.1} parent=1 // pred_region
      _
    $region125: #{_forward_impl.1} parent=1 // pred_fallthru
      _
    // Predicated region
    $region126: #{_forward_impl.1} parent=1 // pred_check
      _
    $region127: #{_forward_impl.1} parent=1 // pred_check_branch
      %3231 = sbr.rel (0) target = $region129
    $region128: #{_forward_impl.1} parent=1 // pred_region
      %3233 = vsyncadd [#allocation23], 0
      %s3235 = sshll.u32 [#allocation22], 4
      %s3236 = int_to_ptr.vmem [resolvable:$true] %s3235
      %s3237 = sshll.u32 %s20, 4
      %s3238 = int_to_ptr.hbm [resolvable:$true] %s3237
      %3240 = dma.vmem_to_hbm [thread:$0]  %s3236, 96, %s3238, [#allocation23]
    $region129: #{_forward_impl.1} parent=1 // pred_fallthru
      _
    // Predicated region
    $region130: #{_forward_impl.1} parent=1 // pred_check
      _
    $region131: #{_forward_impl.1} parent=1 // pred_check_branch
      %3242 = sbr.rel (0) target = $region133
    $region132: #{_forward_impl.1} parent=1 // pred_region
      %3244 = dma.done [#allocation5], 32
    $region133: #{_forward_impl.1} parent=1 // pred_fallthru
      _
    // Predicated region
    $region134: #{_forward_impl.1} parent=1 // pred_check
      _
    $region135: #{_forward_impl.1} parent=1 // pred_check_branch
      %3246 = sbr.rel (0) target = $region137
    $region136: #{_forward_impl.1} parent=1 // pred_region
      _
    $region137: #{_forward_impl.1} parent=1 // pred_fallthru
      _
    // Predicated region
    $region138: #{_forward_impl.1} parent=1 // pred_check
      _
    $region139: #{_forward_impl.1} parent=1 // pred_check_branch
      %3248 = sbr.rel (0) target = $region141
    $region140: #{_forward_impl.1} parent=1 // pred_region
      _
    $region141: #{_forward_impl.1} parent=1 // pred_fallthru
      _
    // Predicated region
    $region142: #{_forward_impl.1} parent=1 // pred_check
      _
    $region143: #{_forward_impl.1} parent=1 // pred_check_branch
      %3250 = sbr.rel (0) target = $region145
    $region144: #{_forward_impl.1} parent=1 // pred_region
      _
    $region145: #{_forward_impl.1} parent=1 // pred_fallthru
      _
    // Predicated region
    $region146: #{_forward_impl.1} parent=1 // pred_check
      _
    $region147: #{_forward_impl.1} parent=1 // pred_check_branch
      %3252 = sbr.rel (0) target = $region149
    $region148: #{_forward_impl.1} parent=1 // pred_region
      %3254 = dma.done [#allocation23], 96
    $region149: #{_forward_impl.1} parent=1 // pred_fallthru
      _
    %3255 = vsyncpa [#allocation4], 1
    %3256 = vsyncpa [#allocation7], 1
    %3257 = vsyncpa [#allocation10], 1
    %3258 = vsyncpa [#allocation13], 1
    %3259 = vsyncpa [#allocation16], 1
    %3260 = vsyncpa [#allocation19], 1
    %3261 = vsyncpa [#allocation5], 1
    %3262 = vsyncpa [#allocation23], 1

</llo_original>
